<compile_context>
chip_gen: v6e
topology: v6e:2x2x1
jax: 0.10.0
libtpu: 0.0.40
codegen_flags: <defaults>
</compile_context>

<pallas_src>
import jax
import jax.numpy as jnp
from jax.experimental import pallas as pl
from jax.experimental.pallas import tpu as pltpu

KERNEL_SIZES = (3, 4, 5)
LANE = 128
SUBLANE = 8


def _round_up(x, m):
    return ((x + m - 1) // m) * m


def _textcnn_kernel(emb_ref, wconv_ref, bconv_ref, mask_ref, wfc_ref, bfc_ref,
                    out_ref):
    # Shapes (all static):
    #   emb_ref  : (N, E) bf16        N = bt * s_pad (flattened batch-tile x time)
    #   wconv_ref: (k_max, E, C3p) bf16  fused conv weights: taps zero-padded to k_max,
    #                                    branch channels concatenated, lane-padded to C3p
    #   bconv_ref: (1, C3p) f32
    #   mask_ref : (s_pad, C3p) f32   1.0 where time position t is valid for the channel
    #   wfc_ref  : (C3p, Op) bf16
    #   bfc_ref  : (1, Op) f32
    #   out_ref  : (bt, Op) f32
    n_rows = emb_ref.shape[0]
    bt = out_ref.shape[0]
    s_pad, c3p = mask_ref.shape
    k_max = wconv_ref.shape[0]

    emb = emb_ref[...]                                   # (N, E) bf16, loaded once

    # Conv-over-time: per-tap MXU matmul of the UNSHIFTED rows, then shift the f32
    # product with an XLU roll instead of building shifted copies of `emb` through
    # concatenate+zeros (removes k_max-1 full-buffer VPU/vst copies).
    # Rolled-in rows from the next sentence / wrap-around only land at time positions
    # zeroed by the mask below (and zero-padded taps contribute exactly 0).
    acc = jnp.dot(emb, wconv_ref[0], preferred_element_type=jnp.float32)   # (N, C3p)
    for j in range(1, k_max):
        p_j = jnp.dot(emb, wconv_ref[j], preferred_element_type=jnp.float32)
        # pltpu.roll == jnp.roll: out[r] = p_j[(r + j) % N]
        acc = acc + pltpu.roll(p_j, shift=n_rows - j, axis=0)

    # Bias + ReLU, then a single multiply by the precomputed 0/1 validity mask.
    acc = jnp.maximum(acc + bconv_ref[...], 0.0)
    acc3 = acc.reshape(bt, s_pad, c3p) * mask_ref[...]   # mask broadcasts over batch

    # Max-over-time pool per sentence; dropout == identity at inference; final linear.
    pooled = jnp.max(acc3, axis=1)                       # (bt, C3p) f32
    out_ref[...] = (jnp.dot(pooled.astype(wfc_ref.dtype), wfc_ref[...],
                            preferred_element_type=jnp.float32)
                    + bfc_ref[...])


def textcnn_forward(text, embedding, conv_ws, conv_bs, fc_w, fc_b, *, block_b=64):
    """text: [seq_len, batch] int32 token ids.  Returns logits [batch, output_dim]."""
    seq, batch = text.shape
    vocab, emb_dim = embedding.shape
    c = conv_ws[0].shape[-1]
    out_dim = fc_w.shape[-1]
    k_max = max(KERNEL_SIZES)
    assert seq >= k_max, "sequence must be at least the largest conv kernel"

    c3 = len(KERNEL_SIZES) * c
    c3p = _round_up(c3, LANE)            # lane-dense conv/pool channel axis
    o_pad = _round_up(out_dim, LANE)     # lane-dense logits block
    s_pad = _round_up(seq, SUBLANE)      # keeps (N, C3p)->(bt, s_pad, C3p) a pure regroup

    # ---- one-time parameter prep (plain JAX glue) ----
    # conv_ws[i][j] == PyTorch Conv2d weight[:, 0, j, :].T for branch i, tap j.
    w_fused = jnp.zeros((k_max, emb_dim, c3p), jnp.float32)
    b_fused = jnp.zeros((1, c3p), jnp.float32)
    mask = jnp.zeros((s_pad, c3p), jnp.float32)
    t_idx = jnp.arange(s_pad, dtype=jnp.int32)[:, None]
    for i, (ks, w, b) in enumerate(zip(KERNEL_SIZES, conv_ws, conv_bs)):
        sl = slice(i * c, (i + 1) * c)
        w_fused = w_fused.at[:ks, :, sl].set(w.astype(jnp.float32))
        b_fused = b_fused.at[:, sl].set(b.astype(jnp.float32))
        valid = jnp.broadcast_to((t_idx <= (seq - ks)).astype(jnp.float32), (s_pad, c))
        mask = mask.at[:, sl].set(valid)
    w_fused = w_fused.astype(jnp.bfloat16)

    fc_w_p = (jnp.zeros((c3p, o_pad), jnp.float32)
              .at[:c3, :out_dim].set(fc_w.astype(jnp.float32)).astype(jnp.bfloat16))
    fc_b_p = (jnp.zeros((1, o_pad), jnp.float32)
              .at[:, :out_dim].set(fc_b.astype(jnp.float32)))

    # ---- batch/seq tiling + embedding gather in the wrapper ----
    # bt is a knob: raise it on single-TC chips (v5e/v6e) to amortize per-step
    # overhead; keep the step count even/>=2 on v7x so both TensorCores get work.
    bt = max(SUBLANE, _round_up(block_b, SUBLANE))
    b_pad = _round_up(batch, bt)
    tokens = text.T.astype(jnp.int32)                                 # (B, S)
    tokens = jnp.pad(tokens, ((0, b_pad - batch), (0, s_pad - seq)))  # pad rows masked
    # Row gather done by XLA; kernel streams the (N, E) bf16 activations (1x traffic),
    # never the (V, E) table.
    # TODO(synk): in-kernel DMA row gather (scalar-prefetched ids + pl.ANY table) for a
    # fully fused variant at very large vocab/emb sizes.
    emb_flat = jnp.take(embedding.astype(jnp.bfloat16), tokens.reshape(-1), axis=0)

    n_rows = bt * s_pad
    grid = (b_pad // bt,)

    out = pl.pallas_call(
        _textcnn_kernel,
        out_shape=jax.ShapeDtypeStruct((b_pad, o_pad), jnp.float32),
        grid_spec=pltpu.PrefetchScalarGridSpec(
            num_scalar_prefetch=0,
            grid=grid,
            in_specs=[
                pl.BlockSpec((n_rows, emb_dim), lambda b: (b, 0)),          # activations
                pl.BlockSpec((k_max, emb_dim, c3p), lambda b: (0, 0, 0)),   # fused conv W
                pl.BlockSpec((1, c3p), lambda b: (0, 0)),                   # fused conv bias
                pl.BlockSpec((s_pad, c3p), lambda b: (0, 0)),               # validity mask
                pl.BlockSpec((c3p, o_pad), lambda b: (0, 0)),               # fc weight (padded)
                pl.BlockSpec((1, o_pad), lambda b: (0, 0)),                 # fc bias (padded)
            ],
            out_specs=pl.BlockSpec((bt, o_pad), lambda b: (b, 0)),
        ),
        compiler_params=pltpu.CompilerParams(
            dimension_semantics=("parallel",),
            vmem_limit_bytes=32 * 1024 * 1024),
    )(emb_flat, w_fused, b_fused, mask, fc_w_p, fc_b_p)

    return out[:batch, :out_dim]


def init_params(key, vocab_size, embedding_dim, output_dim, kernel_dim):
    keys = jax.random.split(key, 2 + 2 * len(KERNEL_SIZES) + 2)
    embedding = jax.random.normal(keys[0], (vocab_size, embedding_dim),
                                  jnp.float32) * 0.1
    conv_ws, conv_bs = [], []
    for i, ks in enumerate(KERNEL_SIZES):
        conv_ws.append(jax.random.normal(keys[1 + 2 * i],
                                         (ks, embedding_dim, kernel_dim),
                                         jnp.float32) * 0.1)
        conv_bs.append(jax.random.normal(keys[2 + 2 * i],
                                         (1, kernel_dim), jnp.float32) * 0.1)
    fc_w = jax.random.normal(keys[-2],
                             (len(KERNEL_SIZES) * kernel_dim, output_dim),
                             jnp.float32) * 0.1
    fc_b = jax.random.normal(keys[-1], (1, output_dim), jnp.float32) * 0.1
    return embedding, conv_ws, conv_bs, fc_w, fc_b


if __name__ == "__main__":
    # Small, TPU-friendly shapes consistent with the module.
    vocab_size, embedding_dim, output_dim = 64, 32, 2
    kernel_dim = 16
    seq_len, batch = 16, 128          # 2 batch tiles of 64 -> 2 parallel grid steps

    key = jax.random.PRNGKey(0)
    k_params, k_text = jax.random.split(key)
    embedding, conv_ws, conv_bs, fc_w, fc_b = init_params(
        k_params, vocab_size, embedding_dim, output_dim, kernel_dim)

    # PyTorch-style input: [seq_len, batch] integer token ids.
    text = jax.random.randint(k_text, (seq_len, batch), 0, vocab_size,
                              dtype=jnp.int32)

    logits = textcnn_forward(text, embedding, conv_ws, conv_bs, fc_w, fc_b,
                             block_b=64)
    logits = jax.block_until_ready(logits)

    # Reference in plain JAX with matching bf16 params / f32 accumulation.
    emb_bf = embedding.astype(jnp.bfloat16)
    emb = jnp.take(emb_bf, text.T, axis=0)                  # (B, S, E) bf16
    pooled = []
    for w, b, ks in zip(conv_ws, conv_bs, KERNEL_SIZES):
        L = seq_len - ks + 1
        w_bf = w.astype(jnp.bfloat16)
        a = sum(jnp.einsum("bse,ec->bsc", emb[:, j:j + L, :], w_bf[j],
                           preferred_element_type=jnp.float32)
                for j in range(ks))
        a = jnp.maximum(a + b[None, :, :], 0.0)
        pooled.append(jnp.max(a, axis=1))
    cat = jnp.concatenate(pooled, axis=1).astype(jnp.bfloat16)
    ref = jnp.dot(cat, fc_w.astype(jnp.bfloat16),
                  preferred_element_type=jnp.float32) + fc_b

    assert logits.shape == (batch, output_dim)
    assert jnp.allclose(logits, ref, atol=5e-3, rtol=5e-3), (
        float(jnp.max(jnp.abs(logits - ref))))
    print("KERNEL_OK")
</pallas_src>

<mosaic_0001>
module attributes {stable_mosaic.version = 11 : i64} {
  func.func @_textcnn_kernel(%arg0: i32, %arg1: memref<1024x32xbf16, #tpu.memory_space<vmem>>, %arg2: memref<5x32x128xbf16, #tpu.memory_space<vmem>>, %arg3: memref<1x128xf32, #tpu.memory_space<vmem>>, %arg4: memref<16x128xf32, #tpu.memory_space<vmem>>, %arg5: memref<128x128xbf16, #tpu.memory_space<vmem>>, %arg6: memref<1x128xf32, #tpu.memory_space<vmem>>, %arg7: memref<64x128xf32, #tpu.memory_space<vmem>>) attributes {dimension_semantics = [#tpu.dimension_semantics<parallel>], iteration_bounds = array<i64: 2>, scalar_prefetch = 0 : i64, scratch_operands = 0 : i64, tpu.core_type = #tpu.core_type<tc>, window_params = [{transform_indices = @transform_0, window_bounds = array<i64: 1024, 32>}, {pipeline_mode = #tpu.pipeline_mode<synchronous>, transform_indices = @transform_1, window_bounds = array<i64: 5, 32, 128>}, {pipeline_mode = #tpu.pipeline_mode<synchronous>, transform_indices = @transform_2, window_bounds = array<i64: 1, 128>}, {pipeline_mode = #tpu.pipeline_mode<synchronous>, transform_indices = @transform_3, window_bounds = array<i64: 16, 128>}, {pipeline_mode = #tpu.pipeline_mode<synchronous>, transform_indices = @transform_4, window_bounds = array<i64: 128, 128>}, {pipeline_mode = #tpu.pipeline_mode<synchronous>, transform_indices = @transform_5, window_bounds = array<i64: 1, 128>}, {transform_indices = @transform_6, window_bounds = array<i64: 64, 128>}]} {
    %c0 = arith.constant 0 : index
    %c0_0 = arith.constant 0 : index
    %0 = vector.load %arg1[%c0, %c0_0] : memref<1024x32xbf16, #tpu.memory_space<vmem>>, vector<1024x32xbf16>
    %c0_1 = arith.constant 0 : index
    %c0_2 = arith.constant 0 : index
    %c0_3 = arith.constant 0 : index
    %1 = vector.load %arg2[%c0_1, %c0_2, %c0_3] : memref<5x32x128xbf16, #tpu.memory_space<vmem>>, vector<1x32x128xbf16>
    %2 = vector.shape_cast %1 : vector<1x32x128xbf16> to vector<32x128xbf16>
    %cst = arith.constant dense<0.000000e+00> : vector<1024x128xf32>
    %3 = tpu.matmul %0, %2, %cst {dimension_numbers = #tpu.dot_dimension_numbers<[1], [0], [0], [1], [0, 0, 1, 1], [], []>} : vector<1024x32xbf16>, vector<32x128xbf16>, vector<1024x128xf32> -> vector<1024x128xf32>
    %c1 = arith.constant 1 : index
    %c0_4 = arith.constant 0 : index
    %c0_5 = arith.constant 0 : index
    %4 = vector.load %arg2[%c1, %c0_4, %c0_5] : memref<5x32x128xbf16, #tpu.memory_space<vmem>>, vector<1x32x128xbf16>
    %5 = vector.shape_cast %4 : vector<1x32x128xbf16> to vector<32x128xbf16>
    %cst_6 = arith.constant dense<0.000000e+00> : vector<1024x128xf32>
    %6 = tpu.matmul %0, %5, %cst_6 {dimension_numbers = #tpu.dot_dimension_numbers<[1], [0], [0], [1], [0, 0, 1, 1], [], []>} : vector<1024x32xbf16>, vector<32x128xbf16>, vector<1024x128xf32> -> vector<1024x128xf32>
    %c1023_i32 = arith.constant 1023 : i32
    %7 = tpu.dynamic_rotate %6 by %c1023_i32 dim 0 : vector<1024x128xf32>, i32 -> vector<1024x128xf32>
    %8 = arith.addf %3, %7 : vector<1024x128xf32>
    %c2 = arith.constant 2 : index
    %c0_7 = arith.constant 0 : index
    %c0_8 = arith.constant 0 : index
    %9 = vector.load %arg2[%c2, %c0_7, %c0_8] : memref<5x32x128xbf16, #tpu.memory_space<vmem>>, vector<1x32x128xbf16>
    %10 = vector.shape_cast %9 : vector<1x32x128xbf16> to vector<32x128xbf16>
    %cst_9 = arith.constant dense<0.000000e+00> : vector<1024x128xf32>
    %11 = tpu.matmul %0, %10, %cst_9 {dimension_numbers = #tpu.dot_dimension_numbers<[1], [0], [0], [1], [0, 0, 1, 1], [], []>} : vector<1024x32xbf16>, vector<32x128xbf16>, vector<1024x128xf32> -> vector<1024x128xf32>
    %c1022_i32 = arith.constant 1022 : i32
    %12 = tpu.dynamic_rotate %11 by %c1022_i32 dim 0 : vector<1024x128xf32>, i32 -> vector<1024x128xf32>
    %13 = arith.addf %8, %12 : vector<1024x128xf32>
    %c3 = arith.constant 3 : index
    %c0_10 = arith.constant 0 : index
    %c0_11 = arith.constant 0 : index
    %14 = vector.load %arg2[%c3, %c0_10, %c0_11] : memref<5x32x128xbf16, #tpu.memory_space<vmem>>, vector<1x32x128xbf16>
    %15 = vector.shape_cast %14 : vector<1x32x128xbf16> to vector<32x128xbf16>
    %cst_12 = arith.constant dense<0.000000e+00> : vector<1024x128xf32>
    %16 = tpu.matmul %0, %15, %cst_12 {dimension_numbers = #tpu.dot_dimension_numbers<[1], [0], [0], [1], [0, 0, 1, 1], [], []>} : vector<1024x32xbf16>, vector<32x128xbf16>, vector<1024x128xf32> -> vector<1024x128xf32>
    %c1021_i32 = arith.constant 1021 : i32
    %17 = tpu.dynamic_rotate %16 by %c1021_i32 dim 0 : vector<1024x128xf32>, i32 -> vector<1024x128xf32>
    %18 = arith.addf %13, %17 : vector<1024x128xf32>
    %c4 = arith.constant 4 : index
    %c0_13 = arith.constant 0 : index
    %c0_14 = arith.constant 0 : index
    %19 = vector.load %arg2[%c4, %c0_13, %c0_14] : memref<5x32x128xbf16, #tpu.memory_space<vmem>>, vector<1x32x128xbf16>
    %20 = vector.shape_cast %19 : vector<1x32x128xbf16> to vector<32x128xbf16>
    %cst_15 = arith.constant dense<0.000000e+00> : vector<1024x128xf32>
    %21 = tpu.matmul %0, %20, %cst_15 {dimension_numbers = #tpu.dot_dimension_numbers<[1], [0], [0], [1], [0, 0, 1, 1], [], []>} : vector<1024x32xbf16>, vector<32x128xbf16>, vector<1024x128xf32> -> vector<1024x128xf32>
    %c1020_i32 = arith.constant 1020 : i32
    %22 = tpu.dynamic_rotate %21 by %c1020_i32 dim 0 : vector<1024x128xf32>, i32 -> vector<1024x128xf32>
    %23 = arith.addf %18, %22 : vector<1024x128xf32>
    %c0_16 = arith.constant 0 : index
    %c0_17 = arith.constant 0 : index
    %24 = vector.load %arg3[%c0_16, %c0_17] : memref<1x128xf32, #tpu.memory_space<vmem>>, vector<1x128xf32>
    %25 = vector.broadcast %24 : vector<1x128xf32> to vector<1024x128xf32>
    %26 = arith.addf %23, %25 : vector<1024x128xf32>
    %cst_18 = arith.constant 0.000000e+00 : f32
    %27 = vector.broadcast %cst_18 : f32 to vector<1024x128xf32>
    %28 = arith.maximumf %26, %27 : vector<1024x128xf32>
    %29 = vector.shape_cast %28 : vector<1024x128xf32> to vector<64x16x128xf32>
    %c0_19 = arith.constant 0 : index
    %c0_20 = arith.constant 0 : index
    %30 = vector.load %arg4[%c0_19, %c0_20] : memref<16x128xf32, #tpu.memory_space<vmem>>, vector<16x128xf32>
    %31 = vector.shape_cast %30 : vector<16x128xf32> to vector<1x16x128xf32>
    %32 = vector.broadcast %31 : vector<1x16x128xf32> to vector<64x16x128xf32>
    %33 = arith.mulf %29, %32 : vector<64x16x128xf32>
    %cst_21 = arith.constant dense<0xFF800000> : vector<64x128xf32>
    %34 = vector.multi_reduction <maximumf>, %33, %cst_21 [1] : vector<64x16x128xf32> to vector<64x128xf32>
    %35 = arith.truncf %34 : vector<64x128xf32> to vector<64x128xbf16>
    %c0_22 = arith.constant 0 : index
    %c0_23 = arith.constant 0 : index
    %36 = vector.load %arg5[%c0_22, %c0_23] : memref<128x128xbf16, #tpu.memory_space<vmem>>, vector<128x128xbf16>
    %cst_24 = arith.constant dense<0.000000e+00> : vector<64x128xf32>
    %37 = tpu.matmul %35, %36, %cst_24 {dimension_numbers = #tpu.dot_dimension_numbers<[1], [0], [0], [1], [0, 0, 1, 1], [], []>} : vector<64x128xbf16>, vector<128x128xbf16>, vector<64x128xf32> -> vector<64x128xf32>
    %c0_25 = arith.constant 0 : index
    %c0_26 = arith.constant 0 : index
    %38 = vector.load %arg6[%c0_25, %c0_26] : memref<1x128xf32, #tpu.memory_space<vmem>>, vector<1x128xf32>
    %39 = vector.broadcast %38 : vector<1x128xf32> to vector<64x128xf32>
    %40 = arith.addf %37, %39 : vector<64x128xf32>
    %c0_27 = arith.constant 0 : index
    %c0_28 = arith.constant 0 : index
    %41 = vector.load %arg7[%c0_27, %c0_28] : memref<64x128xf32, #tpu.memory_space<vmem>>, vector<64x128xf32>
    tpu.vector_store %arg7[%c0_27, %c0_28], %40 {strides = array<i32>} : memref<64x128xf32, #tpu.memory_space<vmem>>, vector<64x128xf32>,
    return
  }
  func.func @transform_0(%arg0: i32) -> (i32, i32) {
    %c0_i32 = arith.constant 0 : i32
    %c0_i32_0 = arith.constant 0 : i32
    return %arg0, %c0_i32 : i32, i32
  }
  func.func @transform_1(%arg0: i32) -> (i32, i32, i32) {
    %c0_i32 = arith.constant 0 : i32
    %c0_i32_0 = arith.constant 0 : i32
    %c0_i32_1 = arith.constant 0 : i32
    %c0_i32_2 = arith.constant 0 : i32
    return %c0_i32, %c0_i32_0, %c0_i32_1 : i32, i32, i32
  }
  func.func @transform_2(%arg0: i32) -> (i32, i32) {
    %c0_i32 = arith.constant 0 : i32
    %c0_i32_0 = arith.constant 0 : i32
    %c0_i32_1 = arith.constant 0 : i32
    return %c0_i32, %c0_i32_0 : i32, i32
  }
  func.func @transform_3(%arg0: i32) -> (i32, i32) {
    %c0_i32 = arith.constant 0 : i32
    %c0_i32_0 = arith.constant 0 : i32
    %c0_i32_1 = arith.constant 0 : i32
    return %c0_i32, %c0_i32_0 : i32, i32
  }
  func.func @transform_4(%arg0: i32) -> (i32, i32) {
    %c0_i32 = arith.constant 0 : i32
    %c0_i32_0 = arith.constant 0 : i32
    %c0_i32_1 = arith.constant 0 : i32
    return %c0_i32, %c0_i32_0 : i32, i32
  }
  func.func @transform_5(%arg0: i32) -> (i32, i32) {
    %c0_i32 = arith.constant 0 : i32
    %c0_i32_0 = arith.constant 0 : i32
    %c0_i32_1 = arith.constant 0 : i32
    return %c0_i32, %c0_i32_0 : i32, i32
  }
  func.func @transform_6(%arg0: i32) -> (i32, i32) {
    %c0_i32 = arith.constant 0 : i32
    %c0_i32_0 = arith.constant 0 : i32
    return %arg0, %c0_i32 : i32, i32
  }
}

</mosaic_0001>

<llo_original>
// kernel: tpu_custom_call.1
$region0: #{tpu_custom_call.1}
  #allocation0 [shape = 'u32[]', space=smem, size = 0x4, offset = 0x4, fixed_abs, tag = 'smem constant byte address 0x4 - core index']
  #allocation1 [shape = 'u32[144,128]{1,0:T(1,128)}', space=vmem, size = 0x12000, scoped, tag = 'internal scratch']
  %s0 = inlined_call_operand.vmem [shape: bf16[2048,32], index: 0, kind: input, shape index: {}]
  %s1 = inlined_call_operand.vmem [shape: bf16[5,32,128], index: 1, kind: input, shape index: {}]
  %s2 = inlined_call_operand.vmem [shape: f32[1,128], index: 2, kind: input, shape index: {}]
  %s3 = inlined_call_operand.vmem [shape: f32[16,128], index: 3, kind: input, shape index: {}]
  %s4 = inlined_call_operand.vmem [shape: bf16[128,128], index: 4, kind: input, shape index: {}]
  %s5 = inlined_call_operand.vmem [shape: f32[1,128], index: 5, kind: input, shape index: {}]
  %s6 = inlined_call_operand.hbm [shape: f32[128,128], index: 6, kind: output, shape index: {}]
  %s7 = sld [smem:[#allocation0]]
  $region57: #{tpu_custom_call.1} parent=0
    _
  %s9 = ssub.s32 1, %s7
  %s10 = scalar_select 0, %s9, %s7
  $region1: #{tpu_custom_call.1} parent=0
    #allocation2 [shape = 'u8[65536]{0}', space=vmem, size = 0x10000, scoped, tag = 'output window, operand 0']
    #allocation3 [shape = 's32[2]{0}', space=sflag, size = 0x8, scoped, tag = 'scoped memory for tpu_custom_call.1']
    %11 = vsyncpa [#allocation3], 0
    %s12 = scalar_lea.sflag [#allocation3], 1
    %13 = vsyncpa %s12, 0
    loop: start=0, step=1, limit=4
    $region2: #{tpu_custom_call.1} parent=1 // loop_pre_header
      _
    $region3: #{tpu_custom_call.1} parent=1 // loop_header
      %s15 = sphi 0, %s19
      %p16 = scmp.ge.s32.totalorder %s15, 4
      %s25 = sphi 0, %s27
      %s28 = sphi 0, %s25
      %s29 = sphi 0, %s28
      %s45 = sphi 0, %s29
      %s49 = sphi 0, %s49
      %s51 = sphi 0, %s49
      %s52 = sphi 0, %s51
      %s66 = sphi 0, %s52
      %s70 = sphi 0, %s70
      %s72 = sphi 0, %s70
      %s73 = sphi 0, %s72
      %s87 = sphi 0, %s73
      %s91 = sphi 0, %s91
      %s93 = sphi 0, %s91
      %s94 = sphi 0, %s93
      %s108 = sphi 0, %s94
      %s112 = sphi 0, %s112
      %s114 = sphi 0, %s112
      %s115 = sphi 0, %s114
      %s129 = sphi 0, %s115
      %s133 = sphi 0, %s133
      %s135 = sphi 0, %s133
      %s136 = sphi 0, %s135
      %s150 = sphi 0, %s136
      %s156 = sphi 0, %s158
      %s159 = sphi 0, %s156
      %s160 = sphi 0, %s159
      %s176 = sphi 0, %s160
    $region4: #{tpu_custom_call.1} parent=1 // loop_header_branch
      %18 = sbr.rel (%p16) target = $region8
    $region5: #{tpu_custom_call.1} parent=1 // loop_body
      %s20 = ssub.s32 %s15, 1
      %s21 = ssub.s32 %s15, 2
      %s22 = sadd.s32 %s15, 1
      %s23 = ssub.s32 %s15, %s22
      %p24 = scmp.eq.s32.totalorder %s23, 0
      %s26 = sadd.s32 %s25, 1
      %s27 = scalar_select %p24, %s25, %s26
      %p30 = pneg %p24
      %p31 = scmp.eq.s32.totalorder %s15, 1
      %p32 = por %p30, %p31
      %p33 = scmp.ne.s32.totalorder %s25, %s28
      %p34 = scmp.eq.s32.totalorder %s15, 0
      %p35 = por %p33, %p34
      %p36 = scmp.ne.s32.totalorder %s25, %s28
      %p37 = scmp.eq.s32.totalorder %s20, 1
      %p38 = por %p36, %p37
      %p39 = scmp.ne.s32.totalorder %s28, %s29
      %p40 = scmp.eq.s32.totalorder %s20, 0
      %p41 = por %p39, %p40
      %p42 = scmp.ne.s32.totalorder %s28, %s29
      %p43 = scmp.eq.s32.totalorder %s21, 1
      %p44 = por %p42, %p43
      %p46 = scmp.ne.s32.totalorder %s29, %s45
      %p47 = scmp.eq.s32.totalorder %s21, 0
      %p48 = por %p46, %p47
      %s50 = sadd.s32 %s49, 1
      %p53 = scmp.eq.s32.totalorder %s15, 1
      %p54 = scmp.ne.s32.totalorder %s49, %s51
      %p55 = scmp.eq.s32.totalorder %s15, 0
      %p56 = por %p54, %p55
      %p57 = scmp.ne.s32.totalorder %s49, %s51
      %p58 = scmp.eq.s32.totalorder %s20, 1
      %p59 = por %p57, %p58
      %p60 = scmp.ne.s32.totalorder %s51, %s52
      %p61 = scmp.eq.s32.totalorder %s20, 0
      %p62 = por %p60, %p61
      %p63 = scmp.ne.s32.totalorder %s51, %s52
      %p64 = scmp.eq.s32.totalorder %s21, 1
      %p65 = por %p63, %p64
      %p67 = scmp.ne.s32.totalorder %s52, %s66
      %p68 = scmp.eq.s32.totalorder %s21, 0
      %p69 = por %p67, %p68
      %s71 = sadd.s32 %s70, 1
      %p74 = scmp.eq.s32.totalorder %s15, 1
      %p75 = scmp.ne.s32.totalorder %s70, %s72
      %p76 = scmp.eq.s32.totalorder %s15, 0
      %p77 = por %p75, %p76
      %p78 = scmp.ne.s32.totalorder %s70, %s72
      %p79 = scmp.eq.s32.totalorder %s20, 1
      %p80 = por %p78, %p79
      %p81 = scmp.ne.s32.totalorder %s72, %s73
      %p82 = scmp.eq.s32.totalorder %s20, 0
      %p83 = por %p81, %p82
      %p84 = scmp.ne.s32.totalorder %s72, %s73
      %p85 = scmp.eq.s32.totalorder %s21, 1
      %p86 = por %p84, %p85
      %p88 = scmp.ne.s32.totalorder %s73, %s87
      %p89 = scmp.eq.s32.totalorder %s21, 0
      %p90 = por %p88, %p89
      %s92 = sadd.s32 %s91, 1
      %p95 = scmp.eq.s32.totalorder %s15, 1
      %p96 = scmp.ne.s32.totalorder %s91, %s93
      %p97 = scmp.eq.s32.totalorder %s15, 0
      %p98 = por %p96, %p97
      %p99 = scmp.ne.s32.totalorder %s91, %s93
      %p100 = scmp.eq.s32.totalorder %s20, 1
      %p101 = por %p99, %p100
      %p102 = scmp.ne.s32.totalorder %s93, %s94
      %p103 = scmp.eq.s32.totalorder %s20, 0
      %p104 = por %p102, %p103
      %p105 = scmp.ne.s32.totalorder %s93, %s94
      %p106 = scmp.eq.s32.totalorder %s21, 1
      %p107 = por %p105, %p106
      %p109 = scmp.ne.s32.totalorder %s94, %s108
      %p110 = scmp.eq.s32.totalorder %s21, 0
      %p111 = por %p109, %p110
      %s113 = sadd.s32 %s112, 1
      %p116 = scmp.eq.s32.totalorder %s15, 1
      %p117 = scmp.ne.s32.totalorder %s112, %s114
      %p118 = scmp.eq.s32.totalorder %s15, 0
      %p119 = por %p117, %p118
      %p120 = scmp.ne.s32.totalorder %s112, %s114
      %p121 = scmp.eq.s32.totalorder %s20, 1
      %p122 = por %p120, %p121
      %p123 = scmp.ne.s32.totalorder %s114, %s115
      %p124 = scmp.eq.s32.totalorder %s20, 0
      %p125 = por %p123, %p124
      %p126 = scmp.ne.s32.totalorder %s114, %s115
      %p127 = scmp.eq.s32.totalorder %s21, 1
      %p128 = por %p126, %p127
      %p130 = scmp.ne.s32.totalorder %s115, %s129
      %p131 = scmp.eq.s32.totalorder %s21, 0
      %p132 = por %p130, %p131
      %s134 = sadd.s32 %s133, 1
      %p137 = scmp.eq.s32.totalorder %s15, 1
      %p138 = scmp.ne.s32.totalorder %s133, %s135
      %p139 = scmp.eq.s32.totalorder %s15, 0
      %p140 = por %p138, %p139
      %p141 = scmp.ne.s32.totalorder %s133, %s135
      %p142 = scmp.eq.s32.totalorder %s20, 1
      %p143 = por %p141, %p142
      %p144 = scmp.ne.s32.totalorder %s135, %s136
      %p145 = scmp.eq.s32.totalorder %s20, 0
      %p146 = por %p144, %p145
      %p147 = scmp.ne.s32.totalorder %s135, %s136
      %p148 = scmp.eq.s32.totalorder %s21, 1
      %p149 = por %p147, %p148
      %p151 = scmp.ne.s32.totalorder %s136, %s150
      %p152 = scmp.eq.s32.totalorder %s21, 0
      %p153 = por %p151, %p152
      %s154 = ssub.s32 %s15, %s22
      %p155 = scmp.eq.s32.totalorder %s154, 0
      %s157 = sadd.s32 %s156, 1
      %s158 = scalar_select %p155, %s156, %s157
      %p161 = pneg %p155
      %p162 = scmp.eq.s32.totalorder %s15, 1
      %p163 = por %p161, %p162
      %p164 = scmp.ne.s32.totalorder %s156, %s159
      %p165 = scmp.eq.s32.totalorder %s15, 0
      %p166 = por %p164, %p165
      %p167 = scmp.ne.s32.totalorder %s156, %s159
      %p168 = scmp.eq.s32.totalorder %s20, 1
      %p169 = por %p167, %p168
      %p170 = scmp.ne.s32.totalorder %s159, %s160
      %p171 = scmp.eq.s32.totalorder %s20, 0
      %p172 = por %p170, %p171
      %p173 = scmp.ne.s32.totalorder %s159, %s160
      %p174 = scmp.eq.s32.totalorder %s21, 1
      %p175 = por %p173, %p174
      %p177 = scmp.ne.s32.totalorder %s160, %s176
      %p178 = scmp.eq.s32.totalorder %s21, 0
      %p179 = por %p177, %p178
      %p180 = scmp.le.s32.totalorder 1, %s15
      %p181 = scmp.lt.s32.totalorder %s15, 3
      %p182 = pnand %p180, %p181
      %p183 = pneg %p182
      // Predicated region
      $region9: #{tpu_custom_call.1} parent=5 // pred_check
        _
      $region10: #{tpu_custom_call.1} parent=5 // pred_check_branch
        %185 = sbr.rel (%p182) target = $region12
      $region11: #{tpu_custom_call.1} parent=5 // pred_region
        %s186 = ssub.s32 %s15, 1
        // Predicated region
        $region13: #{tpu_custom_call.1} parent=11 // pred_check
          %p187 = pneg %p62
        $region14: #{tpu_custom_call.1} parent=11 // pred_check_branch
          %189 = sbr.rel (%p187) target = $region16
        $region15: #{tpu_custom_call.1} parent=11 // pred_region
          _
        $region16: #{tpu_custom_call.1} parent=11 // pred_fallthru
          _
        // Predicated region
        $region17: #{tpu_custom_call.1} parent=11 // pred_check
          %p190 = pneg %p83
        $region18: #{tpu_custom_call.1} parent=11 // pred_check_branch
          %192 = sbr.rel (%p190) target = $region20
        $region19: #{tpu_custom_call.1} parent=11 // pred_region
          _
        $region20: #{tpu_custom_call.1} parent=11 // pred_fallthru
          _
        // Predicated region
        $region21: #{tpu_custom_call.1} parent=11 // pred_check
          %p193 = pneg %p104
        $region22: #{tpu_custom_call.1} parent=11 // pred_check_branch
          %195 = sbr.rel (%p193) target = $region24
        $region23: #{tpu_custom_call.1} parent=11 // pred_region
          _
        $region24: #{tpu_custom_call.1} parent=11 // pred_fallthru
          _
        // Predicated region
        $region25: #{tpu_custom_call.1} parent=11 // pred_check
          %p196 = pneg %p125
        $region26: #{tpu_custom_call.1} parent=11 // pred_check_branch
          %198 = sbr.rel (%p196) target = $region28
        $region27: #{tpu_custom_call.1} parent=11 // pred_region
          _
        $region28: #{tpu_custom_call.1} parent=11 // pred_fallthru
          _
        // Predicated region
        $region29: #{tpu_custom_call.1} parent=11 // pred_check
          %p199 = pneg %p146
        $region30: #{tpu_custom_call.1} parent=11 // pred_check_branch
          %201 = sbr.rel (%p199) target = $region32
        $region31: #{tpu_custom_call.1} parent=11 // pred_region
          _
        $region32: #{tpu_custom_call.1} parent=11 // pred_fallthru
          _
      $region12: #{tpu_custom_call.1} parent=5 // pred_fallthru
        _
      %p202 = scmp.lt.s32.totalorder %s15, 2
      // Predicated region
      $region33: #{tpu_custom_call.1} parent=5 // pred_check
        %p203 = pneg %p202
      $region34: #{tpu_custom_call.1} parent=5 // pred_check_branch
        %205 = sbr.rel (%p203) target = $region36
      $region35: #{tpu_custom_call.1} parent=5 // pred_region
        // Predicated region
        $region37: #{tpu_custom_call.1} parent=35 // pred_check
          %p206 = pneg %p35
        $region38: #{tpu_custom_call.1} parent=35 // pred_check_branch
          %208 = sbr.rel (%p206) target = $region40
        $region39: #{tpu_custom_call.1} parent=35 // pred_region
          %s209 = smul.u32 128, %s15
          %p210 = scmp.lt.s32.totalorder %s209, 255
          %s211 = scalar_select %p210, %s209, 255
          %s212 = smul.addr %s211, 4
          %s213 = scalar_lea.vmem %s0, %s212
          %s214 = smul.u32 128, %s15
        $region40: #{tpu_custom_call.1} parent=35 // pred_fallthru
          _
      $region36: #{tpu_custom_call.1} parent=5 // pred_fallthru
        _
      %p215 = scmp.le.s32.totalorder 1, %s15
      %p216 = scmp.lt.s32.totalorder %s15, 3
      %p217 = pnand %p215, %p216
      %p218 = pneg %p217
      // Predicated region
      $region41: #{tpu_custom_call.1} parent=5 // pred_check
        _
      $region42: #{tpu_custom_call.1} parent=5 // pred_check_branch
        %220 = sbr.rel (%p217) target = $region44
      $region43: #{tpu_custom_call.1} parent=5 // pred_region
        %s221 = ssub.s32 %s15, 1
        %s222 = smul.u32 128, %s20
        %p223 = scmp.lt.s32.totalorder %s222, 255
        %s224 = scalar_select %p223, %s222, 255
        %s225 = smul.addr %s224, 4
        %s226 = scalar_lea.vmem %s0, %s225
        %p227 = pneg %p41
        %p228 = pneg %p38
        %p229 = pneg %p62
        %p230 = pneg %p59
        %p231 = pneg %p83
        %p232 = pneg %p80
        %p233 = pneg %p104
        %p234 = pneg %p101
        %p235 = pneg %p125
        %p236 = pneg %p122
        %p237 = pneg %p146
        %p238 = pneg %p143
        %p239 = pneg %p172
        %p240 = pneg %p169
        %s241 = sand.u32 %s159, 1
        %s242 = scalar_lea.sflag [#allocation3], %s241
        %s243 = sand.u32 %s159, 1
        %s244 = smul.addr %s243, 64
        %s245 = scalar_lea.vmem [#allocation2], %s244
        %s246 = smul.u32 128, %s20
        %p247 = scmp.lt.s32.totalorder %s246, 255
        %s248 = scalar_select %p247, %s246, 255
        %s249 = smul.addr %s248, 4
        %s250 = scalar_lea.vmem %s0, %s249
        %s251 = smul.u32 128, %s20
        %s252 = smul.u32 8, %s20
        %v254 = vld [vmem:[%s250] sm:$0xf]
        %v255 = vld [vmem:[%s250 + $0x4] sm:$0xf]
        %v256 = vld [vmem:[%s250 + $0x8] sm:$0xf]
        %v257 = vld [vmem:[%s250 + $0xc] sm:$0xf]
        %v258 = vld [vmem:[%s250 + $0x10] sm:$0xf]
        %v259 = vld [vmem:[%s250 + $0x14] sm:$0xf]
        %v260 = vld [vmem:[%s250 + $0x18] sm:$0xf]
        %v261 = vld [vmem:[%s250 + $0x1c] sm:$0xf]
        %v262 = vld [vmem:[%s250 + $0x20] sm:$0xf]
        %v263 = vld [vmem:[%s250 + $0x24] sm:$0xf]
        %v264 = vld [vmem:[%s250 + $0x28] sm:$0xf]
        %v265 = vld [vmem:[%s250 + $0x2c] sm:$0xf]
        %v266 = vld [vmem:[%s250 + $0x30] sm:$0xf]
        %v267 = vld [vmem:[%s250 + $0x34] sm:$0xf]
        %v268 = vld [vmem:[%s250 + $0x38] sm:$0xf]
        %v269 = vld [vmem:[%s250 + $0x3c] sm:$0xf]
        %v270 = vld [vmem:[%s250 + $0x40] sm:$0xf]
        %v271 = vld [vmem:[%s250 + $0x44] sm:$0xf]
        %v272 = vld [vmem:[%s250 + $0x48] sm:$0xf]
        %v273 = vld [vmem:[%s250 + $0x4c] sm:$0xf]
        %v274 = vld [vmem:[%s250 + $0x50] sm:$0xf]
        %v275 = vld [vmem:[%s250 + $0x54] sm:$0xf]
        %v276 = vld [vmem:[%s250 + $0x58] sm:$0xf]
        %v277 = vld [vmem:[%s250 + $0x5c] sm:$0xf]
        %v278 = vld [vmem:[%s250 + $0x60] sm:$0xf]
        %v279 = vld [vmem:[%s250 + $0x64] sm:$0xf]
        %v280 = vld [vmem:[%s250 + $0x68] sm:$0xf]
        %v281 = vld [vmem:[%s250 + $0x6c] sm:$0xf]
        %v282 = vld [vmem:[%s250 + $0x70] sm:$0xf]
        %v283 = vld [vmem:[%s250 + $0x74] sm:$0xf]
        %v284 = vld [vmem:[%s250 + $0x78] sm:$0xf]
        %v285 = vld [vmem:[%s250 + $0x7c] sm:$0xf]
        %v286 = vld [vmem:[%s250 + $0x80] sm:$0xf]
        %v287 = vld [vmem:[%s250 + $0x84] sm:$0xf]
        %v288 = vld [vmem:[%s250 + $0x88] sm:$0xf]
        %v289 = vld [vmem:[%s250 + $0x8c] sm:$0xf]
        %v290 = vld [vmem:[%s250 + $0x90] sm:$0xf]
        %v291 = vld [vmem:[%s250 + $0x94] sm:$0xf]
        %v292 = vld [vmem:[%s250 + $0x98] sm:$0xf]
        %v293 = vld [vmem:[%s250 + $0x9c] sm:$0xf]
        %v294 = vld [vmem:[%s250 + $0xa0] sm:$0xf]
        %v295 = vld [vmem:[%s250 + $0xa4] sm:$0xf]
        %v296 = vld [vmem:[%s250 + $0xa8] sm:$0xf]
        %v297 = vld [vmem:[%s250 + $0xac] sm:$0xf]
        %v298 = vld [vmem:[%s250 + $0xb0] sm:$0xf]
        %v299 = vld [vmem:[%s250 + $0xb4] sm:$0xf]
        %v300 = vld [vmem:[%s250 + $0xb8] sm:$0xf]
        %v301 = vld [vmem:[%s250 + $0xbc] sm:$0xf]
        %v302 = vld [vmem:[%s250 + $0xc0] sm:$0xf]
        %v303 = vld [vmem:[%s250 + $0xc4] sm:$0xf]
        %v304 = vld [vmem:[%s250 + $0xc8] sm:$0xf]
        %v305 = vld [vmem:[%s250 + $0xcc] sm:$0xf]
        %v306 = vld [vmem:[%s250 + $0xd0] sm:$0xf]
        %v307 = vld [vmem:[%s250 + $0xd4] sm:$0xf]
        %v308 = vld [vmem:[%s250 + $0xd8] sm:$0xf]
        %v309 = vld [vmem:[%s250 + $0xdc] sm:$0xf]
        %v310 = vld [vmem:[%s250 + $0xe0] sm:$0xf]
        %v311 = vld [vmem:[%s250 + $0xe4] sm:$0xf]
        %v312 = vld [vmem:[%s250 + $0xe8] sm:$0xf]
        %v313 = vld [vmem:[%s250 + $0xec] sm:$0xf]
        %v314 = vld [vmem:[%s250 + $0xf0] sm:$0xf]
        %v315 = vld [vmem:[%s250 + $0xf4] sm:$0xf]
        %v316 = vld [vmem:[%s250 + $0xf8] sm:$0xf]
        %v317 = vld [vmem:[%s250 + $0xfc] sm:$0xf]
        %v318 = vld [vmem:[%s250 + $0x100] sm:$0xf]
        %v319 = vld [vmem:[%s250 + $0x104] sm:$0xf]
        %v320 = vld [vmem:[%s250 + $0x108] sm:$0xf]
        %v321 = vld [vmem:[%s250 + $0x10c] sm:$0xf]
        %v322 = vld [vmem:[%s250 + $0x110] sm:$0xf]
        %v323 = vld [vmem:[%s250 + $0x114] sm:$0xf]
        %v324 = vld [vmem:[%s250 + $0x118] sm:$0xf]
        %v325 = vld [vmem:[%s250 + $0x11c] sm:$0xf]
        %v326 = vld [vmem:[%s250 + $0x120] sm:$0xf]
        %v327 = vld [vmem:[%s250 + $0x124] sm:$0xf]
        %v328 = vld [vmem:[%s250 + $0x128] sm:$0xf]
        %v329 = vld [vmem:[%s250 + $0x12c] sm:$0xf]
        %v330 = vld [vmem:[%s250 + $0x130] sm:$0xf]
        %v331 = vld [vmem:[%s250 + $0x134] sm:$0xf]
        %v332 = vld [vmem:[%s250 + $0x138] sm:$0xf]
        %v333 = vld [vmem:[%s250 + $0x13c] sm:$0xf]
        %v334 = vld [vmem:[%s250 + $0x140] sm:$0xf]
        %v335 = vld [vmem:[%s250 + $0x144] sm:$0xf]
        %v336 = vld [vmem:[%s250 + $0x148] sm:$0xf]
        %v337 = vld [vmem:[%s250 + $0x14c] sm:$0xf]
        %v338 = vld [vmem:[%s250 + $0x150] sm:$0xf]
        %v339 = vld [vmem:[%s250 + $0x154] sm:$0xf]
        %v340 = vld [vmem:[%s250 + $0x158] sm:$0xf]
        %v341 = vld [vmem:[%s250 + $0x15c] sm:$0xf]
        %v342 = vld [vmem:[%s250 + $0x160] sm:$0xf]
        %v343 = vld [vmem:[%s250 + $0x164] sm:$0xf]
        %v344 = vld [vmem:[%s250 + $0x168] sm:$0xf]
        %v345 = vld [vmem:[%s250 + $0x16c] sm:$0xf]
        %v346 = vld [vmem:[%s250 + $0x170] sm:$0xf]
        %v347 = vld [vmem:[%s250 + $0x174] sm:$0xf]
        %v348 = vld [vmem:[%s250 + $0x178] sm:$0xf]
        %v349 = vld [vmem:[%s250 + $0x17c] sm:$0xf]
        %v350 = vld [vmem:[%s250 + $0x180] sm:$0xf]
        %v351 = vld [vmem:[%s250 + $0x184] sm:$0xf]
        %v352 = vld [vmem:[%s250 + $0x188] sm:$0xf]
        %v353 = vld [vmem:[%s250 + $0x18c] sm:$0xf]
        %v354 = vld [vmem:[%s250 + $0x190] sm:$0xf]
        %v355 = vld [vmem:[%s250 + $0x194] sm:$0xf]
        %v356 = vld [vmem:[%s250 + $0x198] sm:$0xf]
        %v357 = vld [vmem:[%s250 + $0x19c] sm:$0xf]
        %v358 = vld [vmem:[%s250 + $0x1a0] sm:$0xf]
        %v359 = vld [vmem:[%s250 + $0x1a4] sm:$0xf]
        %v360 = vld [vmem:[%s250 + $0x1a8] sm:$0xf]
        %v361 = vld [vmem:[%s250 + $0x1ac] sm:$0xf]
        %v362 = vld [vmem:[%s250 + $0x1b0] sm:$0xf]
        %v363 = vld [vmem:[%s250 + $0x1b4] sm:$0xf]
        %v364 = vld [vmem:[%s250 + $0x1b8] sm:$0xf]
        %v365 = vld [vmem:[%s250 + $0x1bc] sm:$0xf]
        %v366 = vld [vmem:[%s250 + $0x1c0] sm:$0xf]
        %v367 = vld [vmem:[%s250 + $0x1c4] sm:$0xf]
        %v368 = vld [vmem:[%s250 + $0x1c8] sm:$0xf]
        %v369 = vld [vmem:[%s250 + $0x1cc] sm:$0xf]
        %v370 = vld [vmem:[%s250 + $0x1d0] sm:$0xf]
        %v371 = vld [vmem:[%s250 + $0x1d4] sm:$0xf]
        %v372 = vld [vmem:[%s250 + $0x1d8] sm:$0xf]
        %v373 = vld [vmem:[%s250 + $0x1dc] sm:$0xf]
        %v374 = vld [vmem:[%s250 + $0x1e0] sm:$0xf]
        %v375 = vld [vmem:[%s250 + $0x1e4] sm:$0xf]
        %v376 = vld [vmem:[%s250 + $0x1e8] sm:$0xf]
        %v377 = vld [vmem:[%s250 + $0x1ec] sm:$0xf]
        %v378 = vld [vmem:[%s250 + $0x1f0] sm:$0xf]
        %v379 = vld [vmem:[%s250 + $0x1f4] sm:$0xf]
        %v380 = vld [vmem:[%s250 + $0x1f8] sm:$0xf]
        %v381 = vld [vmem:[%s250 + $0x1fc] sm:$0xf]
        %v382 = vld [vmem:[%s1] sm:$0xf]
        %v383 = vld [vmem:[%s1 + $0x4] sm:$0xf]
        %v384 = vld [vmem:[%s1 + $0x8] sm:$0xf]
        %v385 = vld [vmem:[%s1 + $0xc] sm:$0xf]
        %s386 = scalar_lea.vmem %s1, 16
        %v387 = vld [vmem:[%s386] sm:$0xf]
        %v388 = vld [vmem:[%s386 + $0x4] sm:$0xf]
        %v389 = vld [vmem:[%s386 + $0x8] sm:$0xf]
        %v390 = vld [vmem:[%s386 + $0xc] sm:$0xf]
        %v519 = vunpack.c.l.b16 %v254
        %v520 = vunpack.c.l.b16 %v255
        %v521 = vunpack.c.l.b16 %v256
        %v522 = vunpack.c.l.b16 %v257
        %v523 = vunpack.c.l.b16 %v258
        %v524 = vunpack.c.l.b16 %v259
        %v525 = vunpack.c.l.b16 %v260
        %v526 = vunpack.c.l.b16 %v261
        %v527 = vunpack.c.l.b16 %v262
        %v528 = vunpack.c.l.b16 %v263
        %v529 = vunpack.c.l.b16 %v264
        %v530 = vunpack.c.l.b16 %v265
        %v531 = vunpack.c.l.b16 %v266
        %v532 = vunpack.c.l.b16 %v267
        %v533 = vunpack.c.l.b16 %v268
        %v534 = vunpack.c.l.b16 %v269
        %v535 = vunpack.c.l.b16 %v270
        %v536 = vunpack.c.l.b16 %v271
        %v537 = vunpack.c.l.b16 %v272
        %v538 = vunpack.c.l.b16 %v273
        %v539 = vunpack.c.l.b16 %v274
        %v540 = vunpack.c.l.b16 %v275
        %v541 = vunpack.c.l.b16 %v276
        %v542 = vunpack.c.l.b16 %v277
        %v543 = vunpack.c.l.b16 %v278
        %v544 = vunpack.c.l.b16 %v279
        %v545 = vunpack.c.l.b16 %v280
        %v546 = vunpack.c.l.b16 %v281
        %v547 = vunpack.c.l.b16 %v282
        %v548 = vunpack.c.l.b16 %v283
        %v549 = vunpack.c.l.b16 %v284
        %v550 = vunpack.c.l.b16 %v285
        %v551 = vunpack.c.l.b16 %v286
        %v552 = vunpack.c.l.b16 %v287
        %v553 = vunpack.c.l.b16 %v288
        %v554 = vunpack.c.l.b16 %v289
        %v555 = vunpack.c.l.b16 %v290
        %v556 = vunpack.c.l.b16 %v291
        %v557 = vunpack.c.l.b16 %v292
        %v558 = vunpack.c.l.b16 %v293
        %v559 = vunpack.c.l.b16 %v294
        %v560 = vunpack.c.l.b16 %v295
        %v561 = vunpack.c.l.b16 %v296
        %v562 = vunpack.c.l.b16 %v297
        %v563 = vunpack.c.l.b16 %v298
        %v564 = vunpack.c.l.b16 %v299
        %v565 = vunpack.c.l.b16 %v300
        %v566 = vunpack.c.l.b16 %v301
        %v567 = vunpack.c.l.b16 %v302
        %v568 = vunpack.c.l.b16 %v303
        %v569 = vunpack.c.l.b16 %v304
        %v570 = vunpack.c.l.b16 %v305
        %v571 = vunpack.c.l.b16 %v306
        %v572 = vunpack.c.l.b16 %v307
        %v573 = vunpack.c.l.b16 %v308
        %v574 = vunpack.c.l.b16 %v309
        %v575 = vunpack.c.l.b16 %v310
        %v576 = vunpack.c.l.b16 %v311
        %v577 = vunpack.c.l.b16 %v312
        %v578 = vunpack.c.l.b16 %v313
        %v579 = vunpack.c.l.b16 %v314
        %v580 = vunpack.c.l.b16 %v315
        %v581 = vunpack.c.l.b16 %v316
        %v582 = vunpack.c.l.b16 %v317
        %v583 = vunpack.c.l.b16 %v318
        %v584 = vunpack.c.l.b16 %v319
        %v585 = vunpack.c.l.b16 %v320
        %v586 = vunpack.c.l.b16 %v321
        %v587 = vunpack.c.l.b16 %v322
        %v588 = vunpack.c.l.b16 %v323
        %v589 = vunpack.c.l.b16 %v324
        %v590 = vunpack.c.l.b16 %v325
        %v591 = vunpack.c.l.b16 %v326
        %v592 = vunpack.c.l.b16 %v327
        %v593 = vunpack.c.l.b16 %v328
        %v594 = vunpack.c.l.b16 %v329
        %v595 = vunpack.c.l.b16 %v330
        %v596 = vunpack.c.l.b16 %v331
        %v597 = vunpack.c.l.b16 %v332
        %v598 = vunpack.c.l.b16 %v333
        %v599 = vunpack.c.l.b16 %v334
        %v600 = vunpack.c.l.b16 %v335
        %v601 = vunpack.c.l.b16 %v336
        %v602 = vunpack.c.l.b16 %v337
        %v603 = vunpack.c.l.b16 %v338
        %v604 = vunpack.c.l.b16 %v339
        %v605 = vunpack.c.l.b16 %v340
        %v606 = vunpack.c.l.b16 %v341
        %v607 = vunpack.c.l.b16 %v342
        %v608 = vunpack.c.l.b16 %v343
        %v609 = vunpack.c.l.b16 %v344
        %v610 = vunpack.c.l.b16 %v345
        %v611 = vunpack.c.l.b16 %v346
        %v612 = vunpack.c.l.b16 %v347
        %v613 = vunpack.c.l.b16 %v348
        %v614 = vunpack.c.l.b16 %v349
        %v615 = vunpack.c.l.b16 %v350
        %v616 = vunpack.c.l.b16 %v351
        %v617 = vunpack.c.l.b16 %v352
        %v618 = vunpack.c.l.b16 %v353
        %v619 = vunpack.c.l.b16 %v354
        %v620 = vunpack.c.l.b16 %v355
        %v621 = vunpack.c.l.b16 %v356
        %v622 = vunpack.c.l.b16 %v357
        %v623 = vunpack.c.l.b16 %v358
        %v624 = vunpack.c.l.b16 %v359
        %v625 = vunpack.c.l.b16 %v360
        %v626 = vunpack.c.l.b16 %v361
        %v627 = vunpack.c.l.b16 %v362
        %v628 = vunpack.c.l.b16 %v363
        %v629 = vunpack.c.l.b16 %v364
        %v630 = vunpack.c.l.b16 %v365
        %v631 = vunpack.c.l.b16 %v366
        %v632 = vunpack.c.l.b16 %v367
        %v633 = vunpack.c.l.b16 %v368
        %v634 = vunpack.c.l.b16 %v369
        %v635 = vunpack.c.l.b16 %v370
        %v636 = vunpack.c.l.b16 %v371
        %v637 = vunpack.c.l.b16 %v372
        %v638 = vunpack.c.l.b16 %v373
        %v639 = vunpack.c.l.b16 %v374
        %v640 = vunpack.c.l.b16 %v375
        %v641 = vunpack.c.l.b16 %v376
        %v642 = vunpack.c.l.b16 %v377
        %v643 = vunpack.c.l.b16 %v378
        %v644 = vunpack.c.l.b16 %v379
        %v645 = vunpack.c.l.b16 %v380
        %v646 = vunpack.c.l.b16 %v381
        %v647 = vpack.c.b16 %v520, %v519
        %v648 = vpack.c.b16 %v522, %v521
        %v649 = vpack.c.b16 %v524, %v523
        %v650 = vpack.c.b16 %v526, %v525
        %v651 = vpack.c.b16 %v528, %v527
        %v652 = vpack.c.b16 %v530, %v529
        %v653 = vpack.c.b16 %v532, %v531
        %v654 = vpack.c.b16 %v534, %v533
        %v655 = vpack.c.b16 %v536, %v535
        %v656 = vpack.c.b16 %v538, %v537
        %v657 = vpack.c.b16 %v540, %v539
        %v658 = vpack.c.b16 %v542, %v541
        %v659 = vpack.c.b16 %v544, %v543
        %v660 = vpack.c.b16 %v546, %v545
        %v661 = vpack.c.b16 %v548, %v547
        %v662 = vpack.c.b16 %v550, %v549
        %v663 = vpack.c.b16 %v552, %v551
        %v664 = vpack.c.b16 %v554, %v553
        %v665 = vpack.c.b16 %v556, %v555
        %v666 = vpack.c.b16 %v558, %v557
        %v667 = vpack.c.b16 %v560, %v559
        %v668 = vpack.c.b16 %v562, %v561
        %v669 = vpack.c.b16 %v564, %v563
        %v670 = vpack.c.b16 %v566, %v565
        %v671 = vpack.c.b16 %v568, %v567
        %v672 = vpack.c.b16 %v570, %v569
        %v673 = vpack.c.b16 %v572, %v571
        %v674 = vpack.c.b16 %v574, %v573
        %v675 = vpack.c.b16 %v576, %v575
        %v676 = vpack.c.b16 %v578, %v577
        %v677 = vpack.c.b16 %v580, %v579
        %v678 = vpack.c.b16 %v582, %v581
        %v679 = vpack.c.b16 %v584, %v583
        %v680 = vpack.c.b16 %v586, %v585
        %v681 = vpack.c.b16 %v588, %v587
        %v682 = vpack.c.b16 %v590, %v589
        %v683 = vpack.c.b16 %v592, %v591
        %v684 = vpack.c.b16 %v594, %v593
        %v685 = vpack.c.b16 %v596, %v595
        %v686 = vpack.c.b16 %v598, %v597
        %v687 = vpack.c.b16 %v600, %v599
        %v688 = vpack.c.b16 %v602, %v601
        %v689 = vpack.c.b16 %v604, %v603
        %v690 = vpack.c.b16 %v606, %v605
        %v691 = vpack.c.b16 %v608, %v607
        %v692 = vpack.c.b16 %v610, %v609
        %v693 = vpack.c.b16 %v612, %v611
        %v694 = vpack.c.b16 %v614, %v613
        %v695 = vpack.c.b16 %v616, %v615
        %v696 = vpack.c.b16 %v618, %v617
        %v697 = vpack.c.b16 %v620, %v619
        %v698 = vpack.c.b16 %v622, %v621
        %v699 = vpack.c.b16 %v624, %v623
        %v700 = vpack.c.b16 %v626, %v625
        %v701 = vpack.c.b16 %v628, %v627
        %v702 = vpack.c.b16 %v630, %v629
        %v703 = vpack.c.b16 %v632, %v631
        %v704 = vpack.c.b16 %v634, %v633
        %v705 = vpack.c.b16 %v636, %v635
        %v706 = vpack.c.b16 %v638, %v637
        %v707 = vpack.c.b16 %v640, %v639
        %v708 = vpack.c.b16 %v642, %v641
        %v709 = vpack.c.b16 %v644, %v643
        %v710 = vpack.c.b16 %v646, %v645
        %v715 = vunpack.c.l.b16 %v387
        %v716 = vunpack.c.l.b16 %v388
        %v717 = vunpack.c.l.b16 %v389
        %v718 = vunpack.c.l.b16 %v390
        %v719 = vpack.c.b16 %v716, %v715
        %v720 = vpack.c.b16 %v718, %v717
        %vm723 = vcmask 261120
        %v725 = vsel %vm723, %v647, 0
        %v728 = vsel %vm723, %v648, 0
        %v731 = vsel %vm723, %v649, 0
        %v734 = vsel %vm723, %v650, 0
        %v737 = vsel %vm723, %v651, 0
        %v740 = vsel %vm723, %v652, 0
        %v743 = vsel %vm723, %v653, 0
        %v746 = vsel %vm723, %v654, 0
        %v749 = vsel %vm723, %v655, 0
        %v752 = vsel %vm723, %v656, 0
        %v755 = vsel %vm723, %v657, 0
        %v758 = vsel %vm723, %v658, 0
        %v761 = vsel %vm723, %v659, 0
        %v764 = vsel %vm723, %v660, 0
        %v767 = vsel %vm723, %v661, 0
        %v770 = vsel %vm723, %v662, 0
        %v773 = vsel %vm723, %v663, 0
        %v776 = vsel %vm723, %v664, 0
        %v779 = vsel %vm723, %v665, 0
        %v782 = vsel %vm723, %v666, 0
        %v785 = vsel %vm723, %v667, 0
        %v788 = vsel %vm723, %v668, 0
        %v791 = vsel %vm723, %v669, 0
        %v794 = vsel %vm723, %v670, 0
        %v797 = vsel %vm723, %v671, 0
        %v800 = vsel %vm723, %v672, 0
        %v803 = vsel %vm723, %v673, 0
        %v806 = vsel %vm723, %v674, 0
        %v809 = vsel %vm723, %v675, 0
        %v812 = vsel %vm723, %v676, 0
        %v815 = vsel %vm723, %v677, 0
        %v818 = vsel %vm723, %v678, 0
        %v821 = vsel %vm723, %v679, 0
        %v824 = vsel %vm723, %v680, 0
        %v827 = vsel %vm723, %v681, 0
        %v830 = vsel %vm723, %v682, 0
        %v833 = vsel %vm723, %v683, 0
        %v836 = vsel %vm723, %v684, 0
        %v839 = vsel %vm723, %v685, 0
        %v842 = vsel %vm723, %v686, 0
        %v845 = vsel %vm723, %v687, 0
        %v848 = vsel %vm723, %v688, 0
        %v851 = vsel %vm723, %v689, 0
        %v854 = vsel %vm723, %v690, 0
        %v857 = vsel %vm723, %v691, 0
        %v860 = vsel %vm723, %v692, 0
        %v863 = vsel %vm723, %v693, 0
        %v866 = vsel %vm723, %v694, 0
        %v869 = vsel %vm723, %v695, 0
        %v872 = vsel %vm723, %v696, 0
        %v875 = vsel %vm723, %v697, 0
        %v878 = vsel %vm723, %v698, 0
        %v881 = vsel %vm723, %v699, 0
        %v884 = vsel %vm723, %v700, 0
        %v887 = vsel %vm723, %v701, 0
        %v890 = vsel %vm723, %v702, 0
        %v893 = vsel %vm723, %v703, 0
        %v896 = vsel %vm723, %v704, 0
        %v899 = vsel %vm723, %v705, 0
        %v902 = vsel %vm723, %v706, 0
        %v905 = vsel %vm723, %v707, 0
        %v908 = vsel %vm723, %v708, 0
        %v911 = vsel %vm723, %v709, 0
        %v914 = vsel %vm723, %v710, 0
        %916 = vmatprep.subr.bf16.mxu0 0
        %917 = vmatpush1.bf16.msra.mxu0 0
        %918 = vmatprep.subr.bf16.mxu0 0
        %919 = vmatpush1.bf16.msra.mxu0 0
        %920 = vmatprep.subr.bf16.mxu0 0
        %921 = vmatpush1.bf16.msra.mxu0 0
        %922 = vmatprep.subr.bf16.mxu0 0
        %923 = vmatpush1.bf16.msra.mxu0 0
        %924 = vmatprep.subr.bf16.mxu0 0
        %925 = vmatpush1.bf16.msra.mxu0 0
        %926 = vmatprep.subr.bf16.mxu0 0
        %927 = vmatpush1.bf16.msra.mxu0 0
        %928 = vmatprep.subr.bf16.mxu0 0
        %929 = vmatpush1.bf16.msra.mxu0 %v720
        %930 = vmatprep.subr.bf16.mxu0 0
        %931 = vmatpush1.bf16.msra.mxu0 %v719
        %932 = vmatprep.subr.bf16.mxu0 0
        %933 = vmatpush2.bf16.msra.mxu0 0
        %934 = vmatprep.subr.bf16.mxu0 0
        %935 = vmatpush2.bf16.msra.mxu0 0
        %936 = vmatprep.subr.bf16.mxu0 0
        %937 = vmatpush2.bf16.msra.mxu0 0
        %938 = vmatprep.subr.bf16.mxu0 0
        %939 = vmatpush2.bf16.msra.mxu0 0
        %940 = vmatprep.subr.bf16.mxu0 0
        %941 = vmatpush2.bf16.msra.mxu0 0
        %942 = vmatprep.subr.bf16.mxu0 0
        %943 = vmatpush2.bf16.msra.mxu0 0
        %944 = vmatprep.subr.bf16.mxu0 0
        %945 = vmatpush2.bf16.msra.mxu0 0
        %946 = vmatprep.subr.bf16.mxu0 0
        %947 = vmatpush2.bf16.msra.mxu0 0
        %948 = vmatprep.mubr.bf16.mxu0 0
        %949 = vmatmul.mubr.bf16.gmra.mxu0 %v725
        %v950 = vpop.f32.mrf.mxu0
        %v951 = vadd.f32 0.0, %v950
        %v952 = vpop.f32.mrf.mxu0
        %v953 = vpop.f32.mrf.mxu0
        %v954 = vadd.f32 0.0, %v953
        %v955 = vpop.f32.mrf.mxu0
        %956 = vmatprep.mubr.bf16.mxu0 0
        %957 = vmatmul.mubr.bf16.gmra.mxu0 %v728
        %v958 = vpop.f32.mrf.mxu0
        %v959 = vadd.f32 0.0, %v958
        %v960 = vpop.f32.mrf.mxu0
        %v961 = vpop.f32.mrf.mxu0
        %v962 = vadd.f32 0.0, %v961
        %v963 = vpop.f32.mrf.mxu0
        %964 = vmatprep.mubr.bf16.mxu0 0
        %965 = vmatmul.mubr.bf16.gmra.mxu0 %v731
        %v966 = vpop.f32.mrf.mxu0
        %v967 = vadd.f32 0.0, %v966
        %v968 = vpop.f32.mrf.mxu0
        %v969 = vpop.f32.mrf.mxu0
        %v970 = vadd.f32 0.0, %v969
        %v971 = vpop.f32.mrf.mxu0
        %972 = vmatprep.mubr.bf16.mxu0 0
        %973 = vmatmul.mubr.bf16.gmra.mxu0 %v734
        %v974 = vpop.f32.mrf.mxu0
        %v975 = vadd.f32 0.0, %v974
        %v976 = vpop.f32.mrf.mxu0
        %v977 = vpop.f32.mrf.mxu0
        %v978 = vadd.f32 0.0, %v977
        %v979 = vpop.f32.mrf.mxu0
        %980 = vmatprep.mubr.bf16.mxu0 0
        %981 = vmatmul.mubr.bf16.gmra.mxu0 %v737
        %v982 = vpop.f32.mrf.mxu0
        %v983 = vadd.f32 0.0, %v982
        %v984 = vpop.f32.mrf.mxu0
        %v985 = vpop.f32.mrf.mxu0
        %v986 = vadd.f32 0.0, %v985
        %v987 = vpop.f32.mrf.mxu0
        %988 = vmatprep.mubr.bf16.mxu0 0
        %989 = vmatmul.mubr.bf16.gmra.mxu0 %v740
        %v990 = vpop.f32.mrf.mxu0
        %v991 = vadd.f32 0.0, %v990
        %v992 = vpop.f32.mrf.mxu0
        %v993 = vpop.f32.mrf.mxu0
        %v994 = vadd.f32 0.0, %v993
        %v995 = vpop.f32.mrf.mxu0
        %996 = vmatprep.mubr.bf16.mxu0 0
        %997 = vmatmul.mubr.bf16.gmra.mxu0 %v743
        %v998 = vpop.f32.mrf.mxu0
        %v999 = vadd.f32 0.0, %v998
        %v1000 = vpop.f32.mrf.mxu0
        %v1001 = vpop.f32.mrf.mxu0
        %v1002 = vadd.f32 0.0, %v1001
        %v1003 = vpop.f32.mrf.mxu0
        %1004 = vmatprep.mubr.bf16.mxu0 0
        %1005 = vmatmul.mubr.bf16.gmra.mxu0 %v746
        %v1006 = vpop.f32.mrf.mxu0
        %v1007 = vadd.f32 0.0, %v1006
        %v1008 = vpop.f32.mrf.mxu0
        %v1009 = vpop.f32.mrf.mxu0
        %v1010 = vadd.f32 0.0, %v1009
        %v1011 = vpop.f32.mrf.mxu0
        %1012 = vmatprep.mubr.bf16.mxu0 0
        %1013 = vmatmul.mubr.bf16.gmra.mxu0 %v749
        %v1014 = vpop.f32.mrf.mxu0
        %v1015 = vadd.f32 0.0, %v1014
        %v1016 = vpop.f32.mrf.mxu0
        %v1017 = vpop.f32.mrf.mxu0
        %v1018 = vadd.f32 0.0, %v1017
        %v1019 = vpop.f32.mrf.mxu0
        %1020 = vmatprep.mubr.bf16.mxu0 0
        %1021 = vmatmul.mubr.bf16.gmra.mxu0 %v752
        %v1022 = vpop.f32.mrf.mxu0
        %v1023 = vadd.f32 0.0, %v1022
        %v1024 = vpop.f32.mrf.mxu0
        %v1025 = vpop.f32.mrf.mxu0
        %v1026 = vadd.f32 0.0, %v1025
        %v1027 = vpop.f32.mrf.mxu0
        %1028 = vmatprep.mubr.bf16.mxu0 0
        %1029 = vmatmul.mubr.bf16.gmra.mxu0 %v755
        %v1030 = vpop.f32.mrf.mxu0
        %v1031 = vadd.f32 0.0, %v1030
        %v1032 = vpop.f32.mrf.mxu0
        %v1033 = vpop.f32.mrf.mxu0
        %v1034 = vadd.f32 0.0, %v1033
        %v1035 = vpop.f32.mrf.mxu0
        %1036 = vmatprep.mubr.bf16.mxu0 0
        %1037 = vmatmul.mubr.bf16.gmra.mxu0 %v758
        %v1038 = vpop.f32.mrf.mxu0
        %v1039 = vadd.f32 0.0, %v1038
        %v1040 = vpop.f32.mrf.mxu0
        %v1041 = vpop.f32.mrf.mxu0
        %v1042 = vadd.f32 0.0, %v1041
        %v1043 = vpop.f32.mrf.mxu0
        %1044 = vmatprep.mubr.bf16.mxu0 0
        %1045 = vmatmul.mubr.bf16.gmra.mxu0 %v761
        %v1046 = vpop.f32.mrf.mxu0
        %v1047 = vadd.f32 0.0, %v1046
        %v1048 = vpop.f32.mrf.mxu0
        %v1049 = vpop.f32.mrf.mxu0
        %v1050 = vadd.f32 0.0, %v1049
        %v1051 = vpop.f32.mrf.mxu0
        %1052 = vmatprep.mubr.bf16.mxu0 0
        %1053 = vmatmul.mubr.bf16.gmra.mxu0 %v764
        %v1054 = vpop.f32.mrf.mxu0
        %v1055 = vadd.f32 0.0, %v1054
        %v1056 = vpop.f32.mrf.mxu0
        %v1057 = vpop.f32.mrf.mxu0
        %v1058 = vadd.f32 0.0, %v1057
        %v1059 = vpop.f32.mrf.mxu0
        %1060 = vmatprep.mubr.bf16.mxu0 0
        %1061 = vmatmul.mubr.bf16.gmra.mxu0 %v767
        %v1062 = vpop.f32.mrf.mxu0
        %v1063 = vadd.f32 0.0, %v1062
        %v1064 = vpop.f32.mrf.mxu0
        %v1065 = vpop.f32.mrf.mxu0
        %v1066 = vadd.f32 0.0, %v1065
        %v1067 = vpop.f32.mrf.mxu0
        %1068 = vmatprep.mubr.bf16.mxu0 0
        %1069 = vmatmul.mubr.bf16.gmra.mxu0 %v770
        %v1070 = vpop.f32.mrf.mxu0
        %v1071 = vadd.f32 0.0, %v1070
        %v1072 = vpop.f32.mrf.mxu0
        %v1073 = vpop.f32.mrf.mxu0
        %v1074 = vadd.f32 0.0, %v1073
        %v1075 = vpop.f32.mrf.mxu0
        %1076 = vmatprep.mubr.bf16.mxu0 0
        %1077 = vmatmul.mubr.bf16.gmra.mxu0 %v773
        %v1078 = vpop.f32.mrf.mxu0
        %v1079 = vadd.f32 0.0, %v1078
        %v1080 = vpop.f32.mrf.mxu0
        %v1081 = vpop.f32.mrf.mxu0
        %v1082 = vadd.f32 0.0, %v1081
        %v1083 = vpop.f32.mrf.mxu0
        %1084 = vmatprep.mubr.bf16.mxu0 0
        %1085 = vmatmul.mubr.bf16.gmra.mxu0 %v776
        %v1086 = vpop.f32.mrf.mxu0
        %v1087 = vadd.f32 0.0, %v1086
        %v1088 = vpop.f32.mrf.mxu0
        %v1089 = vpop.f32.mrf.mxu0
        %v1090 = vadd.f32 0.0, %v1089
        %v1091 = vpop.f32.mrf.mxu0
        %1092 = vmatprep.mubr.bf16.mxu0 0
        %1093 = vmatmul.mubr.bf16.gmra.mxu0 %v779
        %v1094 = vpop.f32.mrf.mxu0
        %v1095 = vadd.f32 0.0, %v1094
        %v1096 = vpop.f32.mrf.mxu0
        %v1097 = vpop.f32.mrf.mxu0
        %v1098 = vadd.f32 0.0, %v1097
        %v1099 = vpop.f32.mrf.mxu0
        %1100 = vmatprep.mubr.bf16.mxu0 0
        %1101 = vmatmul.mubr.bf16.gmra.mxu0 %v782
        %v1102 = vpop.f32.mrf.mxu0
        %v1103 = vadd.f32 0.0, %v1102
        %v1104 = vpop.f32.mrf.mxu0
        %v1105 = vpop.f32.mrf.mxu0
        %v1106 = vadd.f32 0.0, %v1105
        %v1107 = vpop.f32.mrf.mxu0
        %1108 = vmatprep.mubr.bf16.mxu0 0
        %1109 = vmatmul.mubr.bf16.gmra.mxu0 %v785
        %v1110 = vpop.f32.mrf.mxu0
        %v1111 = vadd.f32 0.0, %v1110
        %v1112 = vpop.f32.mrf.mxu0
        %v1113 = vpop.f32.mrf.mxu0
        %v1114 = vadd.f32 0.0, %v1113
        %v1115 = vpop.f32.mrf.mxu0
        %1116 = vmatprep.mubr.bf16.mxu0 0
        %1117 = vmatmul.mubr.bf16.gmra.mxu0 %v788
        %v1118 = vpop.f32.mrf.mxu0
        %v1119 = vadd.f32 0.0, %v1118
        %v1120 = vpop.f32.mrf.mxu0
        %v1121 = vpop.f32.mrf.mxu0
        %v1122 = vadd.f32 0.0, %v1121
        %v1123 = vpop.f32.mrf.mxu0
        %1124 = vmatprep.mubr.bf16.mxu0 0
        %1125 = vmatmul.mubr.bf16.gmra.mxu0 %v791
        %v1126 = vpop.f32.mrf.mxu0
        %v1127 = vadd.f32 0.0, %v1126
        %v1128 = vpop.f32.mrf.mxu0
        %v1129 = vpop.f32.mrf.mxu0
        %v1130 = vadd.f32 0.0, %v1129
        %v1131 = vpop.f32.mrf.mxu0
        %1132 = vmatprep.mubr.bf16.mxu0 0
        %1133 = vmatmul.mubr.bf16.gmra.mxu0 %v794
        %v1134 = vpop.f32.mrf.mxu0
        %v1135 = vadd.f32 0.0, %v1134
        %v1136 = vpop.f32.mrf.mxu0
        %v1137 = vpop.f32.mrf.mxu0
        %v1138 = vadd.f32 0.0, %v1137
        %v1139 = vpop.f32.mrf.mxu0
        %1140 = vmatprep.mubr.bf16.mxu0 0
        %1141 = vmatmul.mubr.bf16.gmra.mxu0 %v797
        %v1142 = vpop.f32.mrf.mxu0
        %v1143 = vadd.f32 0.0, %v1142
        %v1144 = vpop.f32.mrf.mxu0
        %v1145 = vpop.f32.mrf.mxu0
        %v1146 = vadd.f32 0.0, %v1145
        %v1147 = vpop.f32.mrf.mxu0
        %1148 = vmatprep.mubr.bf16.mxu0 0
        %1149 = vmatmul.mubr.bf16.gmra.mxu0 %v800
        %v1150 = vpop.f32.mrf.mxu0
        %v1151 = vadd.f32 0.0, %v1150
        %v1152 = vpop.f32.mrf.mxu0
        %v1153 = vpop.f32.mrf.mxu0
        %v1154 = vadd.f32 0.0, %v1153
        %v1155 = vpop.f32.mrf.mxu0
        %1156 = vmatprep.mubr.bf16.mxu0 0
        %1157 = vmatmul.mubr.bf16.gmra.mxu0 %v803
        %v1158 = vpop.f32.mrf.mxu0
        %v1159 = vadd.f32 0.0, %v1158
        %v1160 = vpop.f32.mrf.mxu0
        %v1161 = vpop.f32.mrf.mxu0
        %v1162 = vadd.f32 0.0, %v1161
        %v1163 = vpop.f32.mrf.mxu0
        %1164 = vmatprep.mubr.bf16.mxu0 0
        %1165 = vmatmul.mubr.bf16.gmra.mxu0 %v806
        %v1166 = vpop.f32.mrf.mxu0
        %v1167 = vadd.f32 0.0, %v1166
        %v1168 = vpop.f32.mrf.mxu0
        %v1169 = vpop.f32.mrf.mxu0
        %v1170 = vadd.f32 0.0, %v1169
        %v1171 = vpop.f32.mrf.mxu0
        %1172 = vmatprep.mubr.bf16.mxu0 0
        %1173 = vmatmul.mubr.bf16.gmra.mxu0 %v809
        %v1174 = vpop.f32.mrf.mxu0
        %v1175 = vadd.f32 0.0, %v1174
        %v1176 = vpop.f32.mrf.mxu0
        %v1177 = vpop.f32.mrf.mxu0
        %v1178 = vadd.f32 0.0, %v1177
        %v1179 = vpop.f32.mrf.mxu0
        %1180 = vmatprep.mubr.bf16.mxu0 0
        %1181 = vmatmul.mubr.bf16.gmra.mxu0 %v812
        %v1182 = vpop.f32.mrf.mxu0
        %v1183 = vadd.f32 0.0, %v1182
        %v1184 = vpop.f32.mrf.mxu0
        %v1185 = vpop.f32.mrf.mxu0
        %v1186 = vadd.f32 0.0, %v1185
        %v1187 = vpop.f32.mrf.mxu0
        %1188 = vmatprep.mubr.bf16.mxu0 0
        %1189 = vmatmul.mubr.bf16.gmra.mxu0 %v815
        %v1190 = vpop.f32.mrf.mxu0
        %v1191 = vadd.f32 0.0, %v1190
        %v1192 = vpop.f32.mrf.mxu0
        %v1193 = vpop.f32.mrf.mxu0
        %v1194 = vadd.f32 0.0, %v1193
        %v1195 = vpop.f32.mrf.mxu0
        %1196 = vmatprep.mubr.bf16.mxu0 0
        %1197 = vmatmul.mubr.bf16.gmra.mxu0 %v818
        %v1198 = vpop.f32.mrf.mxu0
        %v1199 = vadd.f32 0.0, %v1198
        %v1200 = vpop.f32.mrf.mxu0
        %v1201 = vpop.f32.mrf.mxu0
        %v1202 = vadd.f32 0.0, %v1201
        %v1203 = vpop.f32.mrf.mxu0
        %1204 = vmatprep.mubr.bf16.mxu0 0
        %1205 = vmatmul.mubr.bf16.gmra.mxu0 %v821
        %v1206 = vpop.f32.mrf.mxu0
        %v1207 = vadd.f32 0.0, %v1206
        %v1208 = vpop.f32.mrf.mxu0
        %v1209 = vpop.f32.mrf.mxu0
        %v1210 = vadd.f32 0.0, %v1209
        %v1211 = vpop.f32.mrf.mxu0
        %1212 = vmatprep.mubr.bf16.mxu0 0
        %1213 = vmatmul.mubr.bf16.gmra.mxu0 %v824
        %v1214 = vpop.f32.mrf.mxu0
        %v1215 = vadd.f32 0.0, %v1214
        %v1216 = vpop.f32.mrf.mxu0
        %v1217 = vpop.f32.mrf.mxu0
        %v1218 = vadd.f32 0.0, %v1217
        %v1219 = vpop.f32.mrf.mxu0
        %1220 = vmatprep.mubr.bf16.mxu0 0
        %1221 = vmatmul.mubr.bf16.gmra.mxu0 %v827
        %v1222 = vpop.f32.mrf.mxu0
        %v1223 = vadd.f32 0.0, %v1222
        %v1224 = vpop.f32.mrf.mxu0
        %v1225 = vpop.f32.mrf.mxu0
        %v1226 = vadd.f32 0.0, %v1225
        %v1227 = vpop.f32.mrf.mxu0
        %1228 = vmatprep.mubr.bf16.mxu0 0
        %1229 = vmatmul.mubr.bf16.gmra.mxu0 %v830
        %v1230 = vpop.f32.mrf.mxu0
        %v1231 = vadd.f32 0.0, %v1230
        %v1232 = vpop.f32.mrf.mxu0
        %v1233 = vpop.f32.mrf.mxu0
        %v1234 = vadd.f32 0.0, %v1233
        %v1235 = vpop.f32.mrf.mxu0
        %1236 = vmatprep.mubr.bf16.mxu0 0
        %1237 = vmatmul.mubr.bf16.gmra.mxu0 %v833
        %v1238 = vpop.f32.mrf.mxu0
        %v1239 = vadd.f32 0.0, %v1238
        %v1240 = vpop.f32.mrf.mxu0
        %v1241 = vpop.f32.mrf.mxu0
        %v1242 = vadd.f32 0.0, %v1241
        %v1243 = vpop.f32.mrf.mxu0
        %1244 = vmatprep.mubr.bf16.mxu0 0
        %1245 = vmatmul.mubr.bf16.gmra.mxu0 %v836
        %v1246 = vpop.f32.mrf.mxu0
        %v1247 = vadd.f32 0.0, %v1246
        %v1248 = vpop.f32.mrf.mxu0
        %v1249 = vpop.f32.mrf.mxu0
        %v1250 = vadd.f32 0.0, %v1249
        %v1251 = vpop.f32.mrf.mxu0
        %1252 = vmatprep.mubr.bf16.mxu0 0
        %1253 = vmatmul.mubr.bf16.gmra.mxu0 %v839
        %v1254 = vpop.f32.mrf.mxu0
        %v1255 = vadd.f32 0.0, %v1254
        %v1256 = vpop.f32.mrf.mxu0
        %v1257 = vpop.f32.mrf.mxu0
        %v1258 = vadd.f32 0.0, %v1257
        %v1259 = vpop.f32.mrf.mxu0
        %1260 = vmatprep.mubr.bf16.mxu0 0
        %1261 = vmatmul.mubr.bf16.gmra.mxu0 %v842
        %v1262 = vpop.f32.mrf.mxu0
        %v1263 = vadd.f32 0.0, %v1262
        %v1264 = vpop.f32.mrf.mxu0
        %v1265 = vpop.f32.mrf.mxu0
        %v1266 = vadd.f32 0.0, %v1265
        %v1267 = vpop.f32.mrf.mxu0
        %1268 = vmatprep.mubr.bf16.mxu0 0
        %1269 = vmatmul.mubr.bf16.gmra.mxu0 %v845
        %v1270 = vpop.f32.mrf.mxu0
        %v1271 = vadd.f32 0.0, %v1270
        %v1272 = vpop.f32.mrf.mxu0
        %v1273 = vpop.f32.mrf.mxu0
        %v1274 = vadd.f32 0.0, %v1273
        %v1275 = vpop.f32.mrf.mxu0
        %1276 = vmatprep.mubr.bf16.mxu0 0
        %1277 = vmatmul.mubr.bf16.gmra.mxu0 %v848
        %v1278 = vpop.f32.mrf.mxu0
        %v1279 = vadd.f32 0.0, %v1278
        %v1280 = vpop.f32.mrf.mxu0
        %v1281 = vpop.f32.mrf.mxu0
        %v1282 = vadd.f32 0.0, %v1281
        %v1283 = vpop.f32.mrf.mxu0
        %1284 = vmatprep.mubr.bf16.mxu0 0
        %1285 = vmatmul.mubr.bf16.gmra.mxu0 %v851
        %v1286 = vpop.f32.mrf.mxu0
        %v1287 = vadd.f32 0.0, %v1286
        %v1288 = vpop.f32.mrf.mxu0
        %v1289 = vpop.f32.mrf.mxu0
        %v1290 = vadd.f32 0.0, %v1289
        %v1291 = vpop.f32.mrf.mxu0
        %1292 = vmatprep.mubr.bf16.mxu0 0
        %1293 = vmatmul.mubr.bf16.gmra.mxu0 %v854
        %v1294 = vpop.f32.mrf.mxu0
        %v1295 = vadd.f32 0.0, %v1294
        %v1296 = vpop.f32.mrf.mxu0
        %v1297 = vpop.f32.mrf.mxu0
        %v1298 = vadd.f32 0.0, %v1297
        %v1299 = vpop.f32.mrf.mxu0
        %1300 = vmatprep.mubr.bf16.mxu0 0
        %1301 = vmatmul.mubr.bf16.gmra.mxu0 %v857
        %v1302 = vpop.f32.mrf.mxu0
        %v1303 = vadd.f32 0.0, %v1302
        %v1304 = vpop.f32.mrf.mxu0
        %v1305 = vpop.f32.mrf.mxu0
        %v1306 = vadd.f32 0.0, %v1305
        %v1307 = vpop.f32.mrf.mxu0
        %1308 = vmatprep.mubr.bf16.mxu0 0
        %1309 = vmatmul.mubr.bf16.gmra.mxu0 %v860
        %v1310 = vpop.f32.mrf.mxu0
        %v1311 = vadd.f32 0.0, %v1310
        %v1312 = vpop.f32.mrf.mxu0
        %v1313 = vpop.f32.mrf.mxu0
        %v1314 = vadd.f32 0.0, %v1313
        %v1315 = vpop.f32.mrf.mxu0
        %1316 = vmatprep.mubr.bf16.mxu0 0
        %1317 = vmatmul.mubr.bf16.gmra.mxu0 %v863
        %v1318 = vpop.f32.mrf.mxu0
        %v1319 = vadd.f32 0.0, %v1318
        %v1320 = vpop.f32.mrf.mxu0
        %v1321 = vpop.f32.mrf.mxu0
        %v1322 = vadd.f32 0.0, %v1321
        %v1323 = vpop.f32.mrf.mxu0
        %1324 = vmatprep.mubr.bf16.mxu0 0
        %1325 = vmatmul.mubr.bf16.gmra.mxu0 %v866
        %v1326 = vpop.f32.mrf.mxu0
        %v1327 = vadd.f32 0.0, %v1326
        %v1328 = vpop.f32.mrf.mxu0
        %v1329 = vpop.f32.mrf.mxu0
        %v1330 = vadd.f32 0.0, %v1329
        %v1331 = vpop.f32.mrf.mxu0
        %1332 = vmatprep.mubr.bf16.mxu0 0
        %1333 = vmatmul.mubr.bf16.gmra.mxu0 %v869
        %v1334 = vpop.f32.mrf.mxu0
        %v1335 = vadd.f32 0.0, %v1334
        %v1336 = vpop.f32.mrf.mxu0
        %v1337 = vpop.f32.mrf.mxu0
        %v1338 = vadd.f32 0.0, %v1337
        %v1339 = vpop.f32.mrf.mxu0
        %1340 = vmatprep.mubr.bf16.mxu0 0
        %1341 = vmatmul.mubr.bf16.gmra.mxu0 %v872
        %v1342 = vpop.f32.mrf.mxu0
        %v1343 = vadd.f32 0.0, %v1342
        %v1344 = vpop.f32.mrf.mxu0
        %v1345 = vpop.f32.mrf.mxu0
        %v1346 = vadd.f32 0.0, %v1345
        %v1347 = vpop.f32.mrf.mxu0
        %1348 = vmatprep.mubr.bf16.mxu0 0
        %1349 = vmatmul.mubr.bf16.gmra.mxu0 %v875
        %v1350 = vpop.f32.mrf.mxu0
        %v1351 = vadd.f32 0.0, %v1350
        %v1352 = vpop.f32.mrf.mxu0
        %v1353 = vpop.f32.mrf.mxu0
        %v1354 = vadd.f32 0.0, %v1353
        %v1355 = vpop.f32.mrf.mxu0
        %1356 = vmatprep.mubr.bf16.mxu0 0
        %1357 = vmatmul.mubr.bf16.gmra.mxu0 %v878
        %v1358 = vpop.f32.mrf.mxu0
        %v1359 = vadd.f32 0.0, %v1358
        %v1360 = vpop.f32.mrf.mxu0
        %v1361 = vpop.f32.mrf.mxu0
        %v1362 = vadd.f32 0.0, %v1361
        %v1363 = vpop.f32.mrf.mxu0
        %1364 = vmatprep.mubr.bf16.mxu0 0
        %1365 = vmatmul.mubr.bf16.gmra.mxu0 %v881
        %v1366 = vpop.f32.mrf.mxu0
        %v1367 = vadd.f32 0.0, %v1366
        %v1368 = vpop.f32.mrf.mxu0
        %v1369 = vpop.f32.mrf.mxu0
        %v1370 = vadd.f32 0.0, %v1369
        %v1371 = vpop.f32.mrf.mxu0
        %1372 = vmatprep.mubr.bf16.mxu0 0
        %1373 = vmatmul.mubr.bf16.gmra.mxu0 %v884
        %v1374 = vpop.f32.mrf.mxu0
        %v1375 = vadd.f32 0.0, %v1374
        %v1376 = vpop.f32.mrf.mxu0
        %v1377 = vpop.f32.mrf.mxu0
        %v1378 = vadd.f32 0.0, %v1377
        %v1379 = vpop.f32.mrf.mxu0
        %1380 = vmatprep.mubr.bf16.mxu0 0
        %1381 = vmatmul.mubr.bf16.gmra.mxu0 %v887
        %v1382 = vpop.f32.mrf.mxu0
        %v1383 = vadd.f32 0.0, %v1382
        %v1384 = vpop.f32.mrf.mxu0
        %v1385 = vpop.f32.mrf.mxu0
        %v1386 = vadd.f32 0.0, %v1385
        %v1387 = vpop.f32.mrf.mxu0
        %1388 = vmatprep.mubr.bf16.mxu0 0
        %1389 = vmatmul.mubr.bf16.gmra.mxu0 %v890
        %v1390 = vpop.f32.mrf.mxu0
        %v1391 = vadd.f32 0.0, %v1390
        %v1392 = vpop.f32.mrf.mxu0
        %v1393 = vpop.f32.mrf.mxu0
        %v1394 = vadd.f32 0.0, %v1393
        %v1395 = vpop.f32.mrf.mxu0
        %1396 = vmatprep.mubr.bf16.mxu0 0
        %1397 = vmatmul.mubr.bf16.gmra.mxu0 %v893
        %v1398 = vpop.f32.mrf.mxu0
        %v1399 = vadd.f32 0.0, %v1398
        %v1400 = vpop.f32.mrf.mxu0
        %v1401 = vpop.f32.mrf.mxu0
        %v1402 = vadd.f32 0.0, %v1401
        %v1403 = vpop.f32.mrf.mxu0
        %1404 = vmatprep.mubr.bf16.mxu0 0
        %1405 = vmatmul.mubr.bf16.gmra.mxu0 %v896
        %v1406 = vpop.f32.mrf.mxu0
        %v1407 = vadd.f32 0.0, %v1406
        %v1408 = vpop.f32.mrf.mxu0
        %v1409 = vpop.f32.mrf.mxu0
        %v1410 = vadd.f32 0.0, %v1409
        %v1411 = vpop.f32.mrf.mxu0
        %1412 = vmatprep.mubr.bf16.mxu0 0
        %1413 = vmatmul.mubr.bf16.gmra.mxu0 %v899
        %v1414 = vpop.f32.mrf.mxu0
        %v1415 = vadd.f32 0.0, %v1414
        %v1416 = vpop.f32.mrf.mxu0
        %v1417 = vpop.f32.mrf.mxu0
        %v1418 = vadd.f32 0.0, %v1417
        %v1419 = vpop.f32.mrf.mxu0
        %1420 = vmatprep.mubr.bf16.mxu0 0
        %1421 = vmatmul.mubr.bf16.gmra.mxu0 %v902
        %v1422 = vpop.f32.mrf.mxu0
        %v1423 = vadd.f32 0.0, %v1422
        %v1424 = vpop.f32.mrf.mxu0
        %v1425 = vpop.f32.mrf.mxu0
        %v1426 = vadd.f32 0.0, %v1425
        %v1427 = vpop.f32.mrf.mxu0
        %1428 = vmatprep.mubr.bf16.mxu0 0
        %1429 = vmatmul.mubr.bf16.gmra.mxu0 %v905
        %v1430 = vpop.f32.mrf.mxu0
        %v1431 = vadd.f32 0.0, %v1430
        %v1432 = vpop.f32.mrf.mxu0
        %v1433 = vpop.f32.mrf.mxu0
        %v1434 = vadd.f32 0.0, %v1433
        %v1435 = vpop.f32.mrf.mxu0
        %1436 = vmatprep.mubr.bf16.mxu0 0
        %1437 = vmatmul.mubr.bf16.gmra.mxu0 %v908
        %v1438 = vpop.f32.mrf.mxu0
        %v1439 = vadd.f32 0.0, %v1438
        %v1440 = vpop.f32.mrf.mxu0
        %v1441 = vpop.f32.mrf.mxu0
        %v1442 = vadd.f32 0.0, %v1441
        %v1443 = vpop.f32.mrf.mxu0
        %1444 = vmatprep.mubr.bf16.mxu0 0
        %1445 = vmatmul.mubr.bf16.gmra.mxu0 %v911
        %v1446 = vpop.f32.mrf.mxu0
        %v1447 = vadd.f32 0.0, %v1446
        %v1448 = vpop.f32.mrf.mxu0
        %v1449 = vpop.f32.mrf.mxu0
        %v1450 = vadd.f32 0.0, %v1449
        %v1451 = vpop.f32.mrf.mxu0
        %1452 = vmatprep.mubr.bf16.mxu0 0
        %1453 = vmatmul.mubr.bf16.gmra.mxu0 %v914
        %v1454 = vpop.f32.mrf.mxu0
        %v1455 = vadd.f32 0.0, %v1454
        %v1456 = vpop.f32.mrf.mxu0
        %v1457 = vpop.f32.mrf.mxu0
        %v1458 = vadd.f32 0.0, %v1457
        %v1459 = vpop.f32.mrf.mxu0
        %1460 = vdwg.mxu0
        %v1461 = vrot.slane %v951, 1
        %v1462 = vrot.slane %v954, 1
        %v1463 = vrot.slane %v959, 1
        %v1464 = vrot.slane %v962, 1
        %v1465 = vrot.slane %v967, 1
        %v1466 = vrot.slane %v970, 1
        %v1467 = vrot.slane %v975, 1
        %v1468 = vrot.slane %v978, 1
        %v1469 = vrot.slane %v983, 1
        %v1470 = vrot.slane %v986, 1
        %v1471 = vrot.slane %v991, 1
        %v1472 = vrot.slane %v994, 1
        %v1473 = vrot.slane %v999, 1
        %v1474 = vrot.slane %v1002, 1
        %v1475 = vrot.slane %v1007, 1
        %v1476 = vrot.slane %v1010, 1
        %v1477 = vrot.slane %v1015, 1
        %v1478 = vrot.slane %v1018, 1
        %v1479 = vrot.slane %v1023, 1
        %v1480 = vrot.slane %v1026, 1
        %v1481 = vrot.slane %v1031, 1
        %v1482 = vrot.slane %v1034, 1
        %v1483 = vrot.slane %v1039, 1
        %v1484 = vrot.slane %v1042, 1
        %v1485 = vrot.slane %v1047, 1
        %v1486 = vrot.slane %v1050, 1
        %v1487 = vrot.slane %v1055, 1
        %v1488 = vrot.slane %v1058, 1
        %v1489 = vrot.slane %v1063, 1
        %v1490 = vrot.slane %v1066, 1
        %v1491 = vrot.slane %v1071, 1
        %v1492 = vrot.slane %v1074, 1
        %v1493 = vrot.slane %v1079, 1
        %v1494 = vrot.slane %v1082, 1
        %v1495 = vrot.slane %v1087, 1
        %v1496 = vrot.slane %v1090, 1
        %v1497 = vrot.slane %v1095, 1
        %v1498 = vrot.slane %v1098, 1
        %v1499 = vrot.slane %v1103, 1
        %v1500 = vrot.slane %v1106, 1
        %v1501 = vrot.slane %v1111, 1
        %v1502 = vrot.slane %v1114, 1
        %v1503 = vrot.slane %v1119, 1
        %v1504 = vrot.slane %v1122, 1
        %v1505 = vrot.slane %v1127, 1
        %v1506 = vrot.slane %v1130, 1
        %v1507 = vrot.slane %v1135, 1
        %v1508 = vrot.slane %v1138, 1
        %v1509 = vrot.slane %v1143, 1
        %v1510 = vrot.slane %v1146, 1
        %v1511 = vrot.slane %v1151, 1
        %v1512 = vrot.slane %v1154, 1
        %v1513 = vrot.slane %v1159, 1
        %v1514 = vrot.slane %v1162, 1
        %v1515 = vrot.slane %v1167, 1
        %v1516 = vrot.slane %v1170, 1
        %v1517 = vrot.slane %v1175, 1
        %v1518 = vrot.slane %v1178, 1
        %v1519 = vrot.slane %v1183, 1
        %v1520 = vrot.slane %v1186, 1
        %v1521 = vrot.slane %v1191, 1
        %v1522 = vrot.slane %v1194, 1
        %v1523 = vrot.slane %v1199, 1
        %v1524 = vrot.slane %v1202, 1
        %v1525 = vrot.slane %v1207, 1
        %v1526 = vrot.slane %v1210, 1
        %v1527 = vrot.slane %v1215, 1
        %v1528 = vrot.slane %v1218, 1
        %v1529 = vrot.slane %v1223, 1
        %v1530 = vrot.slane %v1226, 1
        %v1531 = vrot.slane %v1231, 1
        %v1532 = vrot.slane %v1234, 1
        %v1533 = vrot.slane %v1239, 1
        %v1534 = vrot.slane %v1242, 1
        %v1535 = vrot.slane %v1247, 1
        %v1536 = vrot.slane %v1250, 1
        %v1537 = vrot.slane %v1255, 1
        %v1538 = vrot.slane %v1258, 1
        %v1539 = vrot.slane %v1263, 1
        %v1540 = vrot.slane %v1266, 1
        %v1541 = vrot.slane %v1271, 1
        %v1542 = vrot.slane %v1274, 1
        %v1543 = vrot.slane %v1279, 1
        %v1544 = vrot.slane %v1282, 1
        %v1545 = vrot.slane %v1287, 1
        %v1546 = vrot.slane %v1290, 1
        %v1547 = vrot.slane %v1295, 1
        %v1548 = vrot.slane %v1298, 1
        %v1549 = vrot.slane %v1303, 1
        %v1550 = vrot.slane %v1306, 1
        %v1551 = vrot.slane %v1311, 1
        %v1552 = vrot.slane %v1314, 1
        %v1553 = vrot.slane %v1319, 1
        %v1554 = vrot.slane %v1322, 1
        %v1555 = vrot.slane %v1327, 1
        %v1556 = vrot.slane %v1330, 1
        %v1557 = vrot.slane %v1335, 1
        %v1558 = vrot.slane %v1338, 1
        %v1559 = vrot.slane %v1343, 1
        %v1560 = vrot.slane %v1346, 1
        %v1561 = vrot.slane %v1351, 1
        %v1562 = vrot.slane %v1354, 1
        %v1563 = vrot.slane %v1359, 1
        %v1564 = vrot.slane %v1362, 1
        %v1565 = vrot.slane %v1367, 1
        %v1566 = vrot.slane %v1370, 1
        %v1567 = vrot.slane %v1375, 1
        %v1568 = vrot.slane %v1378, 1
        %v1569 = vrot.slane %v1383, 1
        %v1570 = vrot.slane %v1386, 1
        %v1571 = vrot.slane %v1391, 1
        %v1572 = vrot.slane %v1394, 1
        %v1573 = vrot.slane %v1399, 1
        %v1574 = vrot.slane %v1402, 1
        %v1575 = vrot.slane %v1407, 1
        %v1576 = vrot.slane %v1410, 1
        %v1577 = vrot.slane %v1415, 1
        %v1578 = vrot.slane %v1418, 1
        %v1579 = vrot.slane %v1423, 1
        %v1580 = vrot.slane %v1426, 1
        %v1581 = vrot.slane %v1431, 1
        %v1582 = vrot.slane %v1434, 1
        %v1583 = vrot.slane %v1439, 1
        %v1584 = vrot.slane %v1442, 1
        %v1585 = vrot.slane %v1447, 1
        %v1586 = vrot.slane %v1450, 1
        %v1587 = vrot.slane %v1455, 1
        %v1588 = vrot.slane %v1458, 1
        %v1589 = vlaneseq
        %v1590 = vshrl.u32 %v1589, 7
        %vm1591 = vcmp.lt.s32.totalorder %v1590, 7
        %v1592 = vsel %vm1591, %v1587, %v1588
        %v1593 = vsel %vm1591, %v1586, %v1587
        %v1594 = vsel %vm1591, %v1585, %v1586
        %v1595 = vsel %vm1591, %v1584, %v1585
        %v1596 = vsel %vm1591, %v1583, %v1584
        %v1597 = vsel %vm1591, %v1582, %v1583
        %v1598 = vsel %vm1591, %v1581, %v1582
        %v1599 = vsel %vm1591, %v1580, %v1581
        %v1600 = vsel %vm1591, %v1579, %v1580
        %v1601 = vsel %vm1591, %v1578, %v1579
        %v1602 = vsel %vm1591, %v1577, %v1578
        %v1603 = vsel %vm1591, %v1576, %v1577
        %v1604 = vsel %vm1591, %v1575, %v1576
        %v1605 = vsel %vm1591, %v1574, %v1575
        %v1606 = vsel %vm1591, %v1573, %v1574
        %v1607 = vsel %vm1591, %v1572, %v1573
        %v1608 = vsel %vm1591, %v1571, %v1572
        %v1609 = vsel %vm1591, %v1570, %v1571
        %v1610 = vsel %vm1591, %v1569, %v1570
        %v1611 = vsel %vm1591, %v1568, %v1569
        %v1612 = vsel %vm1591, %v1567, %v1568
        %v1613 = vsel %vm1591, %v1566, %v1567
        %v1614 = vsel %vm1591, %v1565, %v1566
        %v1615 = vsel %vm1591, %v1564, %v1565
        %v1616 = vsel %vm1591, %v1563, %v1564
        %v1617 = vsel %vm1591, %v1562, %v1563
        %v1618 = vsel %vm1591, %v1561, %v1562
        %v1619 = vsel %vm1591, %v1560, %v1561
        %v1620 = vsel %vm1591, %v1559, %v1560
        %v1621 = vsel %vm1591, %v1558, %v1559
        %v1622 = vsel %vm1591, %v1557, %v1558
        %v1623 = vsel %vm1591, %v1556, %v1557
        %v1624 = vsel %vm1591, %v1555, %v1556
        %v1625 = vsel %vm1591, %v1554, %v1555
        %v1626 = vsel %vm1591, %v1553, %v1554
        %v1627 = vsel %vm1591, %v1552, %v1553
        %v1628 = vsel %vm1591, %v1551, %v1552
        %v1629 = vsel %vm1591, %v1550, %v1551
        %v1630 = vsel %vm1591, %v1549, %v1550
        %v1631 = vsel %vm1591, %v1548, %v1549
        %v1632 = vsel %vm1591, %v1547, %v1548
        %v1633 = vsel %vm1591, %v1546, %v1547
        %v1634 = vsel %vm1591, %v1545, %v1546
        %v1635 = vsel %vm1591, %v1544, %v1545
        %v1636 = vsel %vm1591, %v1543, %v1544
        %v1637 = vsel %vm1591, %v1542, %v1543
        %v1638 = vsel %vm1591, %v1541, %v1542
        %v1639 = vsel %vm1591, %v1540, %v1541
        %v1640 = vsel %vm1591, %v1539, %v1540
        %v1641 = vsel %vm1591, %v1538, %v1539
        %v1642 = vsel %vm1591, %v1537, %v1538
        %v1643 = vsel %vm1591, %v1536, %v1537
        %v1644 = vsel %vm1591, %v1535, %v1536
        %v1645 = vsel %vm1591, %v1534, %v1535
        %v1646 = vsel %vm1591, %v1533, %v1534
        %v1647 = vsel %vm1591, %v1532, %v1533
        %v1648 = vsel %vm1591, %v1531, %v1532
        %v1649 = vsel %vm1591, %v1530, %v1531
        %v1650 = vsel %vm1591, %v1529, %v1530
        %v1651 = vsel %vm1591, %v1528, %v1529
        %v1652 = vsel %vm1591, %v1527, %v1528
        %v1653 = vsel %vm1591, %v1526, %v1527
        %v1654 = vsel %vm1591, %v1525, %v1526
        %v1655 = vsel %vm1591, %v1524, %v1525
        %v1656 = vsel %vm1591, %v1523, %v1524
        %v1657 = vsel %vm1591, %v1522, %v1523
        %v1658 = vsel %vm1591, %v1521, %v1522
        %v1659 = vsel %vm1591, %v1520, %v1521
        %v1660 = vsel %vm1591, %v1519, %v1520
        %v1661 = vsel %vm1591, %v1518, %v1519
        %v1662 = vsel %vm1591, %v1517, %v1518
        %v1663 = vsel %vm1591, %v1516, %v1517
        %v1664 = vsel %vm1591, %v1515, %v1516
        %v1665 = vsel %vm1591, %v1514, %v1515
        %v1666 = vsel %vm1591, %v1513, %v1514
        %v1667 = vsel %vm1591, %v1512, %v1513
        %v1668 = vsel %vm1591, %v1511, %v1512
        %v1669 = vsel %vm1591, %v1510, %v1511
        %v1670 = vsel %vm1591, %v1509, %v1510
        %v1671 = vsel %vm1591, %v1508, %v1509
        %v1672 = vsel %vm1591, %v1507, %v1508
        %v1673 = vsel %vm1591, %v1506, %v1507
        %v1674 = vsel %vm1591, %v1505, %v1506
        %v1675 = vsel %vm1591, %v1504, %v1505
        %v1676 = vsel %vm1591, %v1503, %v1504
        %v1677 = vsel %vm1591, %v1502, %v1503
        %v1678 = vsel %vm1591, %v1501, %v1502
        %v1679 = vsel %vm1591, %v1500, %v1501
        %v1680 = vsel %vm1591, %v1499, %v1500
        %v1681 = vsel %vm1591, %v1498, %v1499
        %v1682 = vsel %vm1591, %v1497, %v1498
        %v1683 = vsel %vm1591, %v1496, %v1497
        %v1684 = vsel %vm1591, %v1495, %v1496
        %v1685 = vsel %vm1591, %v1494, %v1495
        %v1686 = vsel %vm1591, %v1493, %v1494
        %v1687 = vsel %vm1591, %v1492, %v1493
        %v1688 = vsel %vm1591, %v1491, %v1492
        %v1689 = vsel %vm1591, %v1490, %v1491
        %v1690 = vsel %vm1591, %v1489, %v1490
        %v1691 = vsel %vm1591, %v1488, %v1489
        %v1692 = vsel %vm1591, %v1487, %v1488
        %v1693 = vsel %vm1591, %v1486, %v1487
        %v1694 = vsel %vm1591, %v1485, %v1486
        %v1695 = vsel %vm1591, %v1484, %v1485
        %v1696 = vsel %vm1591, %v1483, %v1484
        %v1697 = vsel %vm1591, %v1482, %v1483
        %v1698 = vsel %vm1591, %v1481, %v1482
        %v1699 = vsel %vm1591, %v1480, %v1481
        %v1700 = vsel %vm1591, %v1479, %v1480
        %v1701 = vsel %vm1591, %v1478, %v1479
        %v1702 = vsel %vm1591, %v1477, %v1478
        %v1703 = vsel %vm1591, %v1476, %v1477
        %v1704 = vsel %vm1591, %v1475, %v1476
        %v1705 = vsel %vm1591, %v1474, %v1475
        %v1706 = vsel %vm1591, %v1473, %v1474
        %v1707 = vsel %vm1591, %v1472, %v1473
        %v1708 = vsel %vm1591, %v1471, %v1472
        %v1709 = vsel %vm1591, %v1470, %v1471
        %v1710 = vsel %vm1591, %v1469, %v1470
        %v1711 = vsel %vm1591, %v1468, %v1469
        %v1712 = vsel %vm1591, %v1467, %v1468
        %v1713 = vsel %vm1591, %v1466, %v1467
        %v1714 = vsel %vm1591, %v1465, %v1466
        %v1715 = vsel %vm1591, %v1464, %v1465
        %v1716 = vsel %vm1591, %v1463, %v1464
        %v1717 = vsel %vm1591, %v1462, %v1463
        %v1718 = vsel %vm1591, %v1461, %v1462
        %v1719 = vsel %vm1591, %v1588, %v1461
        %v1724 = vunpack.c.l.b16 %v382
        %v1725 = vunpack.c.l.b16 %v383
        %v1726 = vunpack.c.l.b16 %v384
        %v1727 = vunpack.c.l.b16 %v385
        %v1728 = vpack.c.b16 %v1725, %v1724
        %v1729 = vpack.c.b16 %v1727, %v1726
        %1732 = vmatprep.subr.bf16.mxu0 0
        %1733 = vmatpush1.bf16.msra.mxu0 0
        %1734 = vmatprep.subr.bf16.mxu0 0
        %1735 = vmatpush1.bf16.msra.mxu0 0
        %1736 = vmatprep.subr.bf16.mxu0 0
        %1737 = vmatpush1.bf16.msra.mxu0 0
        %1738 = vmatprep.subr.bf16.mxu0 0
        %1739 = vmatpush1.bf16.msra.mxu0 0
        %1740 = vmatprep.subr.bf16.mxu0 0
        %1741 = vmatpush1.bf16.msra.mxu0 0
        %1742 = vmatprep.subr.bf16.mxu0 0
        %1743 = vmatpush1.bf16.msra.mxu0 0
        %1744 = vmatprep.subr.bf16.mxu0 0
        %1745 = vmatpush1.bf16.msra.mxu0 %v1729
        %1746 = vmatprep.subr.bf16.mxu0 0
        %1747 = vmatpush1.bf16.msra.mxu0 %v1728
        %1748 = vmatprep.subr.bf16.mxu0 0
        %1749 = vmatpush2.bf16.msra.mxu0 0
        %1750 = vmatprep.subr.bf16.mxu0 0
        %1751 = vmatpush2.bf16.msra.mxu0 0
        %1752 = vmatprep.subr.bf16.mxu0 0
        %1753 = vmatpush2.bf16.msra.mxu0 0
        %1754 = vmatprep.subr.bf16.mxu0 0
        %1755 = vmatpush2.bf16.msra.mxu0 0
        %1756 = vmatprep.subr.bf16.mxu0 0
        %1757 = vmatpush2.bf16.msra.mxu0 0
        %1758 = vmatprep.subr.bf16.mxu0 0
        %1759 = vmatpush2.bf16.msra.mxu0 0
        %1760 = vmatprep.subr.bf16.mxu0 0
        %1761 = vmatpush2.bf16.msra.mxu0 0
        %1762 = vmatprep.subr.bf16.mxu0 0
        %1763 = vmatpush2.bf16.msra.mxu0 0
        %1764 = vmatprep.mubr.bf16.mxu0 0
        %1765 = vmatmul.mubr.bf16.gmra.mxu0 %v725
        %v1766 = vpop.f32.mrf.mxu0
        %v1767 = vadd.f32 %v1718, %v1766
        %v1768 = vpop.f32.mrf.mxu0
        %v1769 = vpop.f32.mrf.mxu0
        %v1770 = vadd.f32 %v1717, %v1769
        %v1771 = vpop.f32.mrf.mxu0
        %1772 = vmatprep.mubr.bf16.mxu0 0
        %1773 = vmatmul.mubr.bf16.gmra.mxu0 %v728
        %v1774 = vpop.f32.mrf.mxu0
        %v1775 = vadd.f32 %v1716, %v1774
        %v1776 = vpop.f32.mrf.mxu0
        %v1777 = vpop.f32.mrf.mxu0
        %v1778 = vadd.f32 %v1715, %v1777
        %v1779 = vpop.f32.mrf.mxu0
        %1780 = vmatprep.mubr.bf16.mxu0 0
        %1781 = vmatmul.mubr.bf16.gmra.mxu0 %v731
        %v1782 = vpop.f32.mrf.mxu0
        %v1783 = vadd.f32 %v1714, %v1782
        %v1784 = vpop.f32.mrf.mxu0
        %v1785 = vpop.f32.mrf.mxu0
        %v1786 = vadd.f32 %v1713, %v1785
        %v1787 = vpop.f32.mrf.mxu0
        %1788 = vmatprep.mubr.bf16.mxu0 0
        %1789 = vmatmul.mubr.bf16.gmra.mxu0 %v734
        %v1790 = vpop.f32.mrf.mxu0
        %v1791 = vadd.f32 %v1712, %v1790
        %v1792 = vpop.f32.mrf.mxu0
        %v1793 = vpop.f32.mrf.mxu0
        %v1794 = vadd.f32 %v1711, %v1793
        %v1795 = vpop.f32.mrf.mxu0
        %1796 = vmatprep.mubr.bf16.mxu0 0
        %1797 = vmatmul.mubr.bf16.gmra.mxu0 %v737
        %v1798 = vpop.f32.mrf.mxu0
        %v1799 = vadd.f32 %v1710, %v1798
        %v1800 = vpop.f32.mrf.mxu0
        %v1801 = vpop.f32.mrf.mxu0
        %v1802 = vadd.f32 %v1709, %v1801
        %v1803 = vpop.f32.mrf.mxu0
        %1804 = vmatprep.mubr.bf16.mxu0 0
        %1805 = vmatmul.mubr.bf16.gmra.mxu0 %v740
        %v1806 = vpop.f32.mrf.mxu0
        %v1807 = vadd.f32 %v1708, %v1806
        %v1808 = vpop.f32.mrf.mxu0
        %v1809 = vpop.f32.mrf.mxu0
        %v1810 = vadd.f32 %v1707, %v1809
        %v1811 = vpop.f32.mrf.mxu0
        %1812 = vmatprep.mubr.bf16.mxu0 0
        %1813 = vmatmul.mubr.bf16.gmra.mxu0 %v743
        %v1814 = vpop.f32.mrf.mxu0
        %v1815 = vadd.f32 %v1706, %v1814
        %v1816 = vpop.f32.mrf.mxu0
        %v1817 = vpop.f32.mrf.mxu0
        %v1818 = vadd.f32 %v1705, %v1817
        %v1819 = vpop.f32.mrf.mxu0
        %1820 = vmatprep.mubr.bf16.mxu0 0
        %1821 = vmatmul.mubr.bf16.gmra.mxu0 %v746
        %v1822 = vpop.f32.mrf.mxu0
        %v1823 = vadd.f32 %v1704, %v1822
        %v1824 = vpop.f32.mrf.mxu0
        %v1825 = vpop.f32.mrf.mxu0
        %v1826 = vadd.f32 %v1703, %v1825
        %v1827 = vpop.f32.mrf.mxu0
        %1828 = vmatprep.mubr.bf16.mxu0 0
        %1829 = vmatmul.mubr.bf16.gmra.mxu0 %v749
        %v1830 = vpop.f32.mrf.mxu0
        %v1831 = vadd.f32 %v1702, %v1830
        %v1832 = vpop.f32.mrf.mxu0
        %v1833 = vpop.f32.mrf.mxu0
        %v1834 = vadd.f32 %v1701, %v1833
        %v1835 = vpop.f32.mrf.mxu0
        %1836 = vmatprep.mubr.bf16.mxu0 0
        %1837 = vmatmul.mubr.bf16.gmra.mxu0 %v752
        %v1838 = vpop.f32.mrf.mxu0
        %v1839 = vadd.f32 %v1700, %v1838
        %v1840 = vpop.f32.mrf.mxu0
        %v1841 = vpop.f32.mrf.mxu0
        %v1842 = vadd.f32 %v1699, %v1841
        %v1843 = vpop.f32.mrf.mxu0
        %1844 = vmatprep.mubr.bf16.mxu0 0
        %1845 = vmatmul.mubr.bf16.gmra.mxu0 %v755
        %v1846 = vpop.f32.mrf.mxu0
        %v1847 = vadd.f32 %v1698, %v1846
        %v1848 = vpop.f32.mrf.mxu0
        %v1849 = vpop.f32.mrf.mxu0
        %v1850 = vadd.f32 %v1697, %v1849
        %v1851 = vpop.f32.mrf.mxu0
        %1852 = vmatprep.mubr.bf16.mxu0 0
        %1853 = vmatmul.mubr.bf16.gmra.mxu0 %v758
        %v1854 = vpop.f32.mrf.mxu0
        %v1855 = vadd.f32 %v1696, %v1854
        %v1856 = vpop.f32.mrf.mxu0
        %v1857 = vpop.f32.mrf.mxu0
        %v1858 = vadd.f32 %v1695, %v1857
        %v1859 = vpop.f32.mrf.mxu0
        %1860 = vmatprep.mubr.bf16.mxu0 0
        %1861 = vmatmul.mubr.bf16.gmra.mxu0 %v761
        %v1862 = vpop.f32.mrf.mxu0
        %v1863 = vadd.f32 %v1694, %v1862
        %v1864 = vpop.f32.mrf.mxu0
        %v1865 = vpop.f32.mrf.mxu0
        %v1866 = vadd.f32 %v1693, %v1865
        %v1867 = vpop.f32.mrf.mxu0
        %1868 = vmatprep.mubr.bf16.mxu0 0
        %1869 = vmatmul.mubr.bf16.gmra.mxu0 %v764
        %v1870 = vpop.f32.mrf.mxu0
        %v1871 = vadd.f32 %v1692, %v1870
        %v1872 = vpop.f32.mrf.mxu0
        %v1873 = vpop.f32.mrf.mxu0
        %v1874 = vadd.f32 %v1691, %v1873
        %v1875 = vpop.f32.mrf.mxu0
        %1876 = vmatprep.mubr.bf16.mxu0 0
        %1877 = vmatmul.mubr.bf16.gmra.mxu0 %v767
        %v1878 = vpop.f32.mrf.mxu0
        %v1879 = vadd.f32 %v1690, %v1878
        %v1880 = vpop.f32.mrf.mxu0
        %v1881 = vpop.f32.mrf.mxu0
        %v1882 = vadd.f32 %v1689, %v1881
        %v1883 = vpop.f32.mrf.mxu0
        %1884 = vmatprep.mubr.bf16.mxu0 0
        %1885 = vmatmul.mubr.bf16.gmra.mxu0 %v770
        %v1886 = vpop.f32.mrf.mxu0
        %v1887 = vadd.f32 %v1688, %v1886
        %v1888 = vpop.f32.mrf.mxu0
        %v1889 = vpop.f32.mrf.mxu0
        %v1890 = vadd.f32 %v1687, %v1889
        %v1891 = vpop.f32.mrf.mxu0
        %1892 = vmatprep.mubr.bf16.mxu0 0
        %1893 = vmatmul.mubr.bf16.gmra.mxu0 %v773
        %v1894 = vpop.f32.mrf.mxu0
        %v1895 = vadd.f32 %v1686, %v1894
        %v1896 = vpop.f32.mrf.mxu0
        %v1897 = vpop.f32.mrf.mxu0
        %v1898 = vadd.f32 %v1685, %v1897
        %v1899 = vpop.f32.mrf.mxu0
        %1900 = vmatprep.mubr.bf16.mxu0 0
        %1901 = vmatmul.mubr.bf16.gmra.mxu0 %v776
        %v1902 = vpop.f32.mrf.mxu0
        %v1903 = vadd.f32 %v1684, %v1902
        %v1904 = vpop.f32.mrf.mxu0
        %v1905 = vpop.f32.mrf.mxu0
        %v1906 = vadd.f32 %v1683, %v1905
        %v1907 = vpop.f32.mrf.mxu0
        %1908 = vmatprep.mubr.bf16.mxu0 0
        %1909 = vmatmul.mubr.bf16.gmra.mxu0 %v779
        %v1910 = vpop.f32.mrf.mxu0
        %v1911 = vadd.f32 %v1682, %v1910
        %v1912 = vpop.f32.mrf.mxu0
        %v1913 = vpop.f32.mrf.mxu0
        %v1914 = vadd.f32 %v1681, %v1913
        %v1915 = vpop.f32.mrf.mxu0
        %1916 = vmatprep.mubr.bf16.mxu0 0
        %1917 = vmatmul.mubr.bf16.gmra.mxu0 %v782
        %v1918 = vpop.f32.mrf.mxu0
        %v1919 = vadd.f32 %v1680, %v1918
        %v1920 = vpop.f32.mrf.mxu0
        %v1921 = vpop.f32.mrf.mxu0
        %v1922 = vadd.f32 %v1679, %v1921
        %v1923 = vpop.f32.mrf.mxu0
        %1924 = vmatprep.mubr.bf16.mxu0 0
        %1925 = vmatmul.mubr.bf16.gmra.mxu0 %v785
        %v1926 = vpop.f32.mrf.mxu0
        %v1927 = vadd.f32 %v1678, %v1926
        %v1928 = vpop.f32.mrf.mxu0
        %v1929 = vpop.f32.mrf.mxu0
        %v1930 = vadd.f32 %v1677, %v1929
        %v1931 = vpop.f32.mrf.mxu0
        %1932 = vmatprep.mubr.bf16.mxu0 0
        %1933 = vmatmul.mubr.bf16.gmra.mxu0 %v788
        %v1934 = vpop.f32.mrf.mxu0
        %v1935 = vadd.f32 %v1676, %v1934
        %v1936 = vpop.f32.mrf.mxu0
        %v1937 = vpop.f32.mrf.mxu0
        %v1938 = vadd.f32 %v1675, %v1937
        %v1939 = vpop.f32.mrf.mxu0
        %1940 = vmatprep.mubr.bf16.mxu0 0
        %1941 = vmatmul.mubr.bf16.gmra.mxu0 %v791
        %v1942 = vpop.f32.mrf.mxu0
        %v1943 = vadd.f32 %v1674, %v1942
        %v1944 = vpop.f32.mrf.mxu0
        %v1945 = vpop.f32.mrf.mxu0
        %v1946 = vadd.f32 %v1673, %v1945
        %v1947 = vpop.f32.mrf.mxu0
        %1948 = vmatprep.mubr.bf16.mxu0 0
        %1949 = vmatmul.mubr.bf16.gmra.mxu0 %v794
        %v1950 = vpop.f32.mrf.mxu0
        %v1951 = vadd.f32 %v1672, %v1950
        %v1952 = vpop.f32.mrf.mxu0
        %v1953 = vpop.f32.mrf.mxu0
        %v1954 = vadd.f32 %v1671, %v1953
        %v1955 = vpop.f32.mrf.mxu0
        %1956 = vmatprep.mubr.bf16.mxu0 0
        %1957 = vmatmul.mubr.bf16.gmra.mxu0 %v797
        %v1958 = vpop.f32.mrf.mxu0
        %v1959 = vadd.f32 %v1670, %v1958
        %v1960 = vpop.f32.mrf.mxu0
        %v1961 = vpop.f32.mrf.mxu0
        %v1962 = vadd.f32 %v1669, %v1961
        %v1963 = vpop.f32.mrf.mxu0
        %1964 = vmatprep.mubr.bf16.mxu0 0
        %1965 = vmatmul.mubr.bf16.gmra.mxu0 %v800
        %v1966 = vpop.f32.mrf.mxu0
        %v1967 = vadd.f32 %v1668, %v1966
        %v1968 = vpop.f32.mrf.mxu0
        %v1969 = vpop.f32.mrf.mxu0
        %v1970 = vadd.f32 %v1667, %v1969
        %v1971 = vpop.f32.mrf.mxu0
        %1972 = vmatprep.mubr.bf16.mxu0 0
        %1973 = vmatmul.mubr.bf16.gmra.mxu0 %v803
        %v1974 = vpop.f32.mrf.mxu0
        %v1975 = vadd.f32 %v1666, %v1974
        %v1976 = vpop.f32.mrf.mxu0
        %v1977 = vpop.f32.mrf.mxu0
        %v1978 = vadd.f32 %v1665, %v1977
        %v1979 = vpop.f32.mrf.mxu0
        %1980 = vmatprep.mubr.bf16.mxu0 0
        %1981 = vmatmul.mubr.bf16.gmra.mxu0 %v806
        %v1982 = vpop.f32.mrf.mxu0
        %v1983 = vadd.f32 %v1664, %v1982
        %v1984 = vpop.f32.mrf.mxu0
        %v1985 = vpop.f32.mrf.mxu0
        %v1986 = vadd.f32 %v1663, %v1985
        %v1987 = vpop.f32.mrf.mxu0
        %1988 = vmatprep.mubr.bf16.mxu0 0
        %1989 = vmatmul.mubr.bf16.gmra.mxu0 %v809
        %v1990 = vpop.f32.mrf.mxu0
        %v1991 = vadd.f32 %v1662, %v1990
        %v1992 = vpop.f32.mrf.mxu0
        %v1993 = vpop.f32.mrf.mxu0
        %v1994 = vadd.f32 %v1661, %v1993
        %v1995 = vpop.f32.mrf.mxu0
        %1996 = vmatprep.mubr.bf16.mxu0 0
        %1997 = vmatmul.mubr.bf16.gmra.mxu0 %v812
        %v1998 = vpop.f32.mrf.mxu0
        %v1999 = vadd.f32 %v1660, %v1998
        %v2000 = vpop.f32.mrf.mxu0
        %v2001 = vpop.f32.mrf.mxu0
        %v2002 = vadd.f32 %v1659, %v2001
        %v2003 = vpop.f32.mrf.mxu0
        %2004 = vmatprep.mubr.bf16.mxu0 0
        %2005 = vmatmul.mubr.bf16.gmra.mxu0 %v815
        %v2006 = vpop.f32.mrf.mxu0
        %v2007 = vadd.f32 %v1658, %v2006
        %v2008 = vpop.f32.mrf.mxu0
        %v2009 = vpop.f32.mrf.mxu0
        %v2010 = vadd.f32 %v1657, %v2009
        %v2011 = vpop.f32.mrf.mxu0
        %2012 = vmatprep.mubr.bf16.mxu0 0
        %2013 = vmatmul.mubr.bf16.gmra.mxu0 %v818
        %v2014 = vpop.f32.mrf.mxu0
        %v2015 = vadd.f32 %v1656, %v2014
        %v2016 = vpop.f32.mrf.mxu0
        %v2017 = vpop.f32.mrf.mxu0
        %v2018 = vadd.f32 %v1655, %v2017
        %v2019 = vpop.f32.mrf.mxu0
        %2020 = vmatprep.mubr.bf16.mxu0 0
        %2021 = vmatmul.mubr.bf16.gmra.mxu0 %v821
        %v2022 = vpop.f32.mrf.mxu0
        %v2023 = vadd.f32 %v1654, %v2022
        %v2024 = vpop.f32.mrf.mxu0
        %v2025 = vpop.f32.mrf.mxu0
        %v2026 = vadd.f32 %v1653, %v2025
        %v2027 = vpop.f32.mrf.mxu0
        %2028 = vmatprep.mubr.bf16.mxu0 0
        %2029 = vmatmul.mubr.bf16.gmra.mxu0 %v824
        %v2030 = vpop.f32.mrf.mxu0
        %v2031 = vadd.f32 %v1652, %v2030
        %v2032 = vpop.f32.mrf.mxu0
        %v2033 = vpop.f32.mrf.mxu0
        %v2034 = vadd.f32 %v1651, %v2033
        %v2035 = vpop.f32.mrf.mxu0
        %2036 = vmatprep.mubr.bf16.mxu0 0
        %2037 = vmatmul.mubr.bf16.gmra.mxu0 %v827
        %v2038 = vpop.f32.mrf.mxu0
        %v2039 = vadd.f32 %v1650, %v2038
        %v2040 = vpop.f32.mrf.mxu0
        %v2041 = vpop.f32.mrf.mxu0
        %v2042 = vadd.f32 %v1649, %v2041
        %v2043 = vpop.f32.mrf.mxu0
        %2044 = vmatprep.mubr.bf16.mxu0 0
        %2045 = vmatmul.mubr.bf16.gmra.mxu0 %v830
        %v2046 = vpop.f32.mrf.mxu0
        %v2047 = vadd.f32 %v1648, %v2046
        %v2048 = vpop.f32.mrf.mxu0
        %v2049 = vpop.f32.mrf.mxu0
        %v2050 = vadd.f32 %v1647, %v2049
        %v2051 = vpop.f32.mrf.mxu0
        %2052 = vmatprep.mubr.bf16.mxu0 0
        %2053 = vmatmul.mubr.bf16.gmra.mxu0 %v833
        %v2054 = vpop.f32.mrf.mxu0
        %v2055 = vadd.f32 %v1646, %v2054
        %v2056 = vpop.f32.mrf.mxu0
        %v2057 = vpop.f32.mrf.mxu0
        %v2058 = vadd.f32 %v1645, %v2057
        %v2059 = vpop.f32.mrf.mxu0
        %2060 = vmatprep.mubr.bf16.mxu0 0
        %2061 = vmatmul.mubr.bf16.gmra.mxu0 %v836
        %v2062 = vpop.f32.mrf.mxu0
        %v2063 = vadd.f32 %v1644, %v2062
        %v2064 = vpop.f32.mrf.mxu0
        %v2065 = vpop.f32.mrf.mxu0
        %v2066 = vadd.f32 %v1643, %v2065
        %v2067 = vpop.f32.mrf.mxu0
        %2068 = vmatprep.mubr.bf16.mxu0 0
        %2069 = vmatmul.mubr.bf16.gmra.mxu0 %v839
        %v2070 = vpop.f32.mrf.mxu0
        %v2071 = vadd.f32 %v1642, %v2070
        %v2072 = vpop.f32.mrf.mxu0
        %v2073 = vpop.f32.mrf.mxu0
        %v2074 = vadd.f32 %v1641, %v2073
        %v2075 = vpop.f32.mrf.mxu0
        %2076 = vmatprep.mubr.bf16.mxu0 0
        %2077 = vmatmul.mubr.bf16.gmra.mxu0 %v842
        %v2078 = vpop.f32.mrf.mxu0
        %v2079 = vadd.f32 %v1640, %v2078
        %v2080 = vpop.f32.mrf.mxu0
        %v2081 = vpop.f32.mrf.mxu0
        %v2082 = vadd.f32 %v1639, %v2081
        %v2083 = vpop.f32.mrf.mxu0
        %2084 = vmatprep.mubr.bf16.mxu0 0
        %2085 = vmatmul.mubr.bf16.gmra.mxu0 %v845
        %v2086 = vpop.f32.mrf.mxu0
        %v2087 = vadd.f32 %v1638, %v2086
        %v2088 = vpop.f32.mrf.mxu0
        %v2089 = vpop.f32.mrf.mxu0
        %v2090 = vadd.f32 %v1637, %v2089
        %v2091 = vpop.f32.mrf.mxu0
        %2092 = vmatprep.mubr.bf16.mxu0 0
        %2093 = vmatmul.mubr.bf16.gmra.mxu0 %v848
        %v2094 = vpop.f32.mrf.mxu0
        %v2095 = vadd.f32 %v1636, %v2094
        %v2096 = vpop.f32.mrf.mxu0
        %v2097 = vpop.f32.mrf.mxu0
        %v2098 = vadd.f32 %v1635, %v2097
        %v2099 = vpop.f32.mrf.mxu0
        %2100 = vmatprep.mubr.bf16.mxu0 0
        %2101 = vmatmul.mubr.bf16.gmra.mxu0 %v851
        %v2102 = vpop.f32.mrf.mxu0
        %v2103 = vadd.f32 %v1634, %v2102
        %v2104 = vpop.f32.mrf.mxu0
        %v2105 = vpop.f32.mrf.mxu0
        %v2106 = vadd.f32 %v1633, %v2105
        %v2107 = vpop.f32.mrf.mxu0
        %2108 = vmatprep.mubr.bf16.mxu0 0
        %2109 = vmatmul.mubr.bf16.gmra.mxu0 %v854
        %v2110 = vpop.f32.mrf.mxu0
        %v2111 = vadd.f32 %v1632, %v2110
        %v2112 = vpop.f32.mrf.mxu0
        %v2113 = vpop.f32.mrf.mxu0
        %v2114 = vadd.f32 %v1631, %v2113
        %v2115 = vpop.f32.mrf.mxu0
        %2116 = vmatprep.mubr.bf16.mxu0 0
        %2117 = vmatmul.mubr.bf16.gmra.mxu0 %v857
        %v2118 = vpop.f32.mrf.mxu0
        %v2119 = vadd.f32 %v1630, %v2118
        %v2120 = vpop.f32.mrf.mxu0
        %v2121 = vpop.f32.mrf.mxu0
        %v2122 = vadd.f32 %v1629, %v2121
        %v2123 = vpop.f32.mrf.mxu0
        %2124 = vmatprep.mubr.bf16.mxu0 0
        %2125 = vmatmul.mubr.bf16.gmra.mxu0 %v860
        %v2126 = vpop.f32.mrf.mxu0
        %v2127 = vadd.f32 %v1628, %v2126
        %v2128 = vpop.f32.mrf.mxu0
        %v2129 = vpop.f32.mrf.mxu0
        %v2130 = vadd.f32 %v1627, %v2129
        %v2131 = vpop.f32.mrf.mxu0
        %2132 = vmatprep.mubr.bf16.mxu0 0
        %2133 = vmatmul.mubr.bf16.gmra.mxu0 %v863
        %v2134 = vpop.f32.mrf.mxu0
        %v2135 = vadd.f32 %v1626, %v2134
        %v2136 = vpop.f32.mrf.mxu0
        %v2137 = vpop.f32.mrf.mxu0
        %v2138 = vadd.f32 %v1625, %v2137
        %v2139 = vpop.f32.mrf.mxu0
        %2140 = vmatprep.mubr.bf16.mxu0 0
        %2141 = vmatmul.mubr.bf16.gmra.mxu0 %v866
        %v2142 = vpop.f32.mrf.mxu0
        %v2143 = vadd.f32 %v1624, %v2142
        %v2144 = vpop.f32.mrf.mxu0
        %v2145 = vpop.f32.mrf.mxu0
        %v2146 = vadd.f32 %v1623, %v2145
        %v2147 = vpop.f32.mrf.mxu0
        %2148 = vmatprep.mubr.bf16.mxu0 0
        %2149 = vmatmul.mubr.bf16.gmra.mxu0 %v869
        %v2150 = vpop.f32.mrf.mxu0
        %v2151 = vadd.f32 %v1622, %v2150
        %v2152 = vpop.f32.mrf.mxu0
        %v2153 = vpop.f32.mrf.mxu0
        %v2154 = vadd.f32 %v1621, %v2153
        %v2155 = vpop.f32.mrf.mxu0
        %2156 = vmatprep.mubr.bf16.mxu0 0
        %2157 = vmatmul.mubr.bf16.gmra.mxu0 %v872
        %v2158 = vpop.f32.mrf.mxu0
        %v2159 = vadd.f32 %v1620, %v2158
        %v2160 = vpop.f32.mrf.mxu0
        %v2161 = vpop.f32.mrf.mxu0
        %v2162 = vadd.f32 %v1619, %v2161
        %v2163 = vpop.f32.mrf.mxu0
        %2164 = vmatprep.mubr.bf16.mxu0 0
        %2165 = vmatmul.mubr.bf16.gmra.mxu0 %v875
        %v2166 = vpop.f32.mrf.mxu0
        %v2167 = vadd.f32 %v1618, %v2166
        %v2168 = vpop.f32.mrf.mxu0
        %v2169 = vpop.f32.mrf.mxu0
        %v2170 = vadd.f32 %v1617, %v2169
        %v2171 = vpop.f32.mrf.mxu0
        %2172 = vmatprep.mubr.bf16.mxu0 0
        %2173 = vmatmul.mubr.bf16.gmra.mxu0 %v878
        %v2174 = vpop.f32.mrf.mxu0
        %v2175 = vadd.f32 %v1616, %v2174
        %v2176 = vpop.f32.mrf.mxu0
        %v2177 = vpop.f32.mrf.mxu0
        %v2178 = vadd.f32 %v1615, %v2177
        %v2179 = vpop.f32.mrf.mxu0
        %2180 = vmatprep.mubr.bf16.mxu0 0
        %2181 = vmatmul.mubr.bf16.gmra.mxu0 %v881
        %v2182 = vpop.f32.mrf.mxu0
        %v2183 = vadd.f32 %v1614, %v2182
        %v2184 = vpop.f32.mrf.mxu0
        %v2185 = vpop.f32.mrf.mxu0
        %v2186 = vadd.f32 %v1613, %v2185
        %v2187 = vpop.f32.mrf.mxu0
        %2188 = vmatprep.mubr.bf16.mxu0 0
        %2189 = vmatmul.mubr.bf16.gmra.mxu0 %v884
        %v2190 = vpop.f32.mrf.mxu0
        %v2191 = vadd.f32 %v1612, %v2190
        %v2192 = vpop.f32.mrf.mxu0
        %v2193 = vpop.f32.mrf.mxu0
        %v2194 = vadd.f32 %v1611, %v2193
        %v2195 = vpop.f32.mrf.mxu0
        %2196 = vmatprep.mubr.bf16.mxu0 0
        %2197 = vmatmul.mubr.bf16.gmra.mxu0 %v887
        %v2198 = vpop.f32.mrf.mxu0
        %v2199 = vadd.f32 %v1610, %v2198
        %v2200 = vpop.f32.mrf.mxu0
        %v2201 = vpop.f32.mrf.mxu0
        %v2202 = vadd.f32 %v1609, %v2201
        %v2203 = vpop.f32.mrf.mxu0
        %2204 = vmatprep.mubr.bf16.mxu0 0
        %2205 = vmatmul.mubr.bf16.gmra.mxu0 %v890
        %v2206 = vpop.f32.mrf.mxu0
        %v2207 = vadd.f32 %v1608, %v2206
        %v2208 = vpop.f32.mrf.mxu0
        %v2209 = vpop.f32.mrf.mxu0
        %v2210 = vadd.f32 %v1607, %v2209
        %v2211 = vpop.f32.mrf.mxu0
        %2212 = vmatprep.mubr.bf16.mxu0 0
        %2213 = vmatmul.mubr.bf16.gmra.mxu0 %v893
        %v2214 = vpop.f32.mrf.mxu0
        %v2215 = vadd.f32 %v1606, %v2214
        %v2216 = vpop.f32.mrf.mxu0
        %v2217 = vpop.f32.mrf.mxu0
        %v2218 = vadd.f32 %v1605, %v2217
        %v2219 = vpop.f32.mrf.mxu0
        %2220 = vmatprep.mubr.bf16.mxu0 0
        %2221 = vmatmul.mubr.bf16.gmra.mxu0 %v896
        %v2222 = vpop.f32.mrf.mxu0
        %v2223 = vadd.f32 %v1604, %v2222
        %v2224 = vpop.f32.mrf.mxu0
        %v2225 = vpop.f32.mrf.mxu0
        %v2226 = vadd.f32 %v1603, %v2225
        %v2227 = vpop.f32.mrf.mxu0
        %2228 = vmatprep.mubr.bf16.mxu0 0
        %2229 = vmatmul.mubr.bf16.gmra.mxu0 %v899
        %v2230 = vpop.f32.mrf.mxu0
        %v2231 = vadd.f32 %v1602, %v2230
        %v2232 = vpop.f32.mrf.mxu0
        %v2233 = vpop.f32.mrf.mxu0
        %v2234 = vadd.f32 %v1601, %v2233
        %v2235 = vpop.f32.mrf.mxu0
        %2236 = vmatprep.mubr.bf16.mxu0 0
        %2237 = vmatmul.mubr.bf16.gmra.mxu0 %v902
        %v2238 = vpop.f32.mrf.mxu0
        %v2239 = vadd.f32 %v1600, %v2238
        %v2240 = vpop.f32.mrf.mxu0
        %v2241 = vpop.f32.mrf.mxu0
        %v2242 = vadd.f32 %v1599, %v2241
        %v2243 = vpop.f32.mrf.mxu0
        %2244 = vmatprep.mubr.bf16.mxu0 0
        %2245 = vmatmul.mubr.bf16.gmra.mxu0 %v905
        %v2246 = vpop.f32.mrf.mxu0
        %v2247 = vadd.f32 %v1598, %v2246
        %v2248 = vpop.f32.mrf.mxu0
        %v2249 = vpop.f32.mrf.mxu0
        %v2250 = vadd.f32 %v1597, %v2249
        %v2251 = vpop.f32.mrf.mxu0
        %2252 = vmatprep.mubr.bf16.mxu0 0
        %2253 = vmatmul.mubr.bf16.gmra.mxu0 %v908
        %v2254 = vpop.f32.mrf.mxu0
        %v2255 = vadd.f32 %v1596, %v2254
        %v2256 = vpop.f32.mrf.mxu0
        %v2257 = vpop.f32.mrf.mxu0
        %v2258 = vadd.f32 %v1595, %v2257
        %v2259 = vpop.f32.mrf.mxu0
        %2260 = vmatprep.mubr.bf16.mxu0 0
        %2261 = vmatmul.mubr.bf16.gmra.mxu0 %v911
        %v2262 = vpop.f32.mrf.mxu0
        %v2263 = vadd.f32 %v1594, %v2262
        %v2264 = vpop.f32.mrf.mxu0
        %v2265 = vpop.f32.mrf.mxu0
        %v2266 = vadd.f32 %v1593, %v2265
        %v2267 = vpop.f32.mrf.mxu0
        %2268 = vmatprep.mubr.bf16.mxu0 0
        %2269 = vmatmul.mubr.bf16.gmra.mxu0 %v914
        %v2270 = vpop.f32.mrf.mxu0
        %v2271 = vadd.f32 %v1592, %v2270
        %v2272 = vpop.f32.mrf.mxu0
        %v2273 = vpop.f32.mrf.mxu0
        %v2274 = vadd.f32 %v1719, %v2273
        %v2275 = vpop.f32.mrf.mxu0
        %2276 = vdwg.mxu0
        %s2277 = scalar_lea.vmem %s1, 32
        %v2278 = vld [vmem:[%s2277] sm:$0xf]
        %v2279 = vld [vmem:[%s2277 + $0x4] sm:$0xf]
        %v2280 = vld [vmem:[%s2277 + $0x8] sm:$0xf]
        %v2281 = vld [vmem:[%s2277 + $0xc] sm:$0xf]
        %v2286 = vunpack.c.l.b16 %v2278
        %v2287 = vunpack.c.l.b16 %v2279
        %v2288 = vunpack.c.l.b16 %v2280
        %v2289 = vunpack.c.l.b16 %v2281
        %v2290 = vpack.c.b16 %v2287, %v2286
        %v2291 = vpack.c.b16 %v2289, %v2288
        %2294 = vmatprep.subr.bf16.mxu0 0
        %2295 = vmatpush1.bf16.msra.mxu0 0
        %2296 = vmatprep.subr.bf16.mxu0 0
        %2297 = vmatpush1.bf16.msra.mxu0 0
        %2298 = vmatprep.subr.bf16.mxu0 0
        %2299 = vmatpush1.bf16.msra.mxu0 0
        %2300 = vmatprep.subr.bf16.mxu0 0
        %2301 = vmatpush1.bf16.msra.mxu0 0
        %2302 = vmatprep.subr.bf16.mxu0 0
        %2303 = vmatpush1.bf16.msra.mxu0 0
        %2304 = vmatprep.subr.bf16.mxu0 0
        %2305 = vmatpush1.bf16.msra.mxu0 0
        %2306 = vmatprep.subr.bf16.mxu0 0
        %2307 = vmatpush1.bf16.msra.mxu0 %v2291
        %2308 = vmatprep.subr.bf16.mxu0 0
        %2309 = vmatpush1.bf16.msra.mxu0 %v2290
        %2310 = vmatprep.subr.bf16.mxu0 0
        %2311 = vmatpush2.bf16.msra.mxu0 0
        %2312 = vmatprep.subr.bf16.mxu0 0
        %2313 = vmatpush2.bf16.msra.mxu0 0
        %2314 = vmatprep.subr.bf16.mxu0 0
        %2315 = vmatpush2.bf16.msra.mxu0 0
        %2316 = vmatprep.subr.bf16.mxu0 0
        %2317 = vmatpush2.bf16.msra.mxu0 0
        %2318 = vmatprep.subr.bf16.mxu0 0
        %2319 = vmatpush2.bf16.msra.mxu0 0
        %2320 = vmatprep.subr.bf16.mxu0 0
        %2321 = vmatpush2.bf16.msra.mxu0 0
        %2322 = vmatprep.subr.bf16.mxu0 0
        %2323 = vmatpush2.bf16.msra.mxu0 0
        %2324 = vmatprep.subr.bf16.mxu0 0
        %2325 = vmatpush2.bf16.msra.mxu0 0
        %2326 = vmatprep.mubr.bf16.mxu0 0
        %2327 = vmatmul.mubr.bf16.gmra.mxu0 %v725
        %v2328 = vpop.f32.mrf.mxu0
        %v2329 = vadd.f32 0.0, %v2328
        %v2330 = vpop.f32.mrf.mxu0
        %v2331 = vpop.f32.mrf.mxu0
        %v2332 = vadd.f32 0.0, %v2331
        %v2333 = vpop.f32.mrf.mxu0
        %2334 = vmatprep.mubr.bf16.mxu0 0
        %2335 = vmatmul.mubr.bf16.gmra.mxu0 %v728
        %v2336 = vpop.f32.mrf.mxu0
        %v2337 = vadd.f32 0.0, %v2336
        %v2338 = vpop.f32.mrf.mxu0
        %v2339 = vpop.f32.mrf.mxu0
        %v2340 = vadd.f32 0.0, %v2339
        %v2341 = vpop.f32.mrf.mxu0
        %2342 = vmatprep.mubr.bf16.mxu0 0
        %2343 = vmatmul.mubr.bf16.gmra.mxu0 %v731
        %v2344 = vpop.f32.mrf.mxu0
        %v2345 = vadd.f32 0.0, %v2344
        %v2346 = vpop.f32.mrf.mxu0
        %v2347 = vpop.f32.mrf.mxu0
        %v2348 = vadd.f32 0.0, %v2347
        %v2349 = vpop.f32.mrf.mxu0
        %2350 = vmatprep.mubr.bf16.mxu0 0
        %2351 = vmatmul.mubr.bf16.gmra.mxu0 %v734
        %v2352 = vpop.f32.mrf.mxu0
        %v2353 = vadd.f32 0.0, %v2352
        %v2354 = vpop.f32.mrf.mxu0
        %v2355 = vpop.f32.mrf.mxu0
        %v2356 = vadd.f32 0.0, %v2355
        %v2357 = vpop.f32.mrf.mxu0
        %2358 = vmatprep.mubr.bf16.mxu0 0
        %2359 = vmatmul.mubr.bf16.gmra.mxu0 %v737
        %v2360 = vpop.f32.mrf.mxu0
        %v2361 = vadd.f32 0.0, %v2360
        %v2362 = vpop.f32.mrf.mxu0
        %v2363 = vpop.f32.mrf.mxu0
        %v2364 = vadd.f32 0.0, %v2363
        %v2365 = vpop.f32.mrf.mxu0
        %2366 = vmatprep.mubr.bf16.mxu0 0
        %2367 = vmatmul.mubr.bf16.gmra.mxu0 %v740
        %v2368 = vpop.f32.mrf.mxu0
        %v2369 = vadd.f32 0.0, %v2368
        %v2370 = vpop.f32.mrf.mxu0
        %v2371 = vpop.f32.mrf.mxu0
        %v2372 = vadd.f32 0.0, %v2371
        %v2373 = vpop.f32.mrf.mxu0
        %2374 = vmatprep.mubr.bf16.mxu0 0
        %2375 = vmatmul.mubr.bf16.gmra.mxu0 %v743
        %v2376 = vpop.f32.mrf.mxu0
        %v2377 = vadd.f32 0.0, %v2376
        %v2378 = vpop.f32.mrf.mxu0
        %v2379 = vpop.f32.mrf.mxu0
        %v2380 = vadd.f32 0.0, %v2379
        %v2381 = vpop.f32.mrf.mxu0
        %2382 = vmatprep.mubr.bf16.mxu0 0
        %2383 = vmatmul.mubr.bf16.gmra.mxu0 %v746
        %v2384 = vpop.f32.mrf.mxu0
        %v2385 = vadd.f32 0.0, %v2384
        %v2386 = vpop.f32.mrf.mxu0
        %v2387 = vpop.f32.mrf.mxu0
        %v2388 = vadd.f32 0.0, %v2387
        %v2389 = vpop.f32.mrf.mxu0
        %2390 = vmatprep.mubr.bf16.mxu0 0
        %2391 = vmatmul.mubr.bf16.gmra.mxu0 %v749
        %v2392 = vpop.f32.mrf.mxu0
        %v2393 = vadd.f32 0.0, %v2392
        %v2394 = vpop.f32.mrf.mxu0
        %v2395 = vpop.f32.mrf.mxu0
        %v2396 = vadd.f32 0.0, %v2395
        %v2397 = vpop.f32.mrf.mxu0
        %2398 = vmatprep.mubr.bf16.mxu0 0
        %2399 = vmatmul.mubr.bf16.gmra.mxu0 %v752
        %v2400 = vpop.f32.mrf.mxu0
        %v2401 = vadd.f32 0.0, %v2400
        %v2402 = vpop.f32.mrf.mxu0
        %v2403 = vpop.f32.mrf.mxu0
        %v2404 = vadd.f32 0.0, %v2403
        %v2405 = vpop.f32.mrf.mxu0
        %2406 = vmatprep.mubr.bf16.mxu0 0
        %2407 = vmatmul.mubr.bf16.gmra.mxu0 %v755
        %v2408 = vpop.f32.mrf.mxu0
        %v2409 = vadd.f32 0.0, %v2408
        %v2410 = vpop.f32.mrf.mxu0
        %v2411 = vpop.f32.mrf.mxu0
        %v2412 = vadd.f32 0.0, %v2411
        %v2413 = vpop.f32.mrf.mxu0
        %2414 = vmatprep.mubr.bf16.mxu0 0
        %2415 = vmatmul.mubr.bf16.gmra.mxu0 %v758
        %v2416 = vpop.f32.mrf.mxu0
        %v2417 = vadd.f32 0.0, %v2416
        %v2418 = vpop.f32.mrf.mxu0
        %v2419 = vpop.f32.mrf.mxu0
        %v2420 = vadd.f32 0.0, %v2419
        %v2421 = vpop.f32.mrf.mxu0
        %2422 = vmatprep.mubr.bf16.mxu0 0
        %2423 = vmatmul.mubr.bf16.gmra.mxu0 %v761
        %v2424 = vpop.f32.mrf.mxu0
        %v2425 = vadd.f32 0.0, %v2424
        %v2426 = vpop.f32.mrf.mxu0
        %v2427 = vpop.f32.mrf.mxu0
        %v2428 = vadd.f32 0.0, %v2427
        %v2429 = vpop.f32.mrf.mxu0
        %2430 = vmatprep.mubr.bf16.mxu0 0
        %2431 = vmatmul.mubr.bf16.gmra.mxu0 %v764
        %v2432 = vpop.f32.mrf.mxu0
        %v2433 = vadd.f32 0.0, %v2432
        %v2434 = vpop.f32.mrf.mxu0
        %v2435 = vpop.f32.mrf.mxu0
        %v2436 = vadd.f32 0.0, %v2435
        %v2437 = vpop.f32.mrf.mxu0
        %2438 = vmatprep.mubr.bf16.mxu0 0
        %2439 = vmatmul.mubr.bf16.gmra.mxu0 %v767
        %v2440 = vpop.f32.mrf.mxu0
        %v2441 = vadd.f32 0.0, %v2440
        %v2442 = vpop.f32.mrf.mxu0
        %v2443 = vpop.f32.mrf.mxu0
        %v2444 = vadd.f32 0.0, %v2443
        %v2445 = vpop.f32.mrf.mxu0
        %2446 = vmatprep.mubr.bf16.mxu0 0
        %2447 = vmatmul.mubr.bf16.gmra.mxu0 %v770
        %v2448 = vpop.f32.mrf.mxu0
        %v2449 = vadd.f32 0.0, %v2448
        %v2450 = vpop.f32.mrf.mxu0
        %v2451 = vpop.f32.mrf.mxu0
        %v2452 = vadd.f32 0.0, %v2451
        %v2453 = vpop.f32.mrf.mxu0
        %2454 = vmatprep.mubr.bf16.mxu0 0
        %2455 = vmatmul.mubr.bf16.gmra.mxu0 %v773
        %v2456 = vpop.f32.mrf.mxu0
        %v2457 = vadd.f32 0.0, %v2456
        %v2458 = vpop.f32.mrf.mxu0
        %v2459 = vpop.f32.mrf.mxu0
        %v2460 = vadd.f32 0.0, %v2459
        %v2461 = vpop.f32.mrf.mxu0
        %2462 = vmatprep.mubr.bf16.mxu0 0
        %2463 = vmatmul.mubr.bf16.gmra.mxu0 %v776
        %v2464 = vpop.f32.mrf.mxu0
        %v2465 = vadd.f32 0.0, %v2464
        %v2466 = vpop.f32.mrf.mxu0
        %v2467 = vpop.f32.mrf.mxu0
        %v2468 = vadd.f32 0.0, %v2467
        %v2469 = vpop.f32.mrf.mxu0
        %2470 = vmatprep.mubr.bf16.mxu0 0
        %2471 = vmatmul.mubr.bf16.gmra.mxu0 %v779
        %v2472 = vpop.f32.mrf.mxu0
        %v2473 = vadd.f32 0.0, %v2472
        %v2474 = vpop.f32.mrf.mxu0
        %v2475 = vpop.f32.mrf.mxu0
        %v2476 = vadd.f32 0.0, %v2475
        %v2477 = vpop.f32.mrf.mxu0
        %2478 = vmatprep.mubr.bf16.mxu0 0
        %2479 = vmatmul.mubr.bf16.gmra.mxu0 %v782
        %v2480 = vpop.f32.mrf.mxu0
        %v2481 = vadd.f32 0.0, %v2480
        %v2482 = vpop.f32.mrf.mxu0
        %v2483 = vpop.f32.mrf.mxu0
        %v2484 = vadd.f32 0.0, %v2483
        %v2485 = vpop.f32.mrf.mxu0
        %2486 = vmatprep.mubr.bf16.mxu0 0
        %2487 = vmatmul.mubr.bf16.gmra.mxu0 %v785
        %v2488 = vpop.f32.mrf.mxu0
        %v2489 = vadd.f32 0.0, %v2488
        %v2490 = vpop.f32.mrf.mxu0
        %v2491 = vpop.f32.mrf.mxu0
        %v2492 = vadd.f32 0.0, %v2491
        %v2493 = vpop.f32.mrf.mxu0
        %2494 = vmatprep.mubr.bf16.mxu0 0
        %2495 = vmatmul.mubr.bf16.gmra.mxu0 %v788
        %v2496 = vpop.f32.mrf.mxu0
        %v2497 = vadd.f32 0.0, %v2496
        %v2498 = vpop.f32.mrf.mxu0
        %v2499 = vpop.f32.mrf.mxu0
        %v2500 = vadd.f32 0.0, %v2499
        %v2501 = vpop.f32.mrf.mxu0
        %2502 = vmatprep.mubr.bf16.mxu0 0
        %2503 = vmatmul.mubr.bf16.gmra.mxu0 %v791
        %v2504 = vpop.f32.mrf.mxu0
        %v2505 = vadd.f32 0.0, %v2504
        %v2506 = vpop.f32.mrf.mxu0
        %v2507 = vpop.f32.mrf.mxu0
        %v2508 = vadd.f32 0.0, %v2507
        %v2509 = vpop.f32.mrf.mxu0
        %2510 = vmatprep.mubr.bf16.mxu0 0
        %2511 = vmatmul.mubr.bf16.gmra.mxu0 %v794
        %v2512 = vpop.f32.mrf.mxu0
        %v2513 = vadd.f32 0.0, %v2512
        %v2514 = vpop.f32.mrf.mxu0
        %v2515 = vpop.f32.mrf.mxu0
        %v2516 = vadd.f32 0.0, %v2515
        %v2517 = vpop.f32.mrf.mxu0
        %2518 = vmatprep.mubr.bf16.mxu0 0
        %2519 = vmatmul.mubr.bf16.gmra.mxu0 %v797
        %v2520 = vpop.f32.mrf.mxu0
        %v2521 = vadd.f32 0.0, %v2520
        %v2522 = vpop.f32.mrf.mxu0
        %v2523 = vpop.f32.mrf.mxu0
        %v2524 = vadd.f32 0.0, %v2523
        %v2525 = vpop.f32.mrf.mxu0
        %2526 = vmatprep.mubr.bf16.mxu0 0
        %2527 = vmatmul.mubr.bf16.gmra.mxu0 %v800
        %v2528 = vpop.f32.mrf.mxu0
        %v2529 = vadd.f32 0.0, %v2528
        %v2530 = vpop.f32.mrf.mxu0
        %v2531 = vpop.f32.mrf.mxu0
        %v2532 = vadd.f32 0.0, %v2531
        %v2533 = vpop.f32.mrf.mxu0
        %2534 = vmatprep.mubr.bf16.mxu0 0
        %2535 = vmatmul.mubr.bf16.gmra.mxu0 %v803
        %v2536 = vpop.f32.mrf.mxu0
        %v2537 = vadd.f32 0.0, %v2536
        %v2538 = vpop.f32.mrf.mxu0
        %v2539 = vpop.f32.mrf.mxu0
        %v2540 = vadd.f32 0.0, %v2539
        %v2541 = vpop.f32.mrf.mxu0
        %2542 = vmatprep.mubr.bf16.mxu0 0
        %2543 = vmatmul.mubr.bf16.gmra.mxu0 %v806
        %v2544 = vpop.f32.mrf.mxu0
        %v2545 = vadd.f32 0.0, %v2544
        %v2546 = vpop.f32.mrf.mxu0
        %v2547 = vpop.f32.mrf.mxu0
        %v2548 = vadd.f32 0.0, %v2547
        %v2549 = vpop.f32.mrf.mxu0
        %2550 = vmatprep.mubr.bf16.mxu0 0
        %2551 = vmatmul.mubr.bf16.gmra.mxu0 %v809
        %v2552 = vpop.f32.mrf.mxu0
        %v2553 = vadd.f32 0.0, %v2552
        %v2554 = vpop.f32.mrf.mxu0
        %v2555 = vpop.f32.mrf.mxu0
        %v2556 = vadd.f32 0.0, %v2555
        %v2557 = vpop.f32.mrf.mxu0
        %2558 = vmatprep.mubr.bf16.mxu0 0
        %2559 = vmatmul.mubr.bf16.gmra.mxu0 %v812
        %v2560 = vpop.f32.mrf.mxu0
        %v2561 = vadd.f32 0.0, %v2560
        %v2562 = vpop.f32.mrf.mxu0
        %v2563 = vpop.f32.mrf.mxu0
        %v2564 = vadd.f32 0.0, %v2563
        %v2565 = vpop.f32.mrf.mxu0
        %2566 = vmatprep.mubr.bf16.mxu0 0
        %2567 = vmatmul.mubr.bf16.gmra.mxu0 %v815
        %v2568 = vpop.f32.mrf.mxu0
        %v2569 = vadd.f32 0.0, %v2568
        %v2570 = vpop.f32.mrf.mxu0
        %v2571 = vpop.f32.mrf.mxu0
        %v2572 = vadd.f32 0.0, %v2571
        %v2573 = vpop.f32.mrf.mxu0
        %2574 = vmatprep.mubr.bf16.mxu0 0
        %2575 = vmatmul.mubr.bf16.gmra.mxu0 %v818
        %v2576 = vpop.f32.mrf.mxu0
        %v2577 = vadd.f32 0.0, %v2576
        %v2578 = vpop.f32.mrf.mxu0
        %v2579 = vpop.f32.mrf.mxu0
        %v2580 = vadd.f32 0.0, %v2579
        %v2581 = vpop.f32.mrf.mxu0
        %2582 = vmatprep.mubr.bf16.mxu0 0
        %2583 = vmatmul.mubr.bf16.gmra.mxu0 %v821
        %v2584 = vpop.f32.mrf.mxu0
        %v2585 = vadd.f32 0.0, %v2584
        %v2586 = vpop.f32.mrf.mxu0
        %v2587 = vpop.f32.mrf.mxu0
        %v2588 = vadd.f32 0.0, %v2587
        %v2589 = vpop.f32.mrf.mxu0
        %2590 = vmatprep.mubr.bf16.mxu0 0
        %2591 = vmatmul.mubr.bf16.gmra.mxu0 %v824
        %v2592 = vpop.f32.mrf.mxu0
        %v2593 = vadd.f32 0.0, %v2592
        %v2594 = vpop.f32.mrf.mxu0
        %v2595 = vpop.f32.mrf.mxu0
        %v2596 = vadd.f32 0.0, %v2595
        %v2597 = vpop.f32.mrf.mxu0
        %2598 = vmatprep.mubr.bf16.mxu0 0
        %2599 = vmatmul.mubr.bf16.gmra.mxu0 %v827
        %v2600 = vpop.f32.mrf.mxu0
        %v2601 = vadd.f32 0.0, %v2600
        %v2602 = vpop.f32.mrf.mxu0
        %v2603 = vpop.f32.mrf.mxu0
        %v2604 = vadd.f32 0.0, %v2603
        %v2605 = vpop.f32.mrf.mxu0
        %2606 = vmatprep.mubr.bf16.mxu0 0
        %2607 = vmatmul.mubr.bf16.gmra.mxu0 %v830
        %v2608 = vpop.f32.mrf.mxu0
        %v2609 = vadd.f32 0.0, %v2608
        %v2610 = vpop.f32.mrf.mxu0
        %v2611 = vpop.f32.mrf.mxu0
        %v2612 = vadd.f32 0.0, %v2611
        %v2613 = vpop.f32.mrf.mxu0
        %2614 = vmatprep.mubr.bf16.mxu0 0
        %2615 = vmatmul.mubr.bf16.gmra.mxu0 %v833
        %v2616 = vpop.f32.mrf.mxu0
        %v2617 = vadd.f32 0.0, %v2616
        %v2618 = vpop.f32.mrf.mxu0
        %v2619 = vpop.f32.mrf.mxu0
        %v2620 = vadd.f32 0.0, %v2619
        %v2621 = vpop.f32.mrf.mxu0
        %2622 = vmatprep.mubr.bf16.mxu0 0
        %2623 = vmatmul.mubr.bf16.gmra.mxu0 %v836
        %v2624 = vpop.f32.mrf.mxu0
        %v2625 = vadd.f32 0.0, %v2624
        %v2626 = vpop.f32.mrf.mxu0
        %v2627 = vpop.f32.mrf.mxu0
        %v2628 = vadd.f32 0.0, %v2627
        %v2629 = vpop.f32.mrf.mxu0
        %2630 = vmatprep.mubr.bf16.mxu0 0
        %2631 = vmatmul.mubr.bf16.gmra.mxu0 %v839
        %v2632 = vpop.f32.mrf.mxu0
        %v2633 = vadd.f32 0.0, %v2632
        %v2634 = vpop.f32.mrf.mxu0
        %v2635 = vpop.f32.mrf.mxu0
        %v2636 = vadd.f32 0.0, %v2635
        %v2637 = vpop.f32.mrf.mxu0
        %2638 = vmatprep.mubr.bf16.mxu0 0
        %2639 = vmatmul.mubr.bf16.gmra.mxu0 %v842
        %v2640 = vpop.f32.mrf.mxu0
        %v2641 = vadd.f32 0.0, %v2640
        %v2642 = vpop.f32.mrf.mxu0
        %v2643 = vpop.f32.mrf.mxu0
        %v2644 = vadd.f32 0.0, %v2643
        %v2645 = vpop.f32.mrf.mxu0
        %2646 = vmatprep.mubr.bf16.mxu0 0
        %2647 = vmatmul.mubr.bf16.gmra.mxu0 %v845
        %v2648 = vpop.f32.mrf.mxu0
        %v2649 = vadd.f32 0.0, %v2648
        %v2650 = vpop.f32.mrf.mxu0
        %v2651 = vpop.f32.mrf.mxu0
        %v2652 = vadd.f32 0.0, %v2651
        %v2653 = vpop.f32.mrf.mxu0
        %2654 = vmatprep.mubr.bf16.mxu0 0
        %2655 = vmatmul.mubr.bf16.gmra.mxu0 %v848
        %v2656 = vpop.f32.mrf.mxu0
        %v2657 = vadd.f32 0.0, %v2656
        %v2658 = vpop.f32.mrf.mxu0
        %v2659 = vpop.f32.mrf.mxu0
        %v2660 = vadd.f32 0.0, %v2659
        %v2661 = vpop.f32.mrf.mxu0
        %2662 = vmatprep.mubr.bf16.mxu0 0
        %2663 = vmatmul.mubr.bf16.gmra.mxu0 %v851
        %v2664 = vpop.f32.mrf.mxu0
        %v2665 = vadd.f32 0.0, %v2664
        %v2666 = vpop.f32.mrf.mxu0
        %v2667 = vpop.f32.mrf.mxu0
        %v2668 = vadd.f32 0.0, %v2667
        %v2669 = vpop.f32.mrf.mxu0
        %2670 = vmatprep.mubr.bf16.mxu0 0
        %2671 = vmatmul.mubr.bf16.gmra.mxu0 %v854
        %v2672 = vpop.f32.mrf.mxu0
        %v2673 = vadd.f32 0.0, %v2672
        %v2674 = vpop.f32.mrf.mxu0
        %v2675 = vpop.f32.mrf.mxu0
        %v2676 = vadd.f32 0.0, %v2675
        %v2677 = vpop.f32.mrf.mxu0
        %2678 = vmatprep.mubr.bf16.mxu0 0
        %2679 = vmatmul.mubr.bf16.gmra.mxu0 %v857
        %v2680 = vpop.f32.mrf.mxu0
        %v2681 = vadd.f32 0.0, %v2680
        %v2682 = vpop.f32.mrf.mxu0
        %v2683 = vpop.f32.mrf.mxu0
        %v2684 = vadd.f32 0.0, %v2683
        %v2685 = vpop.f32.mrf.mxu0
        %2686 = vmatprep.mubr.bf16.mxu0 0
        %2687 = vmatmul.mubr.bf16.gmra.mxu0 %v860
        %v2688 = vpop.f32.mrf.mxu0
        %v2689 = vadd.f32 0.0, %v2688
        %v2690 = vpop.f32.mrf.mxu0
        %v2691 = vpop.f32.mrf.mxu0
        %v2692 = vadd.f32 0.0, %v2691
        %v2693 = vpop.f32.mrf.mxu0
        %2694 = vmatprep.mubr.bf16.mxu0 0
        %2695 = vmatmul.mubr.bf16.gmra.mxu0 %v863
        %v2696 = vpop.f32.mrf.mxu0
        %v2697 = vadd.f32 0.0, %v2696
        %v2698 = vpop.f32.mrf.mxu0
        %v2699 = vpop.f32.mrf.mxu0
        %v2700 = vadd.f32 0.0, %v2699
        %v2701 = vpop.f32.mrf.mxu0
        %2702 = vmatprep.mubr.bf16.mxu0 0
        %2703 = vmatmul.mubr.bf16.gmra.mxu0 %v866
        %v2704 = vpop.f32.mrf.mxu0
        %v2705 = vadd.f32 0.0, %v2704
        %v2706 = vpop.f32.mrf.mxu0
        %v2707 = vpop.f32.mrf.mxu0
        %v2708 = vadd.f32 0.0, %v2707
        %v2709 = vpop.f32.mrf.mxu0
        %2710 = vmatprep.mubr.bf16.mxu0 0
        %2711 = vmatmul.mubr.bf16.gmra.mxu0 %v869
        %v2712 = vpop.f32.mrf.mxu0
        %v2713 = vadd.f32 0.0, %v2712
        %v2714 = vpop.f32.mrf.mxu0
        %v2715 = vpop.f32.mrf.mxu0
        %v2716 = vadd.f32 0.0, %v2715
        %v2717 = vpop.f32.mrf.mxu0
        %2718 = vmatprep.mubr.bf16.mxu0 0
        %2719 = vmatmul.mubr.bf16.gmra.mxu0 %v872
        %v2720 = vpop.f32.mrf.mxu0
        %v2721 = vadd.f32 0.0, %v2720
        %v2722 = vpop.f32.mrf.mxu0
        %v2723 = vpop.f32.mrf.mxu0
        %v2724 = vadd.f32 0.0, %v2723
        %v2725 = vpop.f32.mrf.mxu0
        %2726 = vmatprep.mubr.bf16.mxu0 0
        %2727 = vmatmul.mubr.bf16.gmra.mxu0 %v875
        %v2728 = vpop.f32.mrf.mxu0
        %v2729 = vadd.f32 0.0, %v2728
        %v2730 = vpop.f32.mrf.mxu0
        %v2731 = vpop.f32.mrf.mxu0
        %v2732 = vadd.f32 0.0, %v2731
        %v2733 = vpop.f32.mrf.mxu0
        %2734 = vmatprep.mubr.bf16.mxu0 0
        %2735 = vmatmul.mubr.bf16.gmra.mxu0 %v878
        %v2736 = vpop.f32.mrf.mxu0
        %v2737 = vadd.f32 0.0, %v2736
        %v2738 = vpop.f32.mrf.mxu0
        %v2739 = vpop.f32.mrf.mxu0
        %v2740 = vadd.f32 0.0, %v2739
        %v2741 = vpop.f32.mrf.mxu0
        %2742 = vmatprep.mubr.bf16.mxu0 0
        %2743 = vmatmul.mubr.bf16.gmra.mxu0 %v881
        %v2744 = vpop.f32.mrf.mxu0
        %v2745 = vadd.f32 0.0, %v2744
        %v2746 = vpop.f32.mrf.mxu0
        %v2747 = vpop.f32.mrf.mxu0
        %v2748 = vadd.f32 0.0, %v2747
        %v2749 = vpop.f32.mrf.mxu0
        %2750 = vmatprep.mubr.bf16.mxu0 0
        %2751 = vmatmul.mubr.bf16.gmra.mxu0 %v884
        %v2752 = vpop.f32.mrf.mxu0
        %v2753 = vadd.f32 0.0, %v2752
        %v2754 = vpop.f32.mrf.mxu0
        %v2755 = vpop.f32.mrf.mxu0
        %v2756 = vadd.f32 0.0, %v2755
        %v2757 = vpop.f32.mrf.mxu0
        %2758 = vmatprep.mubr.bf16.mxu0 0
        %2759 = vmatmul.mubr.bf16.gmra.mxu0 %v887
        %v2760 = vpop.f32.mrf.mxu0
        %v2761 = vadd.f32 0.0, %v2760
        %v2762 = vpop.f32.mrf.mxu0
        %v2763 = vpop.f32.mrf.mxu0
        %v2764 = vadd.f32 0.0, %v2763
        %v2765 = vpop.f32.mrf.mxu0
        %2766 = vmatprep.mubr.bf16.mxu0 0
        %2767 = vmatmul.mubr.bf16.gmra.mxu0 %v890
        %v2768 = vpop.f32.mrf.mxu0
        %v2769 = vadd.f32 0.0, %v2768
        %v2770 = vpop.f32.mrf.mxu0
        %v2771 = vpop.f32.mrf.mxu0
        %v2772 = vadd.f32 0.0, %v2771
        %v2773 = vpop.f32.mrf.mxu0
        %2774 = vmatprep.mubr.bf16.mxu0 0
        %2775 = vmatmul.mubr.bf16.gmra.mxu0 %v893
        %v2776 = vpop.f32.mrf.mxu0
        %v2777 = vadd.f32 0.0, %v2776
        %v2778 = vpop.f32.mrf.mxu0
        %v2779 = vpop.f32.mrf.mxu0
        %v2780 = vadd.f32 0.0, %v2779
        %v2781 = vpop.f32.mrf.mxu0
        %2782 = vmatprep.mubr.bf16.mxu0 0
        %2783 = vmatmul.mubr.bf16.gmra.mxu0 %v896
        %v2784 = vpop.f32.mrf.mxu0
        %v2785 = vadd.f32 0.0, %v2784
        %v2786 = vpop.f32.mrf.mxu0
        %v2787 = vpop.f32.mrf.mxu0
        %v2788 = vadd.f32 0.0, %v2787
        %v2789 = vpop.f32.mrf.mxu0
        %2790 = vmatprep.mubr.bf16.mxu0 0
        %2791 = vmatmul.mubr.bf16.gmra.mxu0 %v899
        %v2792 = vpop.f32.mrf.mxu0
        %v2793 = vadd.f32 0.0, %v2792
        %v2794 = vpop.f32.mrf.mxu0
        %v2795 = vpop.f32.mrf.mxu0
        %v2796 = vadd.f32 0.0, %v2795
        %v2797 = vpop.f32.mrf.mxu0
        %2798 = vmatprep.mubr.bf16.mxu0 0
        %2799 = vmatmul.mubr.bf16.gmra.mxu0 %v902
        %v2800 = vpop.f32.mrf.mxu0
        %v2801 = vadd.f32 0.0, %v2800
        %v2802 = vpop.f32.mrf.mxu0
        %v2803 = vpop.f32.mrf.mxu0
        %v2804 = vadd.f32 0.0, %v2803
        %v2805 = vpop.f32.mrf.mxu0
        %2806 = vmatprep.mubr.bf16.mxu0 0
        %2807 = vmatmul.mubr.bf16.gmra.mxu0 %v905
        %v2808 = vpop.f32.mrf.mxu0
        %v2809 = vadd.f32 0.0, %v2808
        %v2810 = vpop.f32.mrf.mxu0
        %v2811 = vpop.f32.mrf.mxu0
        %v2812 = vadd.f32 0.0, %v2811
        %v2813 = vpop.f32.mrf.mxu0
        %2814 = vmatprep.mubr.bf16.mxu0 0
        %2815 = vmatmul.mubr.bf16.gmra.mxu0 %v908
        %v2816 = vpop.f32.mrf.mxu0
        %v2817 = vadd.f32 0.0, %v2816
        %v2818 = vpop.f32.mrf.mxu0
        %v2819 = vpop.f32.mrf.mxu0
        %v2820 = vadd.f32 0.0, %v2819
        %v2821 = vpop.f32.mrf.mxu0
        %2822 = vmatprep.mubr.bf16.mxu0 0
        %2823 = vmatmul.mubr.bf16.gmra.mxu0 %v911
        %v2824 = vpop.f32.mrf.mxu0
        %v2825 = vadd.f32 0.0, %v2824
        %v2826 = vpop.f32.mrf.mxu0
        %v2827 = vpop.f32.mrf.mxu0
        %v2828 = vadd.f32 0.0, %v2827
        %v2829 = vpop.f32.mrf.mxu0
        %2830 = vmatprep.mubr.bf16.mxu0 0
        %2831 = vmatmul.mubr.bf16.gmra.mxu0 %v914
        %v2832 = vpop.f32.mrf.mxu0
        %v2833 = vadd.f32 0.0, %v2832
        %v2834 = vpop.f32.mrf.mxu0
        %v2835 = vpop.f32.mrf.mxu0
        %v2836 = vadd.f32 0.0, %v2835
        %v2837 = vpop.f32.mrf.mxu0
        %2838 = vdwg.mxu0
        %v2839 = vrot.slane %v2329, 2
        %v2840 = vrot.slane %v2332, 2
        %v2841 = vrot.slane %v2337, 2
        %v2842 = vrot.slane %v2340, 2
        %v2843 = vrot.slane %v2345, 2
        %v2844 = vrot.slane %v2348, 2
        %v2845 = vrot.slane %v2353, 2
        %v2846 = vrot.slane %v2356, 2
        %v2847 = vrot.slane %v2361, 2
        %v2848 = vrot.slane %v2364, 2
        %v2849 = vrot.slane %v2369, 2
        %v2850 = vrot.slane %v2372, 2
        %v2851 = vrot.slane %v2377, 2
        %v2852 = vrot.slane %v2380, 2
        %v2853 = vrot.slane %v2385, 2
        %v2854 = vrot.slane %v2388, 2
        %v2855 = vrot.slane %v2393, 2
        %v2856 = vrot.slane %v2396, 2
        %v2857 = vrot.slane %v2401, 2
        %v2858 = vrot.slane %v2404, 2
        %v2859 = vrot.slane %v2409, 2
        %v2860 = vrot.slane %v2412, 2
        %v2861 = vrot.slane %v2417, 2
        %v2862 = vrot.slane %v2420, 2
        %v2863 = vrot.slane %v2425, 2
        %v2864 = vrot.slane %v2428, 2
        %v2865 = vrot.slane %v2433, 2
        %v2866 = vrot.slane %v2436, 2
        %v2867 = vrot.slane %v2441, 2
        %v2868 = vrot.slane %v2444, 2
        %v2869 = vrot.slane %v2449, 2
        %v2870 = vrot.slane %v2452, 2
        %v2871 = vrot.slane %v2457, 2
        %v2872 = vrot.slane %v2460, 2
        %v2873 = vrot.slane %v2465, 2
        %v2874 = vrot.slane %v2468, 2
        %v2875 = vrot.slane %v2473, 2
        %v2876 = vrot.slane %v2476, 2
        %v2877 = vrot.slane %v2481, 2
        %v2878 = vrot.slane %v2484, 2
        %v2879 = vrot.slane %v2489, 2
        %v2880 = vrot.slane %v2492, 2
        %v2881 = vrot.slane %v2497, 2
        %v2882 = vrot.slane %v2500, 2
        %v2883 = vrot.slane %v2505, 2
        %v2884 = vrot.slane %v2508, 2
        %v2885 = vrot.slane %v2513, 2
        %v2886 = vrot.slane %v2516, 2
        %v2887 = vrot.slane %v2521, 2
        %v2888 = vrot.slane %v2524, 2
        %v2889 = vrot.slane %v2529, 2
        %v2890 = vrot.slane %v2532, 2
        %v2891 = vrot.slane %v2537, 2
        %v2892 = vrot.slane %v2540, 2
        %v2893 = vrot.slane %v2545, 2
        %v2894 = vrot.slane %v2548, 2
        %v2895 = vrot.slane %v2553, 2
        %v2896 = vrot.slane %v2556, 2
        %v2897 = vrot.slane %v2561, 2
        %v2898 = vrot.slane %v2564, 2
        %v2899 = vrot.slane %v2569, 2
        %v2900 = vrot.slane %v2572, 2
        %v2901 = vrot.slane %v2577, 2
        %v2902 = vrot.slane %v2580, 2
        %v2903 = vrot.slane %v2585, 2
        %v2904 = vrot.slane %v2588, 2
        %v2905 = vrot.slane %v2593, 2
        %v2906 = vrot.slane %v2596, 2
        %v2907 = vrot.slane %v2601, 2
        %v2908 = vrot.slane %v2604, 2
        %v2909 = vrot.slane %v2609, 2
        %v2910 = vrot.slane %v2612, 2
        %v2911 = vrot.slane %v2617, 2
        %v2912 = vrot.slane %v2620, 2
        %v2913 = vrot.slane %v2625, 2
        %v2914 = vrot.slane %v2628, 2
        %v2915 = vrot.slane %v2633, 2
        %v2916 = vrot.slane %v2636, 2
        %v2917 = vrot.slane %v2641, 2
        %v2918 = vrot.slane %v2644, 2
        %v2919 = vrot.slane %v2649, 2
        %v2920 = vrot.slane %v2652, 2
        %v2921 = vrot.slane %v2657, 2
        %v2922 = vrot.slane %v2660, 2
        %v2923 = vrot.slane %v2665, 2
        %v2924 = vrot.slane %v2668, 2
        %v2925 = vrot.slane %v2673, 2
        %v2926 = vrot.slane %v2676, 2
        %v2927 = vrot.slane %v2681, 2
        %v2928 = vrot.slane %v2684, 2
        %v2929 = vrot.slane %v2689, 2
        %v2930 = vrot.slane %v2692, 2
        %v2931 = vrot.slane %v2697, 2
        %v2932 = vrot.slane %v2700, 2
        %v2933 = vrot.slane %v2705, 2
        %v2934 = vrot.slane %v2708, 2
        %v2935 = vrot.slane %v2713, 2
        %v2936 = vrot.slane %v2716, 2
        %v2937 = vrot.slane %v2721, 2
        %v2938 = vrot.slane %v2724, 2
        %v2939 = vrot.slane %v2729, 2
        %v2940 = vrot.slane %v2732, 2
        %v2941 = vrot.slane %v2737, 2
        %v2942 = vrot.slane %v2740, 2
        %v2943 = vrot.slane %v2745, 2
        %v2944 = vrot.slane %v2748, 2
        %v2945 = vrot.slane %v2753, 2
        %v2946 = vrot.slane %v2756, 2
        %v2947 = vrot.slane %v2761, 2
        %v2948 = vrot.slane %v2764, 2
        %v2949 = vrot.slane %v2769, 2
        %v2950 = vrot.slane %v2772, 2
        %v2951 = vrot.slane %v2777, 2
        %v2952 = vrot.slane %v2780, 2
        %v2953 = vrot.slane %v2785, 2
        %v2954 = vrot.slane %v2788, 2
        %v2955 = vrot.slane %v2793, 2
        %v2956 = vrot.slane %v2796, 2
        %v2957 = vrot.slane %v2801, 2
        %v2958 = vrot.slane %v2804, 2
        %v2959 = vrot.slane %v2809, 2
        %v2960 = vrot.slane %v2812, 2
        %v2961 = vrot.slane %v2817, 2
        %v2962 = vrot.slane %v2820, 2
        %v2963 = vrot.slane %v2825, 2
        %v2964 = vrot.slane %v2828, 2
        %v2965 = vrot.slane %v2833, 2
        %v2966 = vrot.slane %v2836, 2
        %vm2967 = vcmp.lt.s32.totalorder %v1590, 6
        %v2968 = vsel %vm2967, %v2965, %v2966
        %v2969 = vsel %vm2967, %v2964, %v2965
        %v2970 = vsel %vm2967, %v2963, %v2964
        %v2971 = vsel %vm2967, %v2962, %v2963
        %v2972 = vsel %vm2967, %v2961, %v2962
        %v2973 = vsel %vm2967, %v2960, %v2961
        %v2974 = vsel %vm2967, %v2959, %v2960
        %v2975 = vsel %vm2967, %v2958, %v2959
        %v2976 = vsel %vm2967, %v2957, %v2958
        %v2977 = vsel %vm2967, %v2956, %v2957
        %v2978 = vsel %vm2967, %v2955, %v2956
        %v2979 = vsel %vm2967, %v2954, %v2955
        %v2980 = vsel %vm2967, %v2953, %v2954
        %v2981 = vsel %vm2967, %v2952, %v2953
        %v2982 = vsel %vm2967, %v2951, %v2952
        %v2983 = vsel %vm2967, %v2950, %v2951
        %v2984 = vsel %vm2967, %v2949, %v2950
        %v2985 = vsel %vm2967, %v2948, %v2949
        %v2986 = vsel %vm2967, %v2947, %v2948
        %v2987 = vsel %vm2967, %v2946, %v2947
        %v2988 = vsel %vm2967, %v2945, %v2946
        %v2989 = vsel %vm2967, %v2944, %v2945
        %v2990 = vsel %vm2967, %v2943, %v2944
        %v2991 = vsel %vm2967, %v2942, %v2943
        %v2992 = vsel %vm2967, %v2941, %v2942
        %v2993 = vsel %vm2967, %v2940, %v2941
        %v2994 = vsel %vm2967, %v2939, %v2940
        %v2995 = vsel %vm2967, %v2938, %v2939
        %v2996 = vsel %vm2967, %v2937, %v2938
        %v2997 = vsel %vm2967, %v2936, %v2937
        %v2998 = vsel %vm2967, %v2935, %v2936
        %v2999 = vsel %vm2967, %v2934, %v2935
        %v3000 = vsel %vm2967, %v2933, %v2934
        %v3001 = vsel %vm2967, %v2932, %v2933
        %v3002 = vsel %vm2967, %v2931, %v2932
        %v3003 = vsel %vm2967, %v2930, %v2931
        %v3004 = vsel %vm2967, %v2929, %v2930
        %v3005 = vsel %vm2967, %v2928, %v2929
        %v3006 = vsel %vm2967, %v2927, %v2928
        %v3007 = vsel %vm2967, %v2926, %v2927
        %v3008 = vsel %vm2967, %v2925, %v2926
        %v3009 = vsel %vm2967, %v2924, %v2925
        %v3010 = vsel %vm2967, %v2923, %v2924
        %v3011 = vsel %vm2967, %v2922, %v2923
        %v3012 = vsel %vm2967, %v2921, %v2922
        %v3013 = vsel %vm2967, %v2920, %v2921
        %v3014 = vsel %vm2967, %v2919, %v2920
        %v3015 = vsel %vm2967, %v2918, %v2919
        %v3016 = vsel %vm2967, %v2917, %v2918
        %v3017 = vsel %vm2967, %v2916, %v2917
        %v3018 = vsel %vm2967, %v2915, %v2916
        %v3019 = vsel %vm2967, %v2914, %v2915
        %v3020 = vsel %vm2967, %v2913, %v2914
        %v3021 = vsel %vm2967, %v2912, %v2913
        %v3022 = vsel %vm2967, %v2911, %v2912
        %v3023 = vsel %vm2967, %v2910, %v2911
        %v3024 = vsel %vm2967, %v2909, %v2910
        %v3025 = vsel %vm2967, %v2908, %v2909
        %v3026 = vsel %vm2967, %v2907, %v2908
        %v3027 = vsel %vm2967, %v2906, %v2907
        %v3028 = vsel %vm2967, %v2905, %v2906
        %v3029 = vsel %vm2967, %v2904, %v2905
        %v3030 = vsel %vm2967, %v2903, %v2904
        %v3031 = vsel %vm2967, %v2902, %v2903
        %v3032 = vsel %vm2967, %v2901, %v2902
        %v3033 = vsel %vm2967, %v2900, %v2901
        %v3034 = vsel %vm2967, %v2899, %v2900
        %v3035 = vsel %vm2967, %v2898, %v2899
        %v3036 = vsel %vm2967, %v2897, %v2898
        %v3037 = vsel %vm2967, %v2896, %v2897
        %v3038 = vsel %vm2967, %v2895, %v2896
        %v3039 = vsel %vm2967, %v2894, %v2895
        %v3040 = vsel %vm2967, %v2893, %v2894
        %v3041 = vsel %vm2967, %v2892, %v2893
        %v3042 = vsel %vm2967, %v2891, %v2892
        %v3043 = vsel %vm2967, %v2890, %v2891
        %v3044 = vsel %vm2967, %v2889, %v2890
        %v3045 = vsel %vm2967, %v2888, %v2889
        %v3046 = vsel %vm2967, %v2887, %v2888
        %v3047 = vsel %vm2967, %v2886, %v2887
        %v3048 = vsel %vm2967, %v2885, %v2886
        %v3049 = vsel %vm2967, %v2884, %v2885
        %v3050 = vsel %vm2967, %v2883, %v2884
        %v3051 = vsel %vm2967, %v2882, %v2883
        %v3052 = vsel %vm2967, %v2881, %v2882
        %v3053 = vsel %vm2967, %v2880, %v2881
        %v3054 = vsel %vm2967, %v2879, %v2880
        %v3055 = vsel %vm2967, %v2878, %v2879
        %v3056 = vsel %vm2967, %v2877, %v2878
        %v3057 = vsel %vm2967, %v2876, %v2877
        %v3058 = vsel %vm2967, %v2875, %v2876
        %v3059 = vsel %vm2967, %v2874, %v2875
        %v3060 = vsel %vm2967, %v2873, %v2874
        %v3061 = vsel %vm2967, %v2872, %v2873
        %v3062 = vsel %vm2967, %v2871, %v2872
        %v3063 = vsel %vm2967, %v2870, %v2871
        %v3064 = vsel %vm2967, %v2869, %v2870
        %v3065 = vsel %vm2967, %v2868, %v2869
        %v3066 = vsel %vm2967, %v2867, %v2868
        %v3067 = vsel %vm2967, %v2866, %v2867
        %v3068 = vsel %vm2967, %v2865, %v2866
        %v3069 = vsel %vm2967, %v2864, %v2865
        %v3070 = vsel %vm2967, %v2863, %v2864
        %v3071 = vsel %vm2967, %v2862, %v2863
        %v3072 = vsel %vm2967, %v2861, %v2862
        %v3073 = vsel %vm2967, %v2860, %v2861
        %v3074 = vsel %vm2967, %v2859, %v2860
        %v3075 = vsel %vm2967, %v2858, %v2859
        %v3076 = vsel %vm2967, %v2857, %v2858
        %v3077 = vsel %vm2967, %v2856, %v2857
        %v3078 = vsel %vm2967, %v2855, %v2856
        %v3079 = vsel %vm2967, %v2854, %v2855
        %v3080 = vsel %vm2967, %v2853, %v2854
        %v3081 = vsel %vm2967, %v2852, %v2853
        %v3082 = vsel %vm2967, %v2851, %v2852
        %v3083 = vsel %vm2967, %v2850, %v2851
        %v3084 = vsel %vm2967, %v2849, %v2850
        %v3085 = vsel %vm2967, %v2848, %v2849
        %v3086 = vsel %vm2967, %v2847, %v2848
        %v3087 = vsel %vm2967, %v2846, %v2847
        %v3088 = vsel %vm2967, %v2845, %v2846
        %v3089 = vsel %vm2967, %v2844, %v2845
        %v3090 = vsel %vm2967, %v2843, %v2844
        %v3091 = vsel %vm2967, %v2842, %v2843
        %v3092 = vsel %vm2967, %v2841, %v2842
        %v3093 = vsel %vm2967, %v2840, %v2841
        %v3094 = vsel %vm2967, %v2839, %v2840
        %v3095 = vsel %vm2967, %v2966, %v2839
        %v3096 = vadd.f32 %v1767, %v3094
        %v3097 = vadd.f32 %v1770, %v3093
        %v3098 = vadd.f32 %v1775, %v3092
        %v3099 = vadd.f32 %v1778, %v3091
        %v3100 = vadd.f32 %v1783, %v3090
        %v3101 = vadd.f32 %v1786, %v3089
        %v3102 = vadd.f32 %v1791, %v3088
        %v3103 = vadd.f32 %v1794, %v3087
        %v3104 = vadd.f32 %v1799, %v3086
        %v3105 = vadd.f32 %v1802, %v3085
        %v3106 = vadd.f32 %v1807, %v3084
        %v3107 = vadd.f32 %v1810, %v3083
        %v3108 = vadd.f32 %v1815, %v3082
        %v3109 = vadd.f32 %v1818, %v3081
        %v3110 = vadd.f32 %v1823, %v3080
        %v3111 = vadd.f32 %v1826, %v3079
        %v3112 = vadd.f32 %v1831, %v3078
        %v3113 = vadd.f32 %v1834, %v3077
        %v3114 = vadd.f32 %v1839, %v3076
        %v3115 = vadd.f32 %v1842, %v3075
        %v3116 = vadd.f32 %v1847, %v3074
        %v3117 = vadd.f32 %v1850, %v3073
        %v3118 = vadd.f32 %v1855, %v3072
        %v3119 = vadd.f32 %v1858, %v3071
        %v3120 = vadd.f32 %v1863, %v3070
        %v3121 = vadd.f32 %v1866, %v3069
        %v3122 = vadd.f32 %v1871, %v3068
        %v3123 = vadd.f32 %v1874, %v3067
        %v3124 = vadd.f32 %v1879, %v3066
        %v3125 = vadd.f32 %v1882, %v3065
        %v3126 = vadd.f32 %v1887, %v3064
        %v3127 = vadd.f32 %v1890, %v3063
        %v3128 = vadd.f32 %v1895, %v3062
        %v3129 = vadd.f32 %v1898, %v3061
        %v3130 = vadd.f32 %v1903, %v3060
        %v3131 = vadd.f32 %v1906, %v3059
        %v3132 = vadd.f32 %v1911, %v3058
        %v3133 = vadd.f32 %v1914, %v3057
        %v3134 = vadd.f32 %v1919, %v3056
        %v3135 = vadd.f32 %v1922, %v3055
        %v3136 = vadd.f32 %v1927, %v3054
        %v3137 = vadd.f32 %v1930, %v3053
        %v3138 = vadd.f32 %v1935, %v3052
        %v3139 = vadd.f32 %v1938, %v3051
        %v3140 = vadd.f32 %v1943, %v3050
        %v3141 = vadd.f32 %v1946, %v3049
        %v3142 = vadd.f32 %v1951, %v3048
        %v3143 = vadd.f32 %v1954, %v3047
        %v3144 = vadd.f32 %v1959, %v3046
        %v3145 = vadd.f32 %v1962, %v3045
        %v3146 = vadd.f32 %v1967, %v3044
        %v3147 = vadd.f32 %v1970, %v3043
        %v3148 = vadd.f32 %v1975, %v3042
        %v3149 = vadd.f32 %v1978, %v3041
        %v3150 = vadd.f32 %v1983, %v3040
        %v3151 = vadd.f32 %v1986, %v3039
        %v3152 = vadd.f32 %v1991, %v3038
        %v3153 = vadd.f32 %v1994, %v3037
        %v3154 = vadd.f32 %v1999, %v3036
        %v3155 = vadd.f32 %v2002, %v3035
        %v3156 = vadd.f32 %v2007, %v3034
        %v3157 = vadd.f32 %v2010, %v3033
        %v3158 = vadd.f32 %v2015, %v3032
        %v3159 = vadd.f32 %v2018, %v3031
        %v3160 = vadd.f32 %v2023, %v3030
        %v3161 = vadd.f32 %v2026, %v3029
        %v3162 = vadd.f32 %v2031, %v3028
        %v3163 = vadd.f32 %v2034, %v3027
        %v3164 = vadd.f32 %v2039, %v3026
        %v3165 = vadd.f32 %v2042, %v3025
        %v3166 = vadd.f32 %v2047, %v3024
        %v3167 = vadd.f32 %v2050, %v3023
        %v3168 = vadd.f32 %v2055, %v3022
        %v3169 = vadd.f32 %v2058, %v3021
        %v3170 = vadd.f32 %v2063, %v3020
        %v3171 = vadd.f32 %v2066, %v3019
        %v3172 = vadd.f32 %v2071, %v3018
        %v3173 = vadd.f32 %v2074, %v3017
        %v3174 = vadd.f32 %v2079, %v3016
        %v3175 = vadd.f32 %v2082, %v3015
        %v3176 = vadd.f32 %v2087, %v3014
        %v3177 = vadd.f32 %v2090, %v3013
        %v3178 = vadd.f32 %v2095, %v3012
        %v3179 = vadd.f32 %v2098, %v3011
        %v3180 = vadd.f32 %v2103, %v3010
        %v3181 = vadd.f32 %v2106, %v3009
        %v3182 = vadd.f32 %v2111, %v3008
        %v3183 = vadd.f32 %v2114, %v3007
        %v3184 = vadd.f32 %v2119, %v3006
        %v3185 = vadd.f32 %v2122, %v3005
        %v3186 = vadd.f32 %v2127, %v3004
        %v3187 = vadd.f32 %v2130, %v3003
        %v3188 = vadd.f32 %v2135, %v3002
        %v3189 = vadd.f32 %v2138, %v3001
        %v3190 = vadd.f32 %v2143, %v3000
        %v3191 = vadd.f32 %v2146, %v2999
        %v3192 = vadd.f32 %v2151, %v2998
        %v3193 = vadd.f32 %v2154, %v2997
        %v3194 = vadd.f32 %v2159, %v2996
        %v3195 = vadd.f32 %v2162, %v2995
        %v3196 = vadd.f32 %v2167, %v2994
        %v3197 = vadd.f32 %v2170, %v2993
        %v3198 = vadd.f32 %v2175, %v2992
        %v3199 = vadd.f32 %v2178, %v2991
        %v3200 = vadd.f32 %v2183, %v2990
        %v3201 = vadd.f32 %v2186, %v2989
        %v3202 = vadd.f32 %v2191, %v2988
        %v3203 = vadd.f32 %v2194, %v2987
        %v3204 = vadd.f32 %v2199, %v2986
        %v3205 = vadd.f32 %v2202, %v2985
        %v3206 = vadd.f32 %v2207, %v2984
        %v3207 = vadd.f32 %v2210, %v2983
        %v3208 = vadd.f32 %v2215, %v2982
        %v3209 = vadd.f32 %v2218, %v2981
        %v3210 = vadd.f32 %v2223, %v2980
        %v3211 = vadd.f32 %v2226, %v2979
        %v3212 = vadd.f32 %v2231, %v2978
        %v3213 = vadd.f32 %v2234, %v2977
        %v3214 = vadd.f32 %v2239, %v2976
        %v3215 = vadd.f32 %v2242, %v2975
        %v3216 = vadd.f32 %v2247, %v2974
        %v3217 = vadd.f32 %v2250, %v2973
        %v3218 = vadd.f32 %v2255, %v2972
        %v3219 = vadd.f32 %v2258, %v2971
        %v3220 = vadd.f32 %v2263, %v2970
        %v3221 = vadd.f32 %v2266, %v2969
        %v3222 = vadd.f32 %v2271, %v2968
        %v3223 = vadd.f32 %v2274, %v3095
        %s3224 = scalar_lea.vmem %s1, 48
        %v3225 = vld [vmem:[%s3224] sm:$0xf]
        %v3226 = vld [vmem:[%s3224 + $0x4] sm:$0xf]
        %v3227 = vld [vmem:[%s3224 + $0x8] sm:$0xf]
        %v3228 = vld [vmem:[%s3224 + $0xc] sm:$0xf]
        %v3233 = vunpack.c.l.b16 %v3225
        %v3234 = vunpack.c.l.b16 %v3226
        %v3235 = vunpack.c.l.b16 %v3227
        %v3236 = vunpack.c.l.b16 %v3228
        %v3237 = vpack.c.b16 %v3234, %v3233
        %v3238 = vpack.c.b16 %v3236, %v3235
        %3241 = vmatprep.subr.bf16.mxu0 0
        %3242 = vmatpush1.bf16.msra.mxu0 0
        %3243 = vmatprep.subr.bf16.mxu0 0
        %3244 = vmatpush1.bf16.msra.mxu0 0
        %3245 = vmatprep.subr.bf16.mxu0 0
        %3246 = vmatpush1.bf16.msra.mxu0 0
        %3247 = vmatprep.subr.bf16.mxu0 0
        %3248 = vmatpush1.bf16.msra.mxu0 0
        %3249 = vmatprep.subr.bf16.mxu0 0
        %3250 = vmatpush1.bf16.msra.mxu0 0
        %3251 = vmatprep.subr.bf16.mxu0 0
        %3252 = vmatpush1.bf16.msra.mxu0 0
        %3253 = vmatprep.subr.bf16.mxu0 0
        %3254 = vmatpush1.bf16.msra.mxu0 %v3238
        %3255 = vmatprep.subr.bf16.mxu0 0
        %3256 = vmatpush1.bf16.msra.mxu0 %v3237
        %3257 = vmatprep.subr.bf16.mxu0 0
        %3258 = vmatpush2.bf16.msra.mxu0 0
        %3259 = vmatprep.subr.bf16.mxu0 0
        %3260 = vmatpush2.bf16.msra.mxu0 0
        %3261 = vmatprep.subr.bf16.mxu0 0
        %3262 = vmatpush2.bf16.msra.mxu0 0
        %3263 = vmatprep.subr.bf16.mxu0 0
        %3264 = vmatpush2.bf16.msra.mxu0 0
        %3265 = vmatprep.subr.bf16.mxu0 0
        %3266 = vmatpush2.bf16.msra.mxu0 0
        %3267 = vmatprep.subr.bf16.mxu0 0
        %3268 = vmatpush2.bf16.msra.mxu0 0
        %3269 = vmatprep.subr.bf16.mxu0 0
        %3270 = vmatpush2.bf16.msra.mxu0 0
        %3271 = vmatprep.subr.bf16.mxu0 0
        %3272 = vmatpush2.bf16.msra.mxu0 0
        %3273 = vmatprep.mubr.bf16.mxu0 0
        %3274 = vmatmul.mubr.bf16.gmra.mxu0 %v725
        %v3275 = vpop.f32.mrf.mxu0
        %v3276 = vadd.f32 0.0, %v3275
        %v3277 = vpop.f32.mrf.mxu0
        %v3278 = vpop.f32.mrf.mxu0
        %v3279 = vadd.f32 0.0, %v3278
        %v3280 = vpop.f32.mrf.mxu0
        %3281 = vmatprep.mubr.bf16.mxu0 0
        %3282 = vmatmul.mubr.bf16.gmra.mxu0 %v728
        %v3283 = vpop.f32.mrf.mxu0
        %v3284 = vadd.f32 0.0, %v3283
        %v3285 = vpop.f32.mrf.mxu0
        %v3286 = vpop.f32.mrf.mxu0
        %v3287 = vadd.f32 0.0, %v3286
        %v3288 = vpop.f32.mrf.mxu0
        %3289 = vmatprep.mubr.bf16.mxu0 0
        %3290 = vmatmul.mubr.bf16.gmra.mxu0 %v731
        %v3291 = vpop.f32.mrf.mxu0
        %v3292 = vadd.f32 0.0, %v3291
        %v3293 = vpop.f32.mrf.mxu0
        %v3294 = vpop.f32.mrf.mxu0
        %v3295 = vadd.f32 0.0, %v3294
        %v3296 = vpop.f32.mrf.mxu0
        %3297 = vmatprep.mubr.bf16.mxu0 0
        %3298 = vmatmul.mubr.bf16.gmra.mxu0 %v734
        %v3299 = vpop.f32.mrf.mxu0
        %v3300 = vadd.f32 0.0, %v3299
        %v3301 = vpop.f32.mrf.mxu0
        %v3302 = vpop.f32.mrf.mxu0
        %v3303 = vadd.f32 0.0, %v3302
        %v3304 = vpop.f32.mrf.mxu0
        %3305 = vmatprep.mubr.bf16.mxu0 0
        %3306 = vmatmul.mubr.bf16.gmra.mxu0 %v737
        %v3307 = vpop.f32.mrf.mxu0
        %v3308 = vadd.f32 0.0, %v3307
        %v3309 = vpop.f32.mrf.mxu0
        %v3310 = vpop.f32.mrf.mxu0
        %v3311 = vadd.f32 0.0, %v3310
        %v3312 = vpop.f32.mrf.mxu0
        %3313 = vmatprep.mubr.bf16.mxu0 0
        %3314 = vmatmul.mubr.bf16.gmra.mxu0 %v740
        %v3315 = vpop.f32.mrf.mxu0
        %v3316 = vadd.f32 0.0, %v3315
        %v3317 = vpop.f32.mrf.mxu0
        %v3318 = vpop.f32.mrf.mxu0
        %v3319 = vadd.f32 0.0, %v3318
        %v3320 = vpop.f32.mrf.mxu0
        %3321 = vmatprep.mubr.bf16.mxu0 0
        %3322 = vmatmul.mubr.bf16.gmra.mxu0 %v743
        %v3323 = vpop.f32.mrf.mxu0
        %v3324 = vadd.f32 0.0, %v3323
        %v3325 = vpop.f32.mrf.mxu0
        %v3326 = vpop.f32.mrf.mxu0
        %v3327 = vadd.f32 0.0, %v3326
        %v3328 = vpop.f32.mrf.mxu0
        %3329 = vmatprep.mubr.bf16.mxu0 0
        %3330 = vmatmul.mubr.bf16.gmra.mxu0 %v746
        %v3331 = vpop.f32.mrf.mxu0
        %v3332 = vadd.f32 0.0, %v3331
        %v3333 = vpop.f32.mrf.mxu0
        %v3334 = vpop.f32.mrf.mxu0
        %v3335 = vadd.f32 0.0, %v3334
        %v3336 = vpop.f32.mrf.mxu0
        %3337 = vmatprep.mubr.bf16.mxu0 0
        %3338 = vmatmul.mubr.bf16.gmra.mxu0 %v749
        %v3339 = vpop.f32.mrf.mxu0
        %v3340 = vadd.f32 0.0, %v3339
        %v3341 = vpop.f32.mrf.mxu0
        %v3342 = vpop.f32.mrf.mxu0
        %v3343 = vadd.f32 0.0, %v3342
        %v3344 = vpop.f32.mrf.mxu0
        %3345 = vmatprep.mubr.bf16.mxu0 0
        %3346 = vmatmul.mubr.bf16.gmra.mxu0 %v752
        %v3347 = vpop.f32.mrf.mxu0
        %v3348 = vadd.f32 0.0, %v3347
        %v3349 = vpop.f32.mrf.mxu0
        %v3350 = vpop.f32.mrf.mxu0
        %v3351 = vadd.f32 0.0, %v3350
        %v3352 = vpop.f32.mrf.mxu0
        %3353 = vmatprep.mubr.bf16.mxu0 0
        %3354 = vmatmul.mubr.bf16.gmra.mxu0 %v755
        %v3355 = vpop.f32.mrf.mxu0
        %v3356 = vadd.f32 0.0, %v3355
        %v3357 = vpop.f32.mrf.mxu0
        %v3358 = vpop.f32.mrf.mxu0
        %v3359 = vadd.f32 0.0, %v3358
        %v3360 = vpop.f32.mrf.mxu0
        %3361 = vmatprep.mubr.bf16.mxu0 0
        %3362 = vmatmul.mubr.bf16.gmra.mxu0 %v758
        %v3363 = vpop.f32.mrf.mxu0
        %v3364 = vadd.f32 0.0, %v3363
        %v3365 = vpop.f32.mrf.mxu0
        %v3366 = vpop.f32.mrf.mxu0
        %v3367 = vadd.f32 0.0, %v3366
        %v3368 = vpop.f32.mrf.mxu0
        %3369 = vmatprep.mubr.bf16.mxu0 0
        %3370 = vmatmul.mubr.bf16.gmra.mxu0 %v761
        %v3371 = vpop.f32.mrf.mxu0
        %v3372 = vadd.f32 0.0, %v3371
        %v3373 = vpop.f32.mrf.mxu0
        %v3374 = vpop.f32.mrf.mxu0
        %v3375 = vadd.f32 0.0, %v3374
        %v3376 = vpop.f32.mrf.mxu0
        %3377 = vmatprep.mubr.bf16.mxu0 0
        %3378 = vmatmul.mubr.bf16.gmra.mxu0 %v764
        %v3379 = vpop.f32.mrf.mxu0
        %v3380 = vadd.f32 0.0, %v3379
        %v3381 = vpop.f32.mrf.mxu0
        %v3382 = vpop.f32.mrf.mxu0
        %v3383 = vadd.f32 0.0, %v3382
        %v3384 = vpop.f32.mrf.mxu0
        %3385 = vmatprep.mubr.bf16.mxu0 0
        %3386 = vmatmul.mubr.bf16.gmra.mxu0 %v767
        %v3387 = vpop.f32.mrf.mxu0
        %v3388 = vadd.f32 0.0, %v3387
        %v3389 = vpop.f32.mrf.mxu0
        %v3390 = vpop.f32.mrf.mxu0
        %v3391 = vadd.f32 0.0, %v3390
        %v3392 = vpop.f32.mrf.mxu0
        %3393 = vmatprep.mubr.bf16.mxu0 0
        %3394 = vmatmul.mubr.bf16.gmra.mxu0 %v770
        %v3395 = vpop.f32.mrf.mxu0
        %v3396 = vadd.f32 0.0, %v3395
        %v3397 = vpop.f32.mrf.mxu0
        %v3398 = vpop.f32.mrf.mxu0
        %v3399 = vadd.f32 0.0, %v3398
        %v3400 = vpop.f32.mrf.mxu0
        %3401 = vmatprep.mubr.bf16.mxu0 0
        %3402 = vmatmul.mubr.bf16.gmra.mxu0 %v773
        %v3403 = vpop.f32.mrf.mxu0
        %v3404 = vadd.f32 0.0, %v3403
        %v3405 = vpop.f32.mrf.mxu0
        %v3406 = vpop.f32.mrf.mxu0
        %v3407 = vadd.f32 0.0, %v3406
        %v3408 = vpop.f32.mrf.mxu0
        %3409 = vmatprep.mubr.bf16.mxu0 0
        %3410 = vmatmul.mubr.bf16.gmra.mxu0 %v776
        %v3411 = vpop.f32.mrf.mxu0
        %v3412 = vadd.f32 0.0, %v3411
        %v3413 = vpop.f32.mrf.mxu0
        %v3414 = vpop.f32.mrf.mxu0
        %v3415 = vadd.f32 0.0, %v3414
        %v3416 = vpop.f32.mrf.mxu0
        %3417 = vmatprep.mubr.bf16.mxu0 0
        %3418 = vmatmul.mubr.bf16.gmra.mxu0 %v779
        %v3419 = vpop.f32.mrf.mxu0
        %v3420 = vadd.f32 0.0, %v3419
        %v3421 = vpop.f32.mrf.mxu0
        %v3422 = vpop.f32.mrf.mxu0
        %v3423 = vadd.f32 0.0, %v3422
        %v3424 = vpop.f32.mrf.mxu0
        %3425 = vmatprep.mubr.bf16.mxu0 0
        %3426 = vmatmul.mubr.bf16.gmra.mxu0 %v782
        %v3427 = vpop.f32.mrf.mxu0
        %v3428 = vadd.f32 0.0, %v3427
        %v3429 = vpop.f32.mrf.mxu0
        %v3430 = vpop.f32.mrf.mxu0
        %v3431 = vadd.f32 0.0, %v3430
        %v3432 = vpop.f32.mrf.mxu0
        %3433 = vmatprep.mubr.bf16.mxu0 0
        %3434 = vmatmul.mubr.bf16.gmra.mxu0 %v785
        %v3435 = vpop.f32.mrf.mxu0
        %v3436 = vadd.f32 0.0, %v3435
        %v3437 = vpop.f32.mrf.mxu0
        %v3438 = vpop.f32.mrf.mxu0
        %v3439 = vadd.f32 0.0, %v3438
        %v3440 = vpop.f32.mrf.mxu0
        %3441 = vmatprep.mubr.bf16.mxu0 0
        %3442 = vmatmul.mubr.bf16.gmra.mxu0 %v788
        %v3443 = vpop.f32.mrf.mxu0
        %v3444 = vadd.f32 0.0, %v3443
        %v3445 = vpop.f32.mrf.mxu0
        %v3446 = vpop.f32.mrf.mxu0
        %v3447 = vadd.f32 0.0, %v3446
        %v3448 = vpop.f32.mrf.mxu0
        %3449 = vmatprep.mubr.bf16.mxu0 0
        %3450 = vmatmul.mubr.bf16.gmra.mxu0 %v791
        %v3451 = vpop.f32.mrf.mxu0
        %v3452 = vadd.f32 0.0, %v3451
        %v3453 = vpop.f32.mrf.mxu0
        %v3454 = vpop.f32.mrf.mxu0
        %v3455 = vadd.f32 0.0, %v3454
        %v3456 = vpop.f32.mrf.mxu0
        %3457 = vmatprep.mubr.bf16.mxu0 0
        %3458 = vmatmul.mubr.bf16.gmra.mxu0 %v794
        %v3459 = vpop.f32.mrf.mxu0
        %v3460 = vadd.f32 0.0, %v3459
        %v3461 = vpop.f32.mrf.mxu0
        %v3462 = vpop.f32.mrf.mxu0
        %v3463 = vadd.f32 0.0, %v3462
        %v3464 = vpop.f32.mrf.mxu0
        %3465 = vmatprep.mubr.bf16.mxu0 0
        %3466 = vmatmul.mubr.bf16.gmra.mxu0 %v797
        %v3467 = vpop.f32.mrf.mxu0
        %v3468 = vadd.f32 0.0, %v3467
        %v3469 = vpop.f32.mrf.mxu0
        %v3470 = vpop.f32.mrf.mxu0
        %v3471 = vadd.f32 0.0, %v3470
        %v3472 = vpop.f32.mrf.mxu0
        %3473 = vmatprep.mubr.bf16.mxu0 0
        %3474 = vmatmul.mubr.bf16.gmra.mxu0 %v800
        %v3475 = vpop.f32.mrf.mxu0
        %v3476 = vadd.f32 0.0, %v3475
        %v3477 = vpop.f32.mrf.mxu0
        %v3478 = vpop.f32.mrf.mxu0
        %v3479 = vadd.f32 0.0, %v3478
        %v3480 = vpop.f32.mrf.mxu0
        %3481 = vmatprep.mubr.bf16.mxu0 0
        %3482 = vmatmul.mubr.bf16.gmra.mxu0 %v803
        %v3483 = vpop.f32.mrf.mxu0
        %v3484 = vadd.f32 0.0, %v3483
        %v3485 = vpop.f32.mrf.mxu0
        %v3486 = vpop.f32.mrf.mxu0
        %v3487 = vadd.f32 0.0, %v3486
        %v3488 = vpop.f32.mrf.mxu0
        %3489 = vmatprep.mubr.bf16.mxu0 0
        %3490 = vmatmul.mubr.bf16.gmra.mxu0 %v806
        %v3491 = vpop.f32.mrf.mxu0
        %v3492 = vadd.f32 0.0, %v3491
        %v3493 = vpop.f32.mrf.mxu0
        %v3494 = vpop.f32.mrf.mxu0
        %v3495 = vadd.f32 0.0, %v3494
        %v3496 = vpop.f32.mrf.mxu0
        %3497 = vmatprep.mubr.bf16.mxu0 0
        %3498 = vmatmul.mubr.bf16.gmra.mxu0 %v809
        %v3499 = vpop.f32.mrf.mxu0
        %v3500 = vadd.f32 0.0, %v3499
        %v3501 = vpop.f32.mrf.mxu0
        %v3502 = vpop.f32.mrf.mxu0
        %v3503 = vadd.f32 0.0, %v3502
        %v3504 = vpop.f32.mrf.mxu0
        %3505 = vmatprep.mubr.bf16.mxu0 0
        %3506 = vmatmul.mubr.bf16.gmra.mxu0 %v812
        %v3507 = vpop.f32.mrf.mxu0
        %v3508 = vadd.f32 0.0, %v3507
        %v3509 = vpop.f32.mrf.mxu0
        %v3510 = vpop.f32.mrf.mxu0
        %v3511 = vadd.f32 0.0, %v3510
        %v3512 = vpop.f32.mrf.mxu0
        %3513 = vmatprep.mubr.bf16.mxu0 0
        %3514 = vmatmul.mubr.bf16.gmra.mxu0 %v815
        %v3515 = vpop.f32.mrf.mxu0
        %v3516 = vadd.f32 0.0, %v3515
        %v3517 = vpop.f32.mrf.mxu0
        %v3518 = vpop.f32.mrf.mxu0
        %v3519 = vadd.f32 0.0, %v3518
        %v3520 = vpop.f32.mrf.mxu0
        %3521 = vmatprep.mubr.bf16.mxu0 0
        %3522 = vmatmul.mubr.bf16.gmra.mxu0 %v818
        %v3523 = vpop.f32.mrf.mxu0
        %v3524 = vadd.f32 0.0, %v3523
        %v3525 = vpop.f32.mrf.mxu0
        %v3526 = vpop.f32.mrf.mxu0
        %v3527 = vadd.f32 0.0, %v3526
        %v3528 = vpop.f32.mrf.mxu0
        %3529 = vmatprep.mubr.bf16.mxu0 0
        %3530 = vmatmul.mubr.bf16.gmra.mxu0 %v821
        %v3531 = vpop.f32.mrf.mxu0
        %v3532 = vadd.f32 0.0, %v3531
        %v3533 = vpop.f32.mrf.mxu0
        %v3534 = vpop.f32.mrf.mxu0
        %v3535 = vadd.f32 0.0, %v3534
        %v3536 = vpop.f32.mrf.mxu0
        %3537 = vmatprep.mubr.bf16.mxu0 0
        %3538 = vmatmul.mubr.bf16.gmra.mxu0 %v824
        %v3539 = vpop.f32.mrf.mxu0
        %v3540 = vadd.f32 0.0, %v3539
        %v3541 = vpop.f32.mrf.mxu0
        %v3542 = vpop.f32.mrf.mxu0
        %v3543 = vadd.f32 0.0, %v3542
        %v3544 = vpop.f32.mrf.mxu0
        %3545 = vmatprep.mubr.bf16.mxu0 0
        %3546 = vmatmul.mubr.bf16.gmra.mxu0 %v827
        %v3547 = vpop.f32.mrf.mxu0
        %v3548 = vadd.f32 0.0, %v3547
        %v3549 = vpop.f32.mrf.mxu0
        %v3550 = vpop.f32.mrf.mxu0
        %v3551 = vadd.f32 0.0, %v3550
        %v3552 = vpop.f32.mrf.mxu0
        %3553 = vmatprep.mubr.bf16.mxu0 0
        %3554 = vmatmul.mubr.bf16.gmra.mxu0 %v830
        %v3555 = vpop.f32.mrf.mxu0
        %v3556 = vadd.f32 0.0, %v3555
        %v3557 = vpop.f32.mrf.mxu0
        %v3558 = vpop.f32.mrf.mxu0
        %v3559 = vadd.f32 0.0, %v3558
        %v3560 = vpop.f32.mrf.mxu0
        %3561 = vmatprep.mubr.bf16.mxu0 0
        %3562 = vmatmul.mubr.bf16.gmra.mxu0 %v833
        %v3563 = vpop.f32.mrf.mxu0
        %v3564 = vadd.f32 0.0, %v3563
        %v3565 = vpop.f32.mrf.mxu0
        %v3566 = vpop.f32.mrf.mxu0
        %v3567 = vadd.f32 0.0, %v3566
        %v3568 = vpop.f32.mrf.mxu0
        %3569 = vmatprep.mubr.bf16.mxu0 0
        %3570 = vmatmul.mubr.bf16.gmra.mxu0 %v836
        %v3571 = vpop.f32.mrf.mxu0
        %v3572 = vadd.f32 0.0, %v3571
        %v3573 = vpop.f32.mrf.mxu0
        %v3574 = vpop.f32.mrf.mxu0
        %v3575 = vadd.f32 0.0, %v3574
        %v3576 = vpop.f32.mrf.mxu0
        %3577 = vmatprep.mubr.bf16.mxu0 0
        %3578 = vmatmul.mubr.bf16.gmra.mxu0 %v839
        %v3579 = vpop.f32.mrf.mxu0
        %v3580 = vadd.f32 0.0, %v3579
        %v3581 = vpop.f32.mrf.mxu0
        %v3582 = vpop.f32.mrf.mxu0
        %v3583 = vadd.f32 0.0, %v3582
        %v3584 = vpop.f32.mrf.mxu0
        %3585 = vmatprep.mubr.bf16.mxu0 0
        %3586 = vmatmul.mubr.bf16.gmra.mxu0 %v842
        %v3587 = vpop.f32.mrf.mxu0
        %v3588 = vadd.f32 0.0, %v3587
        %v3589 = vpop.f32.mrf.mxu0
        %v3590 = vpop.f32.mrf.mxu0
        %v3591 = vadd.f32 0.0, %v3590
        %v3592 = vpop.f32.mrf.mxu0
        %3593 = vmatprep.mubr.bf16.mxu0 0
        %3594 = vmatmul.mubr.bf16.gmra.mxu0 %v845
        %v3595 = vpop.f32.mrf.mxu0
        %v3596 = vadd.f32 0.0, %v3595
        %v3597 = vpop.f32.mrf.mxu0
        %v3598 = vpop.f32.mrf.mxu0
        %v3599 = vadd.f32 0.0, %v3598
        %v3600 = vpop.f32.mrf.mxu0
        %3601 = vmatprep.mubr.bf16.mxu0 0
        %3602 = vmatmul.mubr.bf16.gmra.mxu0 %v848
        %v3603 = vpop.f32.mrf.mxu0
        %v3604 = vadd.f32 0.0, %v3603
        %v3605 = vpop.f32.mrf.mxu0
        %v3606 = vpop.f32.mrf.mxu0
        %v3607 = vadd.f32 0.0, %v3606
        %v3608 = vpop.f32.mrf.mxu0
        %3609 = vmatprep.mubr.bf16.mxu0 0
        %3610 = vmatmul.mubr.bf16.gmra.mxu0 %v851
        %v3611 = vpop.f32.mrf.mxu0
        %v3612 = vadd.f32 0.0, %v3611
        %v3613 = vpop.f32.mrf.mxu0
        %v3614 = vpop.f32.mrf.mxu0
        %v3615 = vadd.f32 0.0, %v3614
        %v3616 = vpop.f32.mrf.mxu0
        %3617 = vmatprep.mubr.bf16.mxu0 0
        %3618 = vmatmul.mubr.bf16.gmra.mxu0 %v854
        %v3619 = vpop.f32.mrf.mxu0
        %v3620 = vadd.f32 0.0, %v3619
        %v3621 = vpop.f32.mrf.mxu0
        %v3622 = vpop.f32.mrf.mxu0
        %v3623 = vadd.f32 0.0, %v3622
        %v3624 = vpop.f32.mrf.mxu0
        %3625 = vmatprep.mubr.bf16.mxu0 0
        %3626 = vmatmul.mubr.bf16.gmra.mxu0 %v857
        %v3627 = vpop.f32.mrf.mxu0
        %v3628 = vadd.f32 0.0, %v3627
        %v3629 = vpop.f32.mrf.mxu0
        %v3630 = vpop.f32.mrf.mxu0
        %v3631 = vadd.f32 0.0, %v3630
        %v3632 = vpop.f32.mrf.mxu0
        %3633 = vmatprep.mubr.bf16.mxu0 0
        %3634 = vmatmul.mubr.bf16.gmra.mxu0 %v860
        %v3635 = vpop.f32.mrf.mxu0
        %v3636 = vadd.f32 0.0, %v3635
        %v3637 = vpop.f32.mrf.mxu0
        %v3638 = vpop.f32.mrf.mxu0
        %v3639 = vadd.f32 0.0, %v3638
        %v3640 = vpop.f32.mrf.mxu0
        %3641 = vmatprep.mubr.bf16.mxu0 0
        %3642 = vmatmul.mubr.bf16.gmra.mxu0 %v863
        %v3643 = vpop.f32.mrf.mxu0
        %v3644 = vadd.f32 0.0, %v3643
        %v3645 = vpop.f32.mrf.mxu0
        %v3646 = vpop.f32.mrf.mxu0
        %v3647 = vadd.f32 0.0, %v3646
        %v3648 = vpop.f32.mrf.mxu0
        %3649 = vmatprep.mubr.bf16.mxu0 0
        %3650 = vmatmul.mubr.bf16.gmra.mxu0 %v866
        %v3651 = vpop.f32.mrf.mxu0
        %v3652 = vadd.f32 0.0, %v3651
        %v3653 = vpop.f32.mrf.mxu0
        %v3654 = vpop.f32.mrf.mxu0
        %v3655 = vadd.f32 0.0, %v3654
        %v3656 = vpop.f32.mrf.mxu0
        %3657 = vmatprep.mubr.bf16.mxu0 0
        %3658 = vmatmul.mubr.bf16.gmra.mxu0 %v869
        %v3659 = vpop.f32.mrf.mxu0
        %v3660 = vadd.f32 0.0, %v3659
        %v3661 = vpop.f32.mrf.mxu0
        %v3662 = vpop.f32.mrf.mxu0
        %v3663 = vadd.f32 0.0, %v3662
        %v3664 = vpop.f32.mrf.mxu0
        %3665 = vmatprep.mubr.bf16.mxu0 0
        %3666 = vmatmul.mubr.bf16.gmra.mxu0 %v872
        %v3667 = vpop.f32.mrf.mxu0
        %v3668 = vadd.f32 0.0, %v3667
        %v3669 = vpop.f32.mrf.mxu0
        %v3670 = vpop.f32.mrf.mxu0
        %v3671 = vadd.f32 0.0, %v3670
        %v3672 = vpop.f32.mrf.mxu0
        %3673 = vmatprep.mubr.bf16.mxu0 0
        %3674 = vmatmul.mubr.bf16.gmra.mxu0 %v875
        %v3675 = vpop.f32.mrf.mxu0
        %v3676 = vadd.f32 0.0, %v3675
        %v3677 = vpop.f32.mrf.mxu0
        %v3678 = vpop.f32.mrf.mxu0
        %v3679 = vadd.f32 0.0, %v3678
        %v3680 = vpop.f32.mrf.mxu0
        %3681 = vmatprep.mubr.bf16.mxu0 0
        %3682 = vmatmul.mubr.bf16.gmra.mxu0 %v878
        %v3683 = vpop.f32.mrf.mxu0
        %v3684 = vadd.f32 0.0, %v3683
        %v3685 = vpop.f32.mrf.mxu0
        %v3686 = vpop.f32.mrf.mxu0
        %v3687 = vadd.f32 0.0, %v3686
        %v3688 = vpop.f32.mrf.mxu0
        %3689 = vmatprep.mubr.bf16.mxu0 0
        %3690 = vmatmul.mubr.bf16.gmra.mxu0 %v881
        %v3691 = vpop.f32.mrf.mxu0
        %v3692 = vadd.f32 0.0, %v3691
        %v3693 = vpop.f32.mrf.mxu0
        %v3694 = vpop.f32.mrf.mxu0
        %v3695 = vadd.f32 0.0, %v3694
        %v3696 = vpop.f32.mrf.mxu0
        %3697 = vmatprep.mubr.bf16.mxu0 0
        %3698 = vmatmul.mubr.bf16.gmra.mxu0 %v884
        %v3699 = vpop.f32.mrf.mxu0
        %v3700 = vadd.f32 0.0, %v3699
        %v3701 = vpop.f32.mrf.mxu0
        %v3702 = vpop.f32.mrf.mxu0
        %v3703 = vadd.f32 0.0, %v3702
        %v3704 = vpop.f32.mrf.mxu0
        %3705 = vmatprep.mubr.bf16.mxu0 0
        %3706 = vmatmul.mubr.bf16.gmra.mxu0 %v887
        %v3707 = vpop.f32.mrf.mxu0
        %v3708 = vadd.f32 0.0, %v3707
        %v3709 = vpop.f32.mrf.mxu0
        %v3710 = vpop.f32.mrf.mxu0
        %v3711 = vadd.f32 0.0, %v3710
        %v3712 = vpop.f32.mrf.mxu0
        %3713 = vmatprep.mubr.bf16.mxu0 0
        %3714 = vmatmul.mubr.bf16.gmra.mxu0 %v890
        %v3715 = vpop.f32.mrf.mxu0
        %v3716 = vadd.f32 0.0, %v3715
        %v3717 = vpop.f32.mrf.mxu0
        %v3718 = vpop.f32.mrf.mxu0
        %v3719 = vadd.f32 0.0, %v3718
        %v3720 = vpop.f32.mrf.mxu0
        %3721 = vmatprep.mubr.bf16.mxu0 0
        %3722 = vmatmul.mubr.bf16.gmra.mxu0 %v893
        %v3723 = vpop.f32.mrf.mxu0
        %v3724 = vadd.f32 0.0, %v3723
        %v3725 = vpop.f32.mrf.mxu0
        %v3726 = vpop.f32.mrf.mxu0
        %v3727 = vadd.f32 0.0, %v3726
        %v3728 = vpop.f32.mrf.mxu0
        %3729 = vmatprep.mubr.bf16.mxu0 0
        %3730 = vmatmul.mubr.bf16.gmra.mxu0 %v896
        %v3731 = vpop.f32.mrf.mxu0
        %v3732 = vadd.f32 0.0, %v3731
        %v3733 = vpop.f32.mrf.mxu0
        %v3734 = vpop.f32.mrf.mxu0
        %v3735 = vadd.f32 0.0, %v3734
        %v3736 = vpop.f32.mrf.mxu0
        %3737 = vmatprep.mubr.bf16.mxu0 0
        %3738 = vmatmul.mubr.bf16.gmra.mxu0 %v899
        %v3739 = vpop.f32.mrf.mxu0
        %v3740 = vadd.f32 0.0, %v3739
        %v3741 = vpop.f32.mrf.mxu0
        %v3742 = vpop.f32.mrf.mxu0
        %v3743 = vadd.f32 0.0, %v3742
        %v3744 = vpop.f32.mrf.mxu0
        %3745 = vmatprep.mubr.bf16.mxu0 0
        %3746 = vmatmul.mubr.bf16.gmra.mxu0 %v902
        %v3747 = vpop.f32.mrf.mxu0
        %v3748 = vadd.f32 0.0, %v3747
        %v3749 = vpop.f32.mrf.mxu0
        %v3750 = vpop.f32.mrf.mxu0
        %v3751 = vadd.f32 0.0, %v3750
        %v3752 = vpop.f32.mrf.mxu0
        %3753 = vmatprep.mubr.bf16.mxu0 0
        %3754 = vmatmul.mubr.bf16.gmra.mxu0 %v905
        %v3755 = vpop.f32.mrf.mxu0
        %v3756 = vadd.f32 0.0, %v3755
        %v3757 = vpop.f32.mrf.mxu0
        %v3758 = vpop.f32.mrf.mxu0
        %v3759 = vadd.f32 0.0, %v3758
        %v3760 = vpop.f32.mrf.mxu0
        %3761 = vmatprep.mubr.bf16.mxu0 0
        %3762 = vmatmul.mubr.bf16.gmra.mxu0 %v908
        %v3763 = vpop.f32.mrf.mxu0
        %v3764 = vadd.f32 0.0, %v3763
        %v3765 = vpop.f32.mrf.mxu0
        %v3766 = vpop.f32.mrf.mxu0
        %v3767 = vadd.f32 0.0, %v3766
        %v3768 = vpop.f32.mrf.mxu0
        %3769 = vmatprep.mubr.bf16.mxu0 0
        %3770 = vmatmul.mubr.bf16.gmra.mxu0 %v911
        %v3771 = vpop.f32.mrf.mxu0
        %v3772 = vadd.f32 0.0, %v3771
        %v3773 = vpop.f32.mrf.mxu0
        %v3774 = vpop.f32.mrf.mxu0
        %v3775 = vadd.f32 0.0, %v3774
        %v3776 = vpop.f32.mrf.mxu0
        %3777 = vmatprep.mubr.bf16.mxu0 0
        %3778 = vmatmul.mubr.bf16.gmra.mxu0 %v914
        %v3779 = vpop.f32.mrf.mxu0
        %v3780 = vadd.f32 0.0, %v3779
        %v3781 = vpop.f32.mrf.mxu0
        %v3782 = vpop.f32.mrf.mxu0
        %v3783 = vadd.f32 0.0, %v3782
        %v3784 = vpop.f32.mrf.mxu0
        %3785 = vdwg.mxu0
        %v3786 = vrot.slane %v3276, 3
        %v3787 = vrot.slane %v3279, 3
        %v3788 = vrot.slane %v3284, 3
        %v3789 = vrot.slane %v3287, 3
        %v3790 = vrot.slane %v3292, 3
        %v3791 = vrot.slane %v3295, 3
        %v3792 = vrot.slane %v3300, 3
        %v3793 = vrot.slane %v3303, 3
        %v3794 = vrot.slane %v3308, 3
        %v3795 = vrot.slane %v3311, 3
        %v3796 = vrot.slane %v3316, 3
        %v3797 = vrot.slane %v3319, 3
        %v3798 = vrot.slane %v3324, 3
        %v3799 = vrot.slane %v3327, 3
        %v3800 = vrot.slane %v3332, 3
        %v3801 = vrot.slane %v3335, 3
        %v3802 = vrot.slane %v3340, 3
        %v3803 = vrot.slane %v3343, 3
        %v3804 = vrot.slane %v3348, 3
        %v3805 = vrot.slane %v3351, 3
        %v3806 = vrot.slane %v3356, 3
        %v3807 = vrot.slane %v3359, 3
        %v3808 = vrot.slane %v3364, 3
        %v3809 = vrot.slane %v3367, 3
        %v3810 = vrot.slane %v3372, 3
        %v3811 = vrot.slane %v3375, 3
        %v3812 = vrot.slane %v3380, 3
        %v3813 = vrot.slane %v3383, 3
        %v3814 = vrot.slane %v3388, 3
        %v3815 = vrot.slane %v3391, 3
        %v3816 = vrot.slane %v3396, 3
        %v3817 = vrot.slane %v3399, 3
        %v3818 = vrot.slane %v3404, 3
        %v3819 = vrot.slane %v3407, 3
        %v3820 = vrot.slane %v3412, 3
        %v3821 = vrot.slane %v3415, 3
        %v3822 = vrot.slane %v3420, 3
        %v3823 = vrot.slane %v3423, 3
        %v3824 = vrot.slane %v3428, 3
        %v3825 = vrot.slane %v3431, 3
        %v3826 = vrot.slane %v3436, 3
        %v3827 = vrot.slane %v3439, 3
        %v3828 = vrot.slane %v3444, 3
        %v3829 = vrot.slane %v3447, 3
        %v3830 = vrot.slane %v3452, 3
        %v3831 = vrot.slane %v3455, 3
        %v3832 = vrot.slane %v3460, 3
        %v3833 = vrot.slane %v3463, 3
        %v3834 = vrot.slane %v3468, 3
        %v3835 = vrot.slane %v3471, 3
        %v3836 = vrot.slane %v3476, 3
        %v3837 = vrot.slane %v3479, 3
        %v3838 = vrot.slane %v3484, 3
        %v3839 = vrot.slane %v3487, 3
        %v3840 = vrot.slane %v3492, 3
        %v3841 = vrot.slane %v3495, 3
        %v3842 = vrot.slane %v3500, 3
        %v3843 = vrot.slane %v3503, 3
        %v3844 = vrot.slane %v3508, 3
        %v3845 = vrot.slane %v3511, 3
        %v3846 = vrot.slane %v3516, 3
        %v3847 = vrot.slane %v3519, 3
        %v3848 = vrot.slane %v3524, 3
        %v3849 = vrot.slane %v3527, 3
        %v3850 = vrot.slane %v3532, 3
        %v3851 = vrot.slane %v3535, 3
        %v3852 = vrot.slane %v3540, 3
        %v3853 = vrot.slane %v3543, 3
        %v3854 = vrot.slane %v3548, 3
        %v3855 = vrot.slane %v3551, 3
        %v3856 = vrot.slane %v3556, 3
        %v3857 = vrot.slane %v3559, 3
        %v3858 = vrot.slane %v3564, 3
        %v3859 = vrot.slane %v3567, 3
        %v3860 = vrot.slane %v3572, 3
        %v3861 = vrot.slane %v3575, 3
        %v3862 = vrot.slane %v3580, 3
        %v3863 = vrot.slane %v3583, 3
        %v3864 = vrot.slane %v3588, 3
        %v3865 = vrot.slane %v3591, 3
        %v3866 = vrot.slane %v3596, 3
        %v3867 = vrot.slane %v3599, 3
        %v3868 = vrot.slane %v3604, 3
        %v3869 = vrot.slane %v3607, 3
        %v3870 = vrot.slane %v3612, 3
        %v3871 = vrot.slane %v3615, 3
        %v3872 = vrot.slane %v3620, 3
        %v3873 = vrot.slane %v3623, 3
        %v3874 = vrot.slane %v3628, 3
        %v3875 = vrot.slane %v3631, 3
        %v3876 = vrot.slane %v3636, 3
        %v3877 = vrot.slane %v3639, 3
        %v3878 = vrot.slane %v3644, 3
        %v3879 = vrot.slane %v3647, 3
        %v3880 = vrot.slane %v3652, 3
        %v3881 = vrot.slane %v3655, 3
        %v3882 = vrot.slane %v3660, 3
        %v3883 = vrot.slane %v3663, 3
        %v3884 = vrot.slane %v3668, 3
        %v3885 = vrot.slane %v3671, 3
        %v3886 = vrot.slane %v3676, 3
        %v3887 = vrot.slane %v3679, 3
        %v3888 = vrot.slane %v3684, 3
        %v3889 = vrot.slane %v3687, 3
        %v3890 = vrot.slane %v3692, 3
        %v3891 = vrot.slane %v3695, 3
        %v3892 = vrot.slane %v3700, 3
        %v3893 = vrot.slane %v3703, 3
        %v3894 = vrot.slane %v3708, 3
        %v3895 = vrot.slane %v3711, 3
        %v3896 = vrot.slane %v3716, 3
        %v3897 = vrot.slane %v3719, 3
        %v3898 = vrot.slane %v3724, 3
        %v3899 = vrot.slane %v3727, 3
        %v3900 = vrot.slane %v3732, 3
        %v3901 = vrot.slane %v3735, 3
        %v3902 = vrot.slane %v3740, 3
        %v3903 = vrot.slane %v3743, 3
        %v3904 = vrot.slane %v3748, 3
        %v3905 = vrot.slane %v3751, 3
        %v3906 = vrot.slane %v3756, 3
        %v3907 = vrot.slane %v3759, 3
        %v3908 = vrot.slane %v3764, 3
        %v3909 = vrot.slane %v3767, 3
        %v3910 = vrot.slane %v3772, 3
        %v3911 = vrot.slane %v3775, 3
        %v3912 = vrot.slane %v3780, 3
        %v3913 = vrot.slane %v3783, 3
        %vm3914 = vcmp.lt.s32.totalorder %v1590, 5
        %v3915 = vsel %vm3914, %v3912, %v3913
        %v3916 = vsel %vm3914, %v3911, %v3912
        %v3917 = vsel %vm3914, %v3910, %v3911
        %v3918 = vsel %vm3914, %v3909, %v3910
        %v3919 = vsel %vm3914, %v3908, %v3909
        %v3920 = vsel %vm3914, %v3907, %v3908
        %v3921 = vsel %vm3914, %v3906, %v3907
        %v3922 = vsel %vm3914, %v3905, %v3906
        %v3923 = vsel %vm3914, %v3904, %v3905
        %v3924 = vsel %vm3914, %v3903, %v3904
        %v3925 = vsel %vm3914, %v3902, %v3903
        %v3926 = vsel %vm3914, %v3901, %v3902
        %v3927 = vsel %vm3914, %v3900, %v3901
        %v3928 = vsel %vm3914, %v3899, %v3900
        %v3929 = vsel %vm3914, %v3898, %v3899
        %v3930 = vsel %vm3914, %v3897, %v3898
        %v3931 = vsel %vm3914, %v3896, %v3897
        %v3932 = vsel %vm3914, %v3895, %v3896
        %v3933 = vsel %vm3914, %v3894, %v3895
        %v3934 = vsel %vm3914, %v3893, %v3894
        %v3935 = vsel %vm3914, %v3892, %v3893
        %v3936 = vsel %vm3914, %v3891, %v3892
        %v3937 = vsel %vm3914, %v3890, %v3891
        %v3938 = vsel %vm3914, %v3889, %v3890
        %v3939 = vsel %vm3914, %v3888, %v3889
        %v3940 = vsel %vm3914, %v3887, %v3888
        %v3941 = vsel %vm3914, %v3886, %v3887
        %v3942 = vsel %vm3914, %v3885, %v3886
        %v3943 = vsel %vm3914, %v3884, %v3885
        %v3944 = vsel %vm3914, %v3883, %v3884
        %v3945 = vsel %vm3914, %v3882, %v3883
        %v3946 = vsel %vm3914, %v3881, %v3882
        %v3947 = vsel %vm3914, %v3880, %v3881
        %v3948 = vsel %vm3914, %v3879, %v3880
        %v3949 = vsel %vm3914, %v3878, %v3879
        %v3950 = vsel %vm3914, %v3877, %v3878
        %v3951 = vsel %vm3914, %v3876, %v3877
        %v3952 = vsel %vm3914, %v3875, %v3876
        %v3953 = vsel %vm3914, %v3874, %v3875
        %v3954 = vsel %vm3914, %v3873, %v3874
        %v3955 = vsel %vm3914, %v3872, %v3873
        %v3956 = vsel %vm3914, %v3871, %v3872
        %v3957 = vsel %vm3914, %v3870, %v3871
        %v3958 = vsel %vm3914, %v3869, %v3870
        %v3959 = vsel %vm3914, %v3868, %v3869
        %v3960 = vsel %vm3914, %v3867, %v3868
        %v3961 = vsel %vm3914, %v3866, %v3867
        %v3962 = vsel %vm3914, %v3865, %v3866
        %v3963 = vsel %vm3914, %v3864, %v3865
        %v3964 = vsel %vm3914, %v3863, %v3864
        %v3965 = vsel %vm3914, %v3862, %v3863
        %v3966 = vsel %vm3914, %v3861, %v3862
        %v3967 = vsel %vm3914, %v3860, %v3861
        %v3968 = vsel %vm3914, %v3859, %v3860
        %v3969 = vsel %vm3914, %v3858, %v3859
        %v3970 = vsel %vm3914, %v3857, %v3858
        %v3971 = vsel %vm3914, %v3856, %v3857
        %v3972 = vsel %vm3914, %v3855, %v3856
        %v3973 = vsel %vm3914, %v3854, %v3855
        %v3974 = vsel %vm3914, %v3853, %v3854
        %v3975 = vsel %vm3914, %v3852, %v3853
        %v3976 = vsel %vm3914, %v3851, %v3852
        %v3977 = vsel %vm3914, %v3850, %v3851
        %v3978 = vsel %vm3914, %v3849, %v3850
        %v3979 = vsel %vm3914, %v3848, %v3849
        %v3980 = vsel %vm3914, %v3847, %v3848
        %v3981 = vsel %vm3914, %v3846, %v3847
        %v3982 = vsel %vm3914, %v3845, %v3846
        %v3983 = vsel %vm3914, %v3844, %v3845
        %v3984 = vsel %vm3914, %v3843, %v3844
        %v3985 = vsel %vm3914, %v3842, %v3843
        %v3986 = vsel %vm3914, %v3841, %v3842
        %v3987 = vsel %vm3914, %v3840, %v3841
        %v3988 = vsel %vm3914, %v3839, %v3840
        %v3989 = vsel %vm3914, %v3838, %v3839
        %v3990 = vsel %vm3914, %v3837, %v3838
        %v3991 = vsel %vm3914, %v3836, %v3837
        %v3992 = vsel %vm3914, %v3835, %v3836
        %v3993 = vsel %vm3914, %v3834, %v3835
        %v3994 = vsel %vm3914, %v3833, %v3834
        %v3995 = vsel %vm3914, %v3832, %v3833
        %v3996 = vsel %vm3914, %v3831, %v3832
        %v3997 = vsel %vm3914, %v3830, %v3831
        %v3998 = vsel %vm3914, %v3829, %v3830
        %v3999 = vsel %vm3914, %v3828, %v3829
        %v4000 = vsel %vm3914, %v3827, %v3828
        %v4001 = vsel %vm3914, %v3826, %v3827
        %v4002 = vsel %vm3914, %v3825, %v3826
        %v4003 = vsel %vm3914, %v3824, %v3825
        %v4004 = vsel %vm3914, %v3823, %v3824
        %v4005 = vsel %vm3914, %v3822, %v3823
        %v4006 = vsel %vm3914, %v3821, %v3822
        %v4007 = vsel %vm3914, %v3820, %v3821
        %v4008 = vsel %vm3914, %v3819, %v3820
        %v4009 = vsel %vm3914, %v3818, %v3819
        %v4010 = vsel %vm3914, %v3817, %v3818
        %v4011 = vsel %vm3914, %v3816, %v3817
        %v4012 = vsel %vm3914, %v3815, %v3816
        %v4013 = vsel %vm3914, %v3814, %v3815
        %v4014 = vsel %vm3914, %v3813, %v3814
        %v4015 = vsel %vm3914, %v3812, %v3813
        %v4016 = vsel %vm3914, %v3811, %v3812
        %v4017 = vsel %vm3914, %v3810, %v3811
        %v4018 = vsel %vm3914, %v3809, %v3810
        %v4019 = vsel %vm3914, %v3808, %v3809
        %v4020 = vsel %vm3914, %v3807, %v3808
        %v4021 = vsel %vm3914, %v3806, %v3807
        %v4022 = vsel %vm3914, %v3805, %v3806
        %v4023 = vsel %vm3914, %v3804, %v3805
        %v4024 = vsel %vm3914, %v3803, %v3804
        %v4025 = vsel %vm3914, %v3802, %v3803
        %v4026 = vsel %vm3914, %v3801, %v3802
        %v4027 = vsel %vm3914, %v3800, %v3801
        %v4028 = vsel %vm3914, %v3799, %v3800
        %v4029 = vsel %vm3914, %v3798, %v3799
        %v4030 = vsel %vm3914, %v3797, %v3798
        %v4031 = vsel %vm3914, %v3796, %v3797
        %v4032 = vsel %vm3914, %v3795, %v3796
        %v4033 = vsel %vm3914, %v3794, %v3795
        %v4034 = vsel %vm3914, %v3793, %v3794
        %v4035 = vsel %vm3914, %v3792, %v3793
        %v4036 = vsel %vm3914, %v3791, %v3792
        %v4037 = vsel %vm3914, %v3790, %v3791
        %v4038 = vsel %vm3914, %v3789, %v3790
        %v4039 = vsel %vm3914, %v3788, %v3789
        %v4040 = vsel %vm3914, %v3787, %v3788
        %v4041 = vsel %vm3914, %v3786, %v3787
        %v4042 = vsel %vm3914, %v3913, %v3786
        %v4043 = vadd.f32 %v3096, %v4041
        %v4044 = vadd.f32 %v3097, %v4040
        %v4045 = vadd.f32 %v3098, %v4039
        %v4046 = vadd.f32 %v3099, %v4038
        %v4047 = vadd.f32 %v3100, %v4037
        %v4048 = vadd.f32 %v3101, %v4036
        %v4049 = vadd.f32 %v3102, %v4035
        %v4050 = vadd.f32 %v3103, %v4034
        %v4051 = vadd.f32 %v3104, %v4033
        %v4052 = vadd.f32 %v3105, %v4032
        %v4053 = vadd.f32 %v3106, %v4031
        %v4054 = vadd.f32 %v3107, %v4030
        %v4055 = vadd.f32 %v3108, %v4029
        %v4056 = vadd.f32 %v3109, %v4028
        %v4057 = vadd.f32 %v3110, %v4027
        %v4058 = vadd.f32 %v3111, %v4026
        %v4059 = vadd.f32 %v3112, %v4025
        %v4060 = vadd.f32 %v3113, %v4024
        %v4061 = vadd.f32 %v3114, %v4023
        %v4062 = vadd.f32 %v3115, %v4022
        %v4063 = vadd.f32 %v3116, %v4021
        %v4064 = vadd.f32 %v3117, %v4020
        %v4065 = vadd.f32 %v3118, %v4019
        %v4066 = vadd.f32 %v3119, %v4018
        %v4067 = vadd.f32 %v3120, %v4017
        %v4068 = vadd.f32 %v3121, %v4016
        %v4069 = vadd.f32 %v3122, %v4015
        %v4070 = vadd.f32 %v3123, %v4014
        %v4071 = vadd.f32 %v3124, %v4013
        %v4072 = vadd.f32 %v3125, %v4012
        %v4073 = vadd.f32 %v3126, %v4011
        %v4074 = vadd.f32 %v3127, %v4010
        %v4075 = vadd.f32 %v3128, %v4009
        %v4076 = vadd.f32 %v3129, %v4008
        %v4077 = vadd.f32 %v3130, %v4007
        %v4078 = vadd.f32 %v3131, %v4006
        %v4079 = vadd.f32 %v3132, %v4005
        %v4080 = vadd.f32 %v3133, %v4004
        %v4081 = vadd.f32 %v3134, %v4003
        %v4082 = vadd.f32 %v3135, %v4002
        %v4083 = vadd.f32 %v3136, %v4001
        %v4084 = vadd.f32 %v3137, %v4000
        %v4085 = vadd.f32 %v3138, %v3999
        %v4086 = vadd.f32 %v3139, %v3998
        %v4087 = vadd.f32 %v3140, %v3997
        %v4088 = vadd.f32 %v3141, %v3996
        %v4089 = vadd.f32 %v3142, %v3995
        %v4090 = vadd.f32 %v3143, %v3994
        %v4091 = vadd.f32 %v3144, %v3993
        %v4092 = vadd.f32 %v3145, %v3992
        %v4093 = vadd.f32 %v3146, %v3991
        %v4094 = vadd.f32 %v3147, %v3990
        %v4095 = vadd.f32 %v3148, %v3989
        %v4096 = vadd.f32 %v3149, %v3988
        %v4097 = vadd.f32 %v3150, %v3987
        %v4098 = vadd.f32 %v3151, %v3986
        %v4099 = vadd.f32 %v3152, %v3985
        %v4100 = vadd.f32 %v3153, %v3984
        %v4101 = vadd.f32 %v3154, %v3983
        %v4102 = vadd.f32 %v3155, %v3982
        %v4103 = vadd.f32 %v3156, %v3981
        %v4104 = vadd.f32 %v3157, %v3980
        %v4105 = vadd.f32 %v3158, %v3979
        %v4106 = vadd.f32 %v3159, %v3978
        %v4107 = vadd.f32 %v3160, %v3977
        %v4108 = vadd.f32 %v3161, %v3976
        %v4109 = vadd.f32 %v3162, %v3975
        %v4110 = vadd.f32 %v3163, %v3974
        %v4111 = vadd.f32 %v3164, %v3973
        %v4112 = vadd.f32 %v3165, %v3972
        %v4113 = vadd.f32 %v3166, %v3971
        %v4114 = vadd.f32 %v3167, %v3970
        %v4115 = vadd.f32 %v3168, %v3969
        %v4116 = vadd.f32 %v3169, %v3968
        %v4117 = vadd.f32 %v3170, %v3967
        %v4118 = vadd.f32 %v3171, %v3966
        %v4119 = vadd.f32 %v3172, %v3965
        %v4120 = vadd.f32 %v3173, %v3964
        %v4121 = vadd.f32 %v3174, %v3963
        %v4122 = vadd.f32 %v3175, %v3962
        %v4123 = vadd.f32 %v3176, %v3961
        %v4124 = vadd.f32 %v3177, %v3960
        %v4125 = vadd.f32 %v3178, %v3959
        %v4126 = vadd.f32 %v3179, %v3958
        %v4127 = vadd.f32 %v3180, %v3957
        %v4128 = vadd.f32 %v3181, %v3956
        %v4129 = vadd.f32 %v3182, %v3955
        %v4130 = vadd.f32 %v3183, %v3954
        %v4131 = vadd.f32 %v3184, %v3953
        %v4132 = vadd.f32 %v3185, %v3952
        %v4133 = vadd.f32 %v3186, %v3951
        %v4134 = vadd.f32 %v3187, %v3950
        %v4135 = vadd.f32 %v3188, %v3949
        %v4136 = vadd.f32 %v3189, %v3948
        %v4137 = vadd.f32 %v3190, %v3947
        %v4138 = vadd.f32 %v3191, %v3946
        %v4139 = vadd.f32 %v3192, %v3945
        %v4140 = vadd.f32 %v3193, %v3944
        %v4141 = vadd.f32 %v3194, %v3943
        %v4142 = vadd.f32 %v3195, %v3942
        %v4143 = vadd.f32 %v3196, %v3941
        %v4144 = vadd.f32 %v3197, %v3940
        %v4145 = vadd.f32 %v3198, %v3939
        %v4146 = vadd.f32 %v3199, %v3938
        %v4147 = vadd.f32 %v3200, %v3937
        %v4148 = vadd.f32 %v3201, %v3936
        %v4149 = vadd.f32 %v3202, %v3935
        %v4150 = vadd.f32 %v3203, %v3934
        %v4151 = vadd.f32 %v3204, %v3933
        %v4152 = vadd.f32 %v3205, %v3932
        %v4153 = vadd.f32 %v3206, %v3931
        %v4154 = vadd.f32 %v3207, %v3930
        %v4155 = vadd.f32 %v3208, %v3929
        %v4156 = vadd.f32 %v3209, %v3928
        %v4157 = vadd.f32 %v3210, %v3927
        %v4158 = vadd.f32 %v3211, %v3926
        %v4159 = vadd.f32 %v3212, %v3925
        %v4160 = vadd.f32 %v3213, %v3924
        %v4161 = vadd.f32 %v3214, %v3923
        %v4162 = vadd.f32 %v3215, %v3922
        %v4163 = vadd.f32 %v3216, %v3921
        %v4164 = vadd.f32 %v3217, %v3920
        %v4165 = vadd.f32 %v3218, %v3919
        %v4166 = vadd.f32 %v3219, %v3918
        %v4167 = vadd.f32 %v3220, %v3917
        %v4168 = vadd.f32 %v3221, %v3916
        %v4169 = vadd.f32 %v3222, %v3915
        %v4170 = vadd.f32 %v3223, %v4042
        %s4171 = scalar_lea.vmem %s1, 64
        %v4172 = vld [vmem:[%s4171] sm:$0xf]
        %v4173 = vld [vmem:[%s4171 + $0x4] sm:$0xf]
        %v4174 = vld [vmem:[%s4171 + $0x8] sm:$0xf]
        %v4175 = vld [vmem:[%s4171 + $0xc] sm:$0xf]
        %v4180 = vunpack.c.l.b16 %v4172
        %v4181 = vunpack.c.l.b16 %v4173
        %v4182 = vunpack.c.l.b16 %v4174
        %v4183 = vunpack.c.l.b16 %v4175
        %v4184 = vpack.c.b16 %v4181, %v4180
        %v4185 = vpack.c.b16 %v4183, %v4182
        %4188 = vmatprep.subr.bf16.mxu0 0
        %4189 = vmatpush1.bf16.msra.mxu0 0
        %4190 = vmatprep.subr.bf16.mxu0 0
        %4191 = vmatpush1.bf16.msra.mxu0 0
        %4192 = vmatprep.subr.bf16.mxu0 0
        %4193 = vmatpush1.bf16.msra.mxu0 0
        %4194 = vmatprep.subr.bf16.mxu0 0
        %4195 = vmatpush1.bf16.msra.mxu0 0
        %4196 = vmatprep.subr.bf16.mxu0 0
        %4197 = vmatpush1.bf16.msra.mxu0 0
        %4198 = vmatprep.subr.bf16.mxu0 0
        %4199 = vmatpush1.bf16.msra.mxu0 0
        %4200 = vmatprep.subr.bf16.mxu0 0
        %4201 = vmatpush1.bf16.msra.mxu0 %v4185
        %4202 = vmatprep.subr.bf16.mxu0 0
        %4203 = vmatpush1.bf16.msra.mxu0 %v4184
        %4204 = vmatprep.subr.bf16.mxu0 0
        %4205 = vmatpush2.bf16.msra.mxu0 0
        %4206 = vmatprep.subr.bf16.mxu0 0
        %4207 = vmatpush2.bf16.msra.mxu0 0
        %4208 = vmatprep.subr.bf16.mxu0 0
        %4209 = vmatpush2.bf16.msra.mxu0 0
        %4210 = vmatprep.subr.bf16.mxu0 0
        %4211 = vmatpush2.bf16.msra.mxu0 0
        %4212 = vmatprep.subr.bf16.mxu0 0
        %4213 = vmatpush2.bf16.msra.mxu0 0
        %4214 = vmatprep.subr.bf16.mxu0 0
        %4215 = vmatpush2.bf16.msra.mxu0 0
        %4216 = vmatprep.subr.bf16.mxu0 0
        %4217 = vmatpush2.bf16.msra.mxu0 0
        %4218 = vmatprep.subr.bf16.mxu0 0
        %4219 = vmatpush2.bf16.msra.mxu0 0
        %4220 = vmatprep.mubr.bf16.mxu0 0
        %4221 = vmatmul.mubr.bf16.gmra.mxu0 %v725
        %v4222 = vpop.f32.mrf.mxu0
        %v4223 = vadd.f32 0.0, %v4222
        %v4224 = vpop.f32.mrf.mxu0
        %v4225 = vpop.f32.mrf.mxu0
        %v4226 = vadd.f32 0.0, %v4225
        %v4227 = vpop.f32.mrf.mxu0
        %4228 = vmatprep.mubr.bf16.mxu0 0
        %4229 = vmatmul.mubr.bf16.gmra.mxu0 %v728
        %v4230 = vpop.f32.mrf.mxu0
        %v4231 = vadd.f32 0.0, %v4230
        %v4232 = vpop.f32.mrf.mxu0
        %v4233 = vpop.f32.mrf.mxu0
        %v4234 = vadd.f32 0.0, %v4233
        %v4235 = vpop.f32.mrf.mxu0
        %4236 = vmatprep.mubr.bf16.mxu0 0
        %4237 = vmatmul.mubr.bf16.gmra.mxu0 %v731
        %v4238 = vpop.f32.mrf.mxu0
        %v4239 = vadd.f32 0.0, %v4238
        %v4240 = vpop.f32.mrf.mxu0
        %v4241 = vpop.f32.mrf.mxu0
        %v4242 = vadd.f32 0.0, %v4241
        %v4243 = vpop.f32.mrf.mxu0
        %4244 = vmatprep.mubr.bf16.mxu0 0
        %4245 = vmatmul.mubr.bf16.gmra.mxu0 %v734
        %v4246 = vpop.f32.mrf.mxu0
        %v4247 = vadd.f32 0.0, %v4246
        %v4248 = vpop.f32.mrf.mxu0
        %v4249 = vpop.f32.mrf.mxu0
        %v4250 = vadd.f32 0.0, %v4249
        %v4251 = vpop.f32.mrf.mxu0
        %4252 = vmatprep.mubr.bf16.mxu0 0
        %4253 = vmatmul.mubr.bf16.gmra.mxu0 %v737
        %v4254 = vpop.f32.mrf.mxu0
        %v4255 = vadd.f32 0.0, %v4254
        %v4256 = vpop.f32.mrf.mxu0
        %v4257 = vpop.f32.mrf.mxu0
        %v4258 = vadd.f32 0.0, %v4257
        %v4259 = vpop.f32.mrf.mxu0
        %4260 = vmatprep.mubr.bf16.mxu0 0
        %4261 = vmatmul.mubr.bf16.gmra.mxu0 %v740
        %v4262 = vpop.f32.mrf.mxu0
        %v4263 = vadd.f32 0.0, %v4262
        %v4264 = vpop.f32.mrf.mxu0
        %v4265 = vpop.f32.mrf.mxu0
        %v4266 = vadd.f32 0.0, %v4265
        %v4267 = vpop.f32.mrf.mxu0
        %4268 = vmatprep.mubr.bf16.mxu0 0
        %4269 = vmatmul.mubr.bf16.gmra.mxu0 %v743
        %v4270 = vpop.f32.mrf.mxu0
        %v4271 = vadd.f32 0.0, %v4270
        %v4272 = vpop.f32.mrf.mxu0
        %v4273 = vpop.f32.mrf.mxu0
        %v4274 = vadd.f32 0.0, %v4273
        %v4275 = vpop.f32.mrf.mxu0
        %4276 = vmatprep.mubr.bf16.mxu0 0
        %4277 = vmatmul.mubr.bf16.gmra.mxu0 %v746
        %v4278 = vpop.f32.mrf.mxu0
        %v4279 = vadd.f32 0.0, %v4278
        %v4280 = vpop.f32.mrf.mxu0
        %v4281 = vpop.f32.mrf.mxu0
        %v4282 = vadd.f32 0.0, %v4281
        %v4283 = vpop.f32.mrf.mxu0
        %4284 = vmatprep.mubr.bf16.mxu0 0
        %4285 = vmatmul.mubr.bf16.gmra.mxu0 %v749
        %v4286 = vpop.f32.mrf.mxu0
        %v4287 = vadd.f32 0.0, %v4286
        %v4288 = vpop.f32.mrf.mxu0
        %v4289 = vpop.f32.mrf.mxu0
        %v4290 = vadd.f32 0.0, %v4289
        %v4291 = vpop.f32.mrf.mxu0
        %4292 = vmatprep.mubr.bf16.mxu0 0
        %4293 = vmatmul.mubr.bf16.gmra.mxu0 %v752
        %v4294 = vpop.f32.mrf.mxu0
        %v4295 = vadd.f32 0.0, %v4294
        %v4296 = vpop.f32.mrf.mxu0
        %v4297 = vpop.f32.mrf.mxu0
        %v4298 = vadd.f32 0.0, %v4297
        %v4299 = vpop.f32.mrf.mxu0
        %4300 = vmatprep.mubr.bf16.mxu0 0
        %4301 = vmatmul.mubr.bf16.gmra.mxu0 %v755
        %v4302 = vpop.f32.mrf.mxu0
        %v4303 = vadd.f32 0.0, %v4302
        %v4304 = vpop.f32.mrf.mxu0
        %v4305 = vpop.f32.mrf.mxu0
        %v4306 = vadd.f32 0.0, %v4305
        %v4307 = vpop.f32.mrf.mxu0
        %4308 = vmatprep.mubr.bf16.mxu0 0
        %4309 = vmatmul.mubr.bf16.gmra.mxu0 %v758
        %v4310 = vpop.f32.mrf.mxu0
        %v4311 = vadd.f32 0.0, %v4310
        %v4312 = vpop.f32.mrf.mxu0
        %v4313 = vpop.f32.mrf.mxu0
        %v4314 = vadd.f32 0.0, %v4313
        %v4315 = vpop.f32.mrf.mxu0
        %4316 = vmatprep.mubr.bf16.mxu0 0
        %4317 = vmatmul.mubr.bf16.gmra.mxu0 %v761
        %v4318 = vpop.f32.mrf.mxu0
        %v4319 = vadd.f32 0.0, %v4318
        %v4320 = vpop.f32.mrf.mxu0
        %v4321 = vpop.f32.mrf.mxu0
        %v4322 = vadd.f32 0.0, %v4321
        %v4323 = vpop.f32.mrf.mxu0
        %4324 = vmatprep.mubr.bf16.mxu0 0
        %4325 = vmatmul.mubr.bf16.gmra.mxu0 %v764
        %v4326 = vpop.f32.mrf.mxu0
        %v4327 = vadd.f32 0.0, %v4326
        %v4328 = vpop.f32.mrf.mxu0
        %v4329 = vpop.f32.mrf.mxu0
        %v4330 = vadd.f32 0.0, %v4329
        %v4331 = vpop.f32.mrf.mxu0
        %4332 = vmatprep.mubr.bf16.mxu0 0
        %4333 = vmatmul.mubr.bf16.gmra.mxu0 %v767
        %v4334 = vpop.f32.mrf.mxu0
        %v4335 = vadd.f32 0.0, %v4334
        %v4336 = vpop.f32.mrf.mxu0
        %v4337 = vpop.f32.mrf.mxu0
        %v4338 = vadd.f32 0.0, %v4337
        %v4339 = vpop.f32.mrf.mxu0
        %4340 = vmatprep.mubr.bf16.mxu0 0
        %4341 = vmatmul.mubr.bf16.gmra.mxu0 %v770
        %v4342 = vpop.f32.mrf.mxu0
        %v4343 = vadd.f32 0.0, %v4342
        %v4344 = vpop.f32.mrf.mxu0
        %v4345 = vpop.f32.mrf.mxu0
        %v4346 = vadd.f32 0.0, %v4345
        %v4347 = vpop.f32.mrf.mxu0
        %4348 = vmatprep.mubr.bf16.mxu0 0
        %4349 = vmatmul.mubr.bf16.gmra.mxu0 %v773
        %v4350 = vpop.f32.mrf.mxu0
        %v4351 = vadd.f32 0.0, %v4350
        %v4352 = vpop.f32.mrf.mxu0
        %v4353 = vpop.f32.mrf.mxu0
        %v4354 = vadd.f32 0.0, %v4353
        %v4355 = vpop.f32.mrf.mxu0
        %4356 = vmatprep.mubr.bf16.mxu0 0
        %4357 = vmatmul.mubr.bf16.gmra.mxu0 %v776
        %v4358 = vpop.f32.mrf.mxu0
        %v4359 = vadd.f32 0.0, %v4358
        %v4360 = vpop.f32.mrf.mxu0
        %v4361 = vpop.f32.mrf.mxu0
        %v4362 = vadd.f32 0.0, %v4361
        %v4363 = vpop.f32.mrf.mxu0
        %4364 = vmatprep.mubr.bf16.mxu0 0
        %4365 = vmatmul.mubr.bf16.gmra.mxu0 %v779
        %v4366 = vpop.f32.mrf.mxu0
        %v4367 = vadd.f32 0.0, %v4366
        %v4368 = vpop.f32.mrf.mxu0
        %v4369 = vpop.f32.mrf.mxu0
        %v4370 = vadd.f32 0.0, %v4369
        %v4371 = vpop.f32.mrf.mxu0
        %4372 = vmatprep.mubr.bf16.mxu0 0
        %4373 = vmatmul.mubr.bf16.gmra.mxu0 %v782
        %v4374 = vpop.f32.mrf.mxu0
        %v4375 = vadd.f32 0.0, %v4374
        %v4376 = vpop.f32.mrf.mxu0
        %v4377 = vpop.f32.mrf.mxu0
        %v4378 = vadd.f32 0.0, %v4377
        %v4379 = vpop.f32.mrf.mxu0
        %4380 = vmatprep.mubr.bf16.mxu0 0
        %4381 = vmatmul.mubr.bf16.gmra.mxu0 %v785
        %v4382 = vpop.f32.mrf.mxu0
        %v4383 = vadd.f32 0.0, %v4382
        %v4384 = vpop.f32.mrf.mxu0
        %v4385 = vpop.f32.mrf.mxu0
        %v4386 = vadd.f32 0.0, %v4385
        %v4387 = vpop.f32.mrf.mxu0
        %4388 = vmatprep.mubr.bf16.mxu0 0
        %4389 = vmatmul.mubr.bf16.gmra.mxu0 %v788
        %v4390 = vpop.f32.mrf.mxu0
        %v4391 = vadd.f32 0.0, %v4390
        %v4392 = vpop.f32.mrf.mxu0
        %v4393 = vpop.f32.mrf.mxu0
        %v4394 = vadd.f32 0.0, %v4393
        %v4395 = vpop.f32.mrf.mxu0
        %4396 = vmatprep.mubr.bf16.mxu0 0
        %4397 = vmatmul.mubr.bf16.gmra.mxu0 %v791
        %v4398 = vpop.f32.mrf.mxu0
        %v4399 = vadd.f32 0.0, %v4398
        %v4400 = vpop.f32.mrf.mxu0
        %v4401 = vpop.f32.mrf.mxu0
        %v4402 = vadd.f32 0.0, %v4401
        %v4403 = vpop.f32.mrf.mxu0
        %4404 = vmatprep.mubr.bf16.mxu0 0
        %4405 = vmatmul.mubr.bf16.gmra.mxu0 %v794
        %v4406 = vpop.f32.mrf.mxu0
        %v4407 = vadd.f32 0.0, %v4406
        %v4408 = vpop.f32.mrf.mxu0
        %v4409 = vpop.f32.mrf.mxu0
        %v4410 = vadd.f32 0.0, %v4409
        %v4411 = vpop.f32.mrf.mxu0
        %4412 = vmatprep.mubr.bf16.mxu0 0
        %4413 = vmatmul.mubr.bf16.gmra.mxu0 %v797
        %v4414 = vpop.f32.mrf.mxu0
        %v4415 = vadd.f32 0.0, %v4414
        %v4416 = vpop.f32.mrf.mxu0
        %v4417 = vpop.f32.mrf.mxu0
        %v4418 = vadd.f32 0.0, %v4417
        %v4419 = vpop.f32.mrf.mxu0
        %4420 = vmatprep.mubr.bf16.mxu0 0
        %4421 = vmatmul.mubr.bf16.gmra.mxu0 %v800
        %v4422 = vpop.f32.mrf.mxu0
        %v4423 = vadd.f32 0.0, %v4422
        %v4424 = vpop.f32.mrf.mxu0
        %v4425 = vpop.f32.mrf.mxu0
        %v4426 = vadd.f32 0.0, %v4425
        %v4427 = vpop.f32.mrf.mxu0
        %4428 = vmatprep.mubr.bf16.mxu0 0
        %4429 = vmatmul.mubr.bf16.gmra.mxu0 %v803
        %v4430 = vpop.f32.mrf.mxu0
        %v4431 = vadd.f32 0.0, %v4430
        %v4432 = vpop.f32.mrf.mxu0
        %v4433 = vpop.f32.mrf.mxu0
        %v4434 = vadd.f32 0.0, %v4433
        %v4435 = vpop.f32.mrf.mxu0
        %4436 = vmatprep.mubr.bf16.mxu0 0
        %4437 = vmatmul.mubr.bf16.gmra.mxu0 %v806
        %v4438 = vpop.f32.mrf.mxu0
        %v4439 = vadd.f32 0.0, %v4438
        %v4440 = vpop.f32.mrf.mxu0
        %v4441 = vpop.f32.mrf.mxu0
        %v4442 = vadd.f32 0.0, %v4441
        %v4443 = vpop.f32.mrf.mxu0
        %4444 = vmatprep.mubr.bf16.mxu0 0
        %4445 = vmatmul.mubr.bf16.gmra.mxu0 %v809
        %v4446 = vpop.f32.mrf.mxu0
        %v4447 = vadd.f32 0.0, %v4446
        %v4448 = vpop.f32.mrf.mxu0
        %v4449 = vpop.f32.mrf.mxu0
        %v4450 = vadd.f32 0.0, %v4449
        %v4451 = vpop.f32.mrf.mxu0
        %4452 = vmatprep.mubr.bf16.mxu0 0
        %4453 = vmatmul.mubr.bf16.gmra.mxu0 %v812
        %v4454 = vpop.f32.mrf.mxu0
        %v4455 = vadd.f32 0.0, %v4454
        %v4456 = vpop.f32.mrf.mxu0
        %v4457 = vpop.f32.mrf.mxu0
        %v4458 = vadd.f32 0.0, %v4457
        %v4459 = vpop.f32.mrf.mxu0
        %4460 = vmatprep.mubr.bf16.mxu0 0
        %4461 = vmatmul.mubr.bf16.gmra.mxu0 %v815
        %v4462 = vpop.f32.mrf.mxu0
        %v4463 = vadd.f32 0.0, %v4462
        %v4464 = vpop.f32.mrf.mxu0
        %v4465 = vpop.f32.mrf.mxu0
        %v4466 = vadd.f32 0.0, %v4465
        %v4467 = vpop.f32.mrf.mxu0
        %4468 = vmatprep.mubr.bf16.mxu0 0
        %4469 = vmatmul.mubr.bf16.gmra.mxu0 %v818
        %v4470 = vpop.f32.mrf.mxu0
        %v4471 = vadd.f32 0.0, %v4470
        %v4472 = vpop.f32.mrf.mxu0
        %v4473 = vpop.f32.mrf.mxu0
        %v4474 = vadd.f32 0.0, %v4473
        %v4475 = vpop.f32.mrf.mxu0
        %4476 = vmatprep.mubr.bf16.mxu0 0
        %4477 = vmatmul.mubr.bf16.gmra.mxu0 %v821
        %v4478 = vpop.f32.mrf.mxu0
        %v4479 = vadd.f32 0.0, %v4478
        %v4480 = vpop.f32.mrf.mxu0
        %v4481 = vpop.f32.mrf.mxu0
        %v4482 = vadd.f32 0.0, %v4481
        %v4483 = vpop.f32.mrf.mxu0
        %4484 = vmatprep.mubr.bf16.mxu0 0
        %4485 = vmatmul.mubr.bf16.gmra.mxu0 %v824
        %v4486 = vpop.f32.mrf.mxu0
        %v4487 = vadd.f32 0.0, %v4486
        %v4488 = vpop.f32.mrf.mxu0
        %v4489 = vpop.f32.mrf.mxu0
        %v4490 = vadd.f32 0.0, %v4489
        %v4491 = vpop.f32.mrf.mxu0
        %4492 = vmatprep.mubr.bf16.mxu0 0
        %4493 = vmatmul.mubr.bf16.gmra.mxu0 %v827
        %v4494 = vpop.f32.mrf.mxu0
        %v4495 = vadd.f32 0.0, %v4494
        %v4496 = vpop.f32.mrf.mxu0
        %v4497 = vpop.f32.mrf.mxu0
        %v4498 = vadd.f32 0.0, %v4497
        %v4499 = vpop.f32.mrf.mxu0
        %4500 = vmatprep.mubr.bf16.mxu0 0
        %4501 = vmatmul.mubr.bf16.gmra.mxu0 %v830
        %v4502 = vpop.f32.mrf.mxu0
        %v4503 = vadd.f32 0.0, %v4502
        %v4504 = vpop.f32.mrf.mxu0
        %v4505 = vpop.f32.mrf.mxu0
        %v4506 = vadd.f32 0.0, %v4505
        %v4507 = vpop.f32.mrf.mxu0
        %4508 = vmatprep.mubr.bf16.mxu0 0
        %4509 = vmatmul.mubr.bf16.gmra.mxu0 %v833
        %v4510 = vpop.f32.mrf.mxu0
        %v4511 = vadd.f32 0.0, %v4510
        %v4512 = vpop.f32.mrf.mxu0
        %v4513 = vpop.f32.mrf.mxu0
        %v4514 = vadd.f32 0.0, %v4513
        %v4515 = vpop.f32.mrf.mxu0
        %4516 = vmatprep.mubr.bf16.mxu0 0
        %4517 = vmatmul.mubr.bf16.gmra.mxu0 %v836
        %v4518 = vpop.f32.mrf.mxu0
        %v4519 = vadd.f32 0.0, %v4518
        %v4520 = vpop.f32.mrf.mxu0
        %v4521 = vpop.f32.mrf.mxu0
        %v4522 = vadd.f32 0.0, %v4521
        %v4523 = vpop.f32.mrf.mxu0
        %4524 = vmatprep.mubr.bf16.mxu0 0
        %4525 = vmatmul.mubr.bf16.gmra.mxu0 %v839
        %v4526 = vpop.f32.mrf.mxu0
        %v4527 = vadd.f32 0.0, %v4526
        %v4528 = vpop.f32.mrf.mxu0
        %v4529 = vpop.f32.mrf.mxu0
        %v4530 = vadd.f32 0.0, %v4529
        %v4531 = vpop.f32.mrf.mxu0
        %4532 = vmatprep.mubr.bf16.mxu0 0
        %4533 = vmatmul.mubr.bf16.gmra.mxu0 %v842
        %v4534 = vpop.f32.mrf.mxu0
        %v4535 = vadd.f32 0.0, %v4534
        %v4536 = vpop.f32.mrf.mxu0
        %v4537 = vpop.f32.mrf.mxu0
        %v4538 = vadd.f32 0.0, %v4537
        %v4539 = vpop.f32.mrf.mxu0
        %4540 = vmatprep.mubr.bf16.mxu0 0
        %4541 = vmatmul.mubr.bf16.gmra.mxu0 %v845
        %v4542 = vpop.f32.mrf.mxu0
        %v4543 = vadd.f32 0.0, %v4542
        %v4544 = vpop.f32.mrf.mxu0
        %v4545 = vpop.f32.mrf.mxu0
        %v4546 = vadd.f32 0.0, %v4545
        %v4547 = vpop.f32.mrf.mxu0
        %4548 = vmatprep.mubr.bf16.mxu0 0
        %4549 = vmatmul.mubr.bf16.gmra.mxu0 %v848
        %v4550 = vpop.f32.mrf.mxu0
        %v4551 = vadd.f32 0.0, %v4550
        %v4552 = vpop.f32.mrf.mxu0
        %v4553 = vpop.f32.mrf.mxu0
        %v4554 = vadd.f32 0.0, %v4553
        %v4555 = vpop.f32.mrf.mxu0
        %4556 = vmatprep.mubr.bf16.mxu0 0
        %4557 = vmatmul.mubr.bf16.gmra.mxu0 %v851
        %v4558 = vpop.f32.mrf.mxu0
        %v4559 = vadd.f32 0.0, %v4558
        %v4560 = vpop.f32.mrf.mxu0
        %v4561 = vpop.f32.mrf.mxu0
        %v4562 = vadd.f32 0.0, %v4561
        %v4563 = vpop.f32.mrf.mxu0
        %4564 = vmatprep.mubr.bf16.mxu0 0
        %4565 = vmatmul.mubr.bf16.gmra.mxu0 %v854
        %v4566 = vpop.f32.mrf.mxu0
        %v4567 = vadd.f32 0.0, %v4566
        %v4568 = vpop.f32.mrf.mxu0
        %v4569 = vpop.f32.mrf.mxu0
        %v4570 = vadd.f32 0.0, %v4569
        %v4571 = vpop.f32.mrf.mxu0
        %4572 = vmatprep.mubr.bf16.mxu0 0
        %4573 = vmatmul.mubr.bf16.gmra.mxu0 %v857
        %v4574 = vpop.f32.mrf.mxu0
        %v4575 = vadd.f32 0.0, %v4574
        %v4576 = vpop.f32.mrf.mxu0
        %v4577 = vpop.f32.mrf.mxu0
        %v4578 = vadd.f32 0.0, %v4577
        %v4579 = vpop.f32.mrf.mxu0
        %4580 = vmatprep.mubr.bf16.mxu0 0
        %4581 = vmatmul.mubr.bf16.gmra.mxu0 %v860
        %v4582 = vpop.f32.mrf.mxu0
        %v4583 = vadd.f32 0.0, %v4582
        %v4584 = vpop.f32.mrf.mxu0
        %v4585 = vpop.f32.mrf.mxu0
        %v4586 = vadd.f32 0.0, %v4585
        %v4587 = vpop.f32.mrf.mxu0
        %4588 = vmatprep.mubr.bf16.mxu0 0
        %4589 = vmatmul.mubr.bf16.gmra.mxu0 %v863
        %v4590 = vpop.f32.mrf.mxu0
        %v4591 = vadd.f32 0.0, %v4590
        %v4592 = vpop.f32.mrf.mxu0
        %v4593 = vpop.f32.mrf.mxu0
        %v4594 = vadd.f32 0.0, %v4593
        %v4595 = vpop.f32.mrf.mxu0
        %4596 = vmatprep.mubr.bf16.mxu0 0
        %4597 = vmatmul.mubr.bf16.gmra.mxu0 %v866
        %v4598 = vpop.f32.mrf.mxu0
        %v4599 = vadd.f32 0.0, %v4598
        %v4600 = vpop.f32.mrf.mxu0
        %v4601 = vpop.f32.mrf.mxu0
        %v4602 = vadd.f32 0.0, %v4601
        %v4603 = vpop.f32.mrf.mxu0
        %4604 = vmatprep.mubr.bf16.mxu0 0
        %4605 = vmatmul.mubr.bf16.gmra.mxu0 %v869
        %v4606 = vpop.f32.mrf.mxu0
        %v4607 = vadd.f32 0.0, %v4606
        %v4608 = vpop.f32.mrf.mxu0
        %v4609 = vpop.f32.mrf.mxu0
        %v4610 = vadd.f32 0.0, %v4609
        %v4611 = vpop.f32.mrf.mxu0
        %4612 = vmatprep.mubr.bf16.mxu0 0
        %4613 = vmatmul.mubr.bf16.gmra.mxu0 %v872
        %v4614 = vpop.f32.mrf.mxu0
        %v4615 = vadd.f32 0.0, %v4614
        %v4616 = vpop.f32.mrf.mxu0
        %v4617 = vpop.f32.mrf.mxu0
        %v4618 = vadd.f32 0.0, %v4617
        %v4619 = vpop.f32.mrf.mxu0
        %4620 = vmatprep.mubr.bf16.mxu0 0
        %4621 = vmatmul.mubr.bf16.gmra.mxu0 %v875
        %v4622 = vpop.f32.mrf.mxu0
        %v4623 = vadd.f32 0.0, %v4622
        %v4624 = vpop.f32.mrf.mxu0
        %v4625 = vpop.f32.mrf.mxu0
        %v4626 = vadd.f32 0.0, %v4625
        %v4627 = vpop.f32.mrf.mxu0
        %4628 = vmatprep.mubr.bf16.mxu0 0
        %4629 = vmatmul.mubr.bf16.gmra.mxu0 %v878
        %v4630 = vpop.f32.mrf.mxu0
        %v4631 = vadd.f32 0.0, %v4630
        %v4632 = vpop.f32.mrf.mxu0
        %v4633 = vpop.f32.mrf.mxu0
        %v4634 = vadd.f32 0.0, %v4633
        %v4635 = vpop.f32.mrf.mxu0
        %4636 = vmatprep.mubr.bf16.mxu0 0
        %4637 = vmatmul.mubr.bf16.gmra.mxu0 %v881
        %v4638 = vpop.f32.mrf.mxu0
        %v4639 = vadd.f32 0.0, %v4638
        %v4640 = vpop.f32.mrf.mxu0
        %v4641 = vpop.f32.mrf.mxu0
        %v4642 = vadd.f32 0.0, %v4641
        %v4643 = vpop.f32.mrf.mxu0
        %4644 = vmatprep.mubr.bf16.mxu0 0
        %4645 = vmatmul.mubr.bf16.gmra.mxu0 %v884
        %v4646 = vpop.f32.mrf.mxu0
        %v4647 = vadd.f32 0.0, %v4646
        %v4648 = vpop.f32.mrf.mxu0
        %v4649 = vpop.f32.mrf.mxu0
        %v4650 = vadd.f32 0.0, %v4649
        %v4651 = vpop.f32.mrf.mxu0
        %4652 = vmatprep.mubr.bf16.mxu0 0
        %4653 = vmatmul.mubr.bf16.gmra.mxu0 %v887
        %v4654 = vpop.f32.mrf.mxu0
        %v4655 = vadd.f32 0.0, %v4654
        %v4656 = vpop.f32.mrf.mxu0
        %v4657 = vpop.f32.mrf.mxu0
        %v4658 = vadd.f32 0.0, %v4657
        %v4659 = vpop.f32.mrf.mxu0
        %4660 = vmatprep.mubr.bf16.mxu0 0
        %4661 = vmatmul.mubr.bf16.gmra.mxu0 %v890
        %v4662 = vpop.f32.mrf.mxu0
        %v4663 = vadd.f32 0.0, %v4662
        %v4664 = vpop.f32.mrf.mxu0
        %v4665 = vpop.f32.mrf.mxu0
        %v4666 = vadd.f32 0.0, %v4665
        %v4667 = vpop.f32.mrf.mxu0
        %4668 = vmatprep.mubr.bf16.mxu0 0
        %4669 = vmatmul.mubr.bf16.gmra.mxu0 %v893
        %v4670 = vpop.f32.mrf.mxu0
        %v4671 = vadd.f32 0.0, %v4670
        %v4672 = vpop.f32.mrf.mxu0
        %v4673 = vpop.f32.mrf.mxu0
        %v4674 = vadd.f32 0.0, %v4673
        %v4675 = vpop.f32.mrf.mxu0
        %4676 = vmatprep.mubr.bf16.mxu0 0
        %4677 = vmatmul.mubr.bf16.gmra.mxu0 %v896
        %v4678 = vpop.f32.mrf.mxu0
        %v4679 = vadd.f32 0.0, %v4678
        %v4680 = vpop.f32.mrf.mxu0
        %v4681 = vpop.f32.mrf.mxu0
        %v4682 = vadd.f32 0.0, %v4681
        %v4683 = vpop.f32.mrf.mxu0
        %4684 = vmatprep.mubr.bf16.mxu0 0
        %4685 = vmatmul.mubr.bf16.gmra.mxu0 %v899
        %v4686 = vpop.f32.mrf.mxu0
        %v4687 = vadd.f32 0.0, %v4686
        %v4688 = vpop.f32.mrf.mxu0
        %v4689 = vpop.f32.mrf.mxu0
        %v4690 = vadd.f32 0.0, %v4689
        %v4691 = vpop.f32.mrf.mxu0
        %4692 = vmatprep.mubr.bf16.mxu0 0
        %4693 = vmatmul.mubr.bf16.gmra.mxu0 %v902
        %v4694 = vpop.f32.mrf.mxu0
        %v4695 = vadd.f32 0.0, %v4694
        %v4696 = vpop.f32.mrf.mxu0
        %v4697 = vpop.f32.mrf.mxu0
        %v4698 = vadd.f32 0.0, %v4697
        %v4699 = vpop.f32.mrf.mxu0
        %4700 = vmatprep.mubr.bf16.mxu0 0
        %4701 = vmatmul.mubr.bf16.gmra.mxu0 %v905
        %v4702 = vpop.f32.mrf.mxu0
        %v4703 = vadd.f32 0.0, %v4702
        %v4704 = vpop.f32.mrf.mxu0
        %v4705 = vpop.f32.mrf.mxu0
        %v4706 = vadd.f32 0.0, %v4705
        %v4707 = vpop.f32.mrf.mxu0
        %4708 = vmatprep.mubr.bf16.mxu0 0
        %4709 = vmatmul.mubr.bf16.gmra.mxu0 %v908
        %v4710 = vpop.f32.mrf.mxu0
        %v4711 = vadd.f32 0.0, %v4710
        %v4712 = vpop.f32.mrf.mxu0
        %v4713 = vpop.f32.mrf.mxu0
        %v4714 = vadd.f32 0.0, %v4713
        %v4715 = vpop.f32.mrf.mxu0
        %4716 = vmatprep.mubr.bf16.mxu0 0
        %4717 = vmatmul.mubr.bf16.gmra.mxu0 %v911
        %v4718 = vpop.f32.mrf.mxu0
        %v4719 = vadd.f32 0.0, %v4718
        %v4720 = vpop.f32.mrf.mxu0
        %v4721 = vpop.f32.mrf.mxu0
        %v4722 = vadd.f32 0.0, %v4721
        %v4723 = vpop.f32.mrf.mxu0
        %4724 = vmatprep.mubr.bf16.mxu0 0
        %4725 = vmatmul.mubr.bf16.gmra.mxu0 %v914
        %v4726 = vpop.f32.mrf.mxu0
        %v4727 = vadd.f32 0.0, %v4726
        %v4728 = vpop.f32.mrf.mxu0
        %v4729 = vpop.f32.mrf.mxu0
        %v4730 = vadd.f32 0.0, %v4729
        %v4731 = vpop.f32.mrf.mxu0
        %4732 = vdwg.mxu0
        %v4733 = vrot.slane %v4223, 4
        %v4734 = vrot.slane %v4226, 4
        %v4735 = vrot.slane %v4231, 4
        %v4736 = vrot.slane %v4234, 4
        %v4737 = vrot.slane %v4239, 4
        %v4738 = vrot.slane %v4242, 4
        %v4739 = vrot.slane %v4247, 4
        %v4740 = vrot.slane %v4250, 4
        %v4741 = vrot.slane %v4255, 4
        %v4742 = vrot.slane %v4258, 4
        %v4743 = vrot.slane %v4263, 4
        %v4744 = vrot.slane %v4266, 4
        %v4745 = vrot.slane %v4271, 4
        %v4746 = vrot.slane %v4274, 4
        %v4747 = vrot.slane %v4279, 4
        %v4748 = vrot.slane %v4282, 4
        %v4749 = vrot.slane %v4287, 4
        %v4750 = vrot.slane %v4290, 4
        %v4751 = vrot.slane %v4295, 4
        %v4752 = vrot.slane %v4298, 4
        %v4753 = vrot.slane %v4303, 4
        %v4754 = vrot.slane %v4306, 4
        %v4755 = vrot.slane %v4311, 4
        %v4756 = vrot.slane %v4314, 4
        %v4757 = vrot.slane %v4319, 4
        %v4758 = vrot.slane %v4322, 4
        %v4759 = vrot.slane %v4327, 4
        %v4760 = vrot.slane %v4330, 4
        %v4761 = vrot.slane %v4335, 4
        %v4762 = vrot.slane %v4338, 4
        %v4763 = vrot.slane %v4343, 4
        %v4764 = vrot.slane %v4346, 4
        %v4765 = vrot.slane %v4351, 4
        %v4766 = vrot.slane %v4354, 4
        %v4767 = vrot.slane %v4359, 4
        %v4768 = vrot.slane %v4362, 4
        %v4769 = vrot.slane %v4367, 4
        %v4770 = vrot.slane %v4370, 4
        %v4771 = vrot.slane %v4375, 4
        %v4772 = vrot.slane %v4378, 4
        %v4773 = vrot.slane %v4383, 4
        %v4774 = vrot.slane %v4386, 4
        %v4775 = vrot.slane %v4391, 4
        %v4776 = vrot.slane %v4394, 4
        %v4777 = vrot.slane %v4399, 4
        %v4778 = vrot.slane %v4402, 4
        %v4779 = vrot.slane %v4407, 4
        %v4780 = vrot.slane %v4410, 4
        %v4781 = vrot.slane %v4415, 4
        %v4782 = vrot.slane %v4418, 4
        %v4783 = vrot.slane %v4423, 4
        %v4784 = vrot.slane %v4426, 4
        %v4785 = vrot.slane %v4431, 4
        %v4786 = vrot.slane %v4434, 4
        %v4787 = vrot.slane %v4439, 4
        %v4788 = vrot.slane %v4442, 4
        %v4789 = vrot.slane %v4447, 4
        %v4790 = vrot.slane %v4450, 4
        %v4791 = vrot.slane %v4455, 4
        %v4792 = vrot.slane %v4458, 4
        %v4793 = vrot.slane %v4463, 4
        %v4794 = vrot.slane %v4466, 4
        %v4795 = vrot.slane %v4471, 4
        %v4796 = vrot.slane %v4474, 4
        %v4797 = vrot.slane %v4479, 4
        %v4798 = vrot.slane %v4482, 4
        %v4799 = vrot.slane %v4487, 4
        %v4800 = vrot.slane %v4490, 4
        %v4801 = vrot.slane %v4495, 4
        %v4802 = vrot.slane %v4498, 4
        %v4803 = vrot.slane %v4503, 4
        %v4804 = vrot.slane %v4506, 4
        %v4805 = vrot.slane %v4511, 4
        %v4806 = vrot.slane %v4514, 4
        %v4807 = vrot.slane %v4519, 4
        %v4808 = vrot.slane %v4522, 4
        %v4809 = vrot.slane %v4527, 4
        %v4810 = vrot.slane %v4530, 4
        %v4811 = vrot.slane %v4535, 4
        %v4812 = vrot.slane %v4538, 4
        %v4813 = vrot.slane %v4543, 4
        %v4814 = vrot.slane %v4546, 4
        %v4815 = vrot.slane %v4551, 4
        %v4816 = vrot.slane %v4554, 4
        %v4817 = vrot.slane %v4559, 4
        %v4818 = vrot.slane %v4562, 4
        %v4819 = vrot.slane %v4567, 4
        %v4820 = vrot.slane %v4570, 4
        %v4821 = vrot.slane %v4575, 4
        %v4822 = vrot.slane %v4578, 4
        %v4823 = vrot.slane %v4583, 4
        %v4824 = vrot.slane %v4586, 4
        %v4825 = vrot.slane %v4591, 4
        %v4826 = vrot.slane %v4594, 4
        %v4827 = vrot.slane %v4599, 4
        %v4828 = vrot.slane %v4602, 4
        %v4829 = vrot.slane %v4607, 4
        %v4830 = vrot.slane %v4610, 4
        %v4831 = vrot.slane %v4615, 4
        %v4832 = vrot.slane %v4618, 4
        %v4833 = vrot.slane %v4623, 4
        %v4834 = vrot.slane %v4626, 4
        %v4835 = vrot.slane %v4631, 4
        %v4836 = vrot.slane %v4634, 4
        %v4837 = vrot.slane %v4639, 4
        %v4838 = vrot.slane %v4642, 4
        %v4839 = vrot.slane %v4647, 4
        %v4840 = vrot.slane %v4650, 4
        %v4841 = vrot.slane %v4655, 4
        %v4842 = vrot.slane %v4658, 4
        %v4843 = vrot.slane %v4663, 4
        %v4844 = vrot.slane %v4666, 4
        %v4845 = vrot.slane %v4671, 4
        %v4846 = vrot.slane %v4674, 4
        %v4847 = vrot.slane %v4679, 4
        %v4848 = vrot.slane %v4682, 4
        %v4849 = vrot.slane %v4687, 4
        %v4850 = vrot.slane %v4690, 4
        %v4851 = vrot.slane %v4695, 4
        %v4852 = vrot.slane %v4698, 4
        %v4853 = vrot.slane %v4703, 4
        %v4854 = vrot.slane %v4706, 4
        %v4855 = vrot.slane %v4711, 4
        %v4856 = vrot.slane %v4714, 4
        %v4857 = vrot.slane %v4719, 4
        %v4858 = vrot.slane %v4722, 4
        %v4859 = vrot.slane %v4727, 4
        %v4860 = vrot.slane %v4730, 4
        %vm4861 = vcmp.lt.s32.totalorder %v1590, 4
        %v4862 = vsel %vm4861, %v4859, %v4860
        %v4863 = vsel %vm4861, %v4858, %v4859
        %v4864 = vsel %vm4861, %v4857, %v4858
        %v4865 = vsel %vm4861, %v4856, %v4857
        %v4866 = vsel %vm4861, %v4855, %v4856
        %v4867 = vsel %vm4861, %v4854, %v4855
        %v4868 = vsel %vm4861, %v4853, %v4854
        %v4869 = vsel %vm4861, %v4852, %v4853
        %v4870 = vsel %vm4861, %v4851, %v4852
        %v4871 = vsel %vm4861, %v4850, %v4851
        %v4872 = vsel %vm4861, %v4849, %v4850
        %v4873 = vsel %vm4861, %v4848, %v4849
        %v4874 = vsel %vm4861, %v4847, %v4848
        %v4875 = vsel %vm4861, %v4846, %v4847
        %v4876 = vsel %vm4861, %v4845, %v4846
        %v4877 = vsel %vm4861, %v4844, %v4845
        %v4878 = vsel %vm4861, %v4843, %v4844
        %v4879 = vsel %vm4861, %v4842, %v4843
        %v4880 = vsel %vm4861, %v4841, %v4842
        %v4881 = vsel %vm4861, %v4840, %v4841
        %v4882 = vsel %vm4861, %v4839, %v4840
        %v4883 = vsel %vm4861, %v4838, %v4839
        %v4884 = vsel %vm4861, %v4837, %v4838
        %v4885 = vsel %vm4861, %v4836, %v4837
        %v4886 = vsel %vm4861, %v4835, %v4836
        %v4887 = vsel %vm4861, %v4834, %v4835
        %v4888 = vsel %vm4861, %v4833, %v4834
        %v4889 = vsel %vm4861, %v4832, %v4833
        %v4890 = vsel %vm4861, %v4831, %v4832
        %v4891 = vsel %vm4861, %v4830, %v4831
        %v4892 = vsel %vm4861, %v4829, %v4830
        %v4893 = vsel %vm4861, %v4828, %v4829
        %v4894 = vsel %vm4861, %v4827, %v4828
        %v4895 = vsel %vm4861, %v4826, %v4827
        %v4896 = vsel %vm4861, %v4825, %v4826
        %v4897 = vsel %vm4861, %v4824, %v4825
        %v4898 = vsel %vm4861, %v4823, %v4824
        %v4899 = vsel %vm4861, %v4822, %v4823
        %v4900 = vsel %vm4861, %v4821, %v4822
        %v4901 = vsel %vm4861, %v4820, %v4821
        %v4902 = vsel %vm4861, %v4819, %v4820
        %v4903 = vsel %vm4861, %v4818, %v4819
        %v4904 = vsel %vm4861, %v4817, %v4818
        %v4905 = vsel %vm4861, %v4816, %v4817
        %v4906 = vsel %vm4861, %v4815, %v4816
        %v4907 = vsel %vm4861, %v4814, %v4815
        %v4908 = vsel %vm4861, %v4813, %v4814
        %v4909 = vsel %vm4861, %v4812, %v4813
        %v4910 = vsel %vm4861, %v4811, %v4812
        %v4911 = vsel %vm4861, %v4810, %v4811
        %v4912 = vsel %vm4861, %v4809, %v4810
        %v4913 = vsel %vm4861, %v4808, %v4809
        %v4914 = vsel %vm4861, %v4807, %v4808
        %v4915 = vsel %vm4861, %v4806, %v4807
        %v4916 = vsel %vm4861, %v4805, %v4806
        %v4917 = vsel %vm4861, %v4804, %v4805
        %v4918 = vsel %vm4861, %v4803, %v4804
        %v4919 = vsel %vm4861, %v4802, %v4803
        %v4920 = vsel %vm4861, %v4801, %v4802
        %v4921 = vsel %vm4861, %v4800, %v4801
        %v4922 = vsel %vm4861, %v4799, %v4800
        %v4923 = vsel %vm4861, %v4798, %v4799
        %v4924 = vsel %vm4861, %v4797, %v4798
        %v4925 = vsel %vm4861, %v4796, %v4797
        %v4926 = vsel %vm4861, %v4795, %v4796
        %v4927 = vsel %vm4861, %v4794, %v4795
        %v4928 = vsel %vm4861, %v4793, %v4794
        %v4929 = vsel %vm4861, %v4792, %v4793
        %v4930 = vsel %vm4861, %v4791, %v4792
        %v4931 = vsel %vm4861, %v4790, %v4791
        %v4932 = vsel %vm4861, %v4789, %v4790
        %v4933 = vsel %vm4861, %v4788, %v4789
        %v4934 = vsel %vm4861, %v4787, %v4788
        %v4935 = vsel %vm4861, %v4786, %v4787
        %v4936 = vsel %vm4861, %v4785, %v4786
        %v4937 = vsel %vm4861, %v4784, %v4785
        %v4938 = vsel %vm4861, %v4783, %v4784
        %v4939 = vsel %vm4861, %v4782, %v4783
        %v4940 = vsel %vm4861, %v4781, %v4782
        %v4941 = vsel %vm4861, %v4780, %v4781
        %v4942 = vsel %vm4861, %v4779, %v4780
        %v4943 = vsel %vm4861, %v4778, %v4779
        %v4944 = vsel %vm4861, %v4777, %v4778
        %v4945 = vsel %vm4861, %v4776, %v4777
        %v4946 = vsel %vm4861, %v4775, %v4776
        %v4947 = vsel %vm4861, %v4774, %v4775
        %v4948 = vsel %vm4861, %v4773, %v4774
        %v4949 = vsel %vm4861, %v4772, %v4773
        %v4950 = vsel %vm4861, %v4771, %v4772
        %v4951 = vsel %vm4861, %v4770, %v4771
        %v4952 = vsel %vm4861, %v4769, %v4770
        %v4953 = vsel %vm4861, %v4768, %v4769
        %v4954 = vsel %vm4861, %v4767, %v4768
        %v4955 = vsel %vm4861, %v4766, %v4767
        %v4956 = vsel %vm4861, %v4765, %v4766
        %v4957 = vsel %vm4861, %v4764, %v4765
        %v4958 = vsel %vm4861, %v4763, %v4764
        %v4959 = vsel %vm4861, %v4762, %v4763
        %v4960 = vsel %vm4861, %v4761, %v4762
        %v4961 = vsel %vm4861, %v4760, %v4761
        %v4962 = vsel %vm4861, %v4759, %v4760
        %v4963 = vsel %vm4861, %v4758, %v4759
        %v4964 = vsel %vm4861, %v4757, %v4758
        %v4965 = vsel %vm4861, %v4756, %v4757
        %v4966 = vsel %vm4861, %v4755, %v4756
        %v4967 = vsel %vm4861, %v4754, %v4755
        %v4968 = vsel %vm4861, %v4753, %v4754
        %v4969 = vsel %vm4861, %v4752, %v4753
        %v4970 = vsel %vm4861, %v4751, %v4752
        %v4971 = vsel %vm4861, %v4750, %v4751
        %v4972 = vsel %vm4861, %v4749, %v4750
        %v4973 = vsel %vm4861, %v4748, %v4749
        %v4974 = vsel %vm4861, %v4747, %v4748
        %v4975 = vsel %vm4861, %v4746, %v4747
        %v4976 = vsel %vm4861, %v4745, %v4746
        %v4977 = vsel %vm4861, %v4744, %v4745
        %v4978 = vsel %vm4861, %v4743, %v4744
        %v4979 = vsel %vm4861, %v4742, %v4743
        %v4980 = vsel %vm4861, %v4741, %v4742
        %v4981 = vsel %vm4861, %v4740, %v4741
        %v4982 = vsel %vm4861, %v4739, %v4740
        %v4983 = vsel %vm4861, %v4738, %v4739
        %v4984 = vsel %vm4861, %v4737, %v4738
        %v4985 = vsel %vm4861, %v4736, %v4737
        %v4986 = vsel %vm4861, %v4735, %v4736
        %v4987 = vsel %vm4861, %v4734, %v4735
        %v4988 = vsel %vm4861, %v4733, %v4734
        %v4989 = vsel %vm4861, %v4860, %v4733
        %v4990 = vadd.f32 %v4043, %v4988
        %v4991 = vadd.f32 %v4044, %v4987
        %v4992 = vadd.f32 %v4045, %v4986
        %v4993 = vadd.f32 %v4046, %v4985
        %v4994 = vadd.f32 %v4047, %v4984
        %v4995 = vadd.f32 %v4048, %v4983
        %v4996 = vadd.f32 %v4049, %v4982
        %v4997 = vadd.f32 %v4050, %v4981
        %v4998 = vadd.f32 %v4051, %v4980
        %v4999 = vadd.f32 %v4052, %v4979
        %v5000 = vadd.f32 %v4053, %v4978
        %v5001 = vadd.f32 %v4054, %v4977
        %v5002 = vadd.f32 %v4055, %v4976
        %v5003 = vadd.f32 %v4056, %v4975
        %v5004 = vadd.f32 %v4057, %v4974
        %v5005 = vadd.f32 %v4058, %v4973
        %v5006 = vadd.f32 %v4059, %v4972
        %v5007 = vadd.f32 %v4060, %v4971
        %v5008 = vadd.f32 %v4061, %v4970
        %v5009 = vadd.f32 %v4062, %v4969
        %v5010 = vadd.f32 %v4063, %v4968
        %v5011 = vadd.f32 %v4064, %v4967
        %v5012 = vadd.f32 %v4065, %v4966
        %v5013 = vadd.f32 %v4066, %v4965
        %v5014 = vadd.f32 %v4067, %v4964
        %v5015 = vadd.f32 %v4068, %v4963
        %v5016 = vadd.f32 %v4069, %v4962
        %v5017 = vadd.f32 %v4070, %v4961
        %v5018 = vadd.f32 %v4071, %v4960
        %v5019 = vadd.f32 %v4072, %v4959
        %v5020 = vadd.f32 %v4073, %v4958
        %v5021 = vadd.f32 %v4074, %v4957
        %v5022 = vadd.f32 %v4075, %v4956
        %v5023 = vadd.f32 %v4076, %v4955
        %v5024 = vadd.f32 %v4077, %v4954
        %v5025 = vadd.f32 %v4078, %v4953
        %v5026 = vadd.f32 %v4079, %v4952
        %v5027 = vadd.f32 %v4080, %v4951
        %v5028 = vadd.f32 %v4081, %v4950
        %v5029 = vadd.f32 %v4082, %v4949
        %v5030 = vadd.f32 %v4083, %v4948
        %v5031 = vadd.f32 %v4084, %v4947
        %v5032 = vadd.f32 %v4085, %v4946
        %v5033 = vadd.f32 %v4086, %v4945
        %v5034 = vadd.f32 %v4087, %v4944
        %v5035 = vadd.f32 %v4088, %v4943
        %v5036 = vadd.f32 %v4089, %v4942
        %v5037 = vadd.f32 %v4090, %v4941
        %v5038 = vadd.f32 %v4091, %v4940
        %v5039 = vadd.f32 %v4092, %v4939
        %v5040 = vadd.f32 %v4093, %v4938
        %v5041 = vadd.f32 %v4094, %v4937
        %v5042 = vadd.f32 %v4095, %v4936
        %v5043 = vadd.f32 %v4096, %v4935
        %v5044 = vadd.f32 %v4097, %v4934
        %v5045 = vadd.f32 %v4098, %v4933
        %v5046 = vadd.f32 %v4099, %v4932
        %v5047 = vadd.f32 %v4100, %v4931
        %v5048 = vadd.f32 %v4101, %v4930
        %v5049 = vadd.f32 %v4102, %v4929
        %v5050 = vadd.f32 %v4103, %v4928
        %v5051 = vadd.f32 %v4104, %v4927
        %v5052 = vadd.f32 %v4105, %v4926
        %v5053 = vadd.f32 %v4106, %v4925
        %v5054 = vadd.f32 %v4107, %v4924
        %v5055 = vadd.f32 %v4108, %v4923
        %v5056 = vadd.f32 %v4109, %v4922
        %v5057 = vadd.f32 %v4110, %v4921
        %v5058 = vadd.f32 %v4111, %v4920
        %v5059 = vadd.f32 %v4112, %v4919
        %v5060 = vadd.f32 %v4113, %v4918
        %v5061 = vadd.f32 %v4114, %v4917
        %v5062 = vadd.f32 %v4115, %v4916
        %v5063 = vadd.f32 %v4116, %v4915
        %v5064 = vadd.f32 %v4117, %v4914
        %v5065 = vadd.f32 %v4118, %v4913
        %v5066 = vadd.f32 %v4119, %v4912
        %v5067 = vadd.f32 %v4120, %v4911
        %v5068 = vadd.f32 %v4121, %v4910
        %v5069 = vadd.f32 %v4122, %v4909
        %v5070 = vadd.f32 %v4123, %v4908
        %v5071 = vadd.f32 %v4124, %v4907
        %v5072 = vadd.f32 %v4125, %v4906
        %v5073 = vadd.f32 %v4126, %v4905
        %v5074 = vadd.f32 %v4127, %v4904
        %v5075 = vadd.f32 %v4128, %v4903
        %v5076 = vadd.f32 %v4129, %v4902
        %v5077 = vadd.f32 %v4130, %v4901
        %v5078 = vadd.f32 %v4131, %v4900
        %v5079 = vadd.f32 %v4132, %v4899
        %v5080 = vadd.f32 %v4133, %v4898
        %v5081 = vadd.f32 %v4134, %v4897
        %v5082 = vadd.f32 %v4135, %v4896
        %v5083 = vadd.f32 %v4136, %v4895
        %v5084 = vadd.f32 %v4137, %v4894
        %v5085 = vadd.f32 %v4138, %v4893
        %v5086 = vadd.f32 %v4139, %v4892
        %v5087 = vadd.f32 %v4140, %v4891
        %v5088 = vadd.f32 %v4141, %v4890
        %v5089 = vadd.f32 %v4142, %v4889
        %v5090 = vadd.f32 %v4143, %v4888
        %v5091 = vadd.f32 %v4144, %v4887
        %v5092 = vadd.f32 %v4145, %v4886
        %v5093 = vadd.f32 %v4146, %v4885
        %v5094 = vadd.f32 %v4147, %v4884
        %v5095 = vadd.f32 %v4148, %v4883
        %v5096 = vadd.f32 %v4149, %v4882
        %v5097 = vadd.f32 %v4150, %v4881
        %v5098 = vadd.f32 %v4151, %v4880
        %v5099 = vadd.f32 %v4152, %v4879
        %v5100 = vadd.f32 %v4153, %v4878
        %v5101 = vadd.f32 %v4154, %v4877
        %v5102 = vadd.f32 %v4155, %v4876
        %v5103 = vadd.f32 %v4156, %v4875
        %v5104 = vadd.f32 %v4157, %v4874
        %v5105 = vadd.f32 %v4158, %v4873
        %v5106 = vadd.f32 %v4159, %v4872
        %v5107 = vadd.f32 %v4160, %v4871
        %v5108 = vadd.f32 %v4161, %v4870
        %v5109 = vadd.f32 %v4162, %v4869
        %v5110 = vadd.f32 %v4163, %v4868
        %v5111 = vadd.f32 %v4164, %v4867
        %v5112 = vadd.f32 %v4165, %v4866
        %v5113 = vadd.f32 %v4166, %v4865
        %v5114 = vadd.f32 %v4167, %v4864
        %v5115 = vadd.f32 %v4168, %v4863
        %v5116 = vadd.f32 %v4169, %v4862
        %v5117 = vadd.f32 %v4170, %v4989
        %v5118 = vld [vmem:[%s2] sm:$0x1]
        %v5120 = vlaneseq
        %v5121 = vshrl.u32 %v5120, 7
        %v5122 = vsub.s32 0, %v5121
        %v5123 = vrot.slane %v5118, %v5122
        %v5125 = vadd.f32 %v4990, %v5123
        %v5126 = vadd.f32 %v4991, %v5123
        %v5127 = vadd.f32 %v4992, %v5123
        %v5128 = vadd.f32 %v4993, %v5123
        %v5129 = vadd.f32 %v4994, %v5123
        %v5130 = vadd.f32 %v4995, %v5123
        %v5131 = vadd.f32 %v4996, %v5123
        %v5132 = vadd.f32 %v4997, %v5123
        %v5133 = vadd.f32 %v4998, %v5123
        %v5134 = vadd.f32 %v4999, %v5123
        %v5135 = vadd.f32 %v5000, %v5123
        %v5136 = vadd.f32 %v5001, %v5123
        %v5137 = vadd.f32 %v5002, %v5123
        %v5138 = vadd.f32 %v5003, %v5123
        %v5139 = vadd.f32 %v5004, %v5123
        %v5140 = vadd.f32 %v5005, %v5123
        %v5141 = vadd.f32 %v5006, %v5123
        %v5142 = vadd.f32 %v5007, %v5123
        %v5143 = vadd.f32 %v5008, %v5123
        %v5144 = vadd.f32 %v5009, %v5123
        %v5145 = vadd.f32 %v5010, %v5123
        %v5146 = vadd.f32 %v5011, %v5123
        %v5147 = vadd.f32 %v5012, %v5123
        %v5148 = vadd.f32 %v5013, %v5123
        %v5149 = vadd.f32 %v5014, %v5123
        %v5150 = vadd.f32 %v5015, %v5123
        %v5151 = vadd.f32 %v5016, %v5123
        %v5152 = vadd.f32 %v5017, %v5123
        %v5153 = vadd.f32 %v5018, %v5123
        %v5154 = vadd.f32 %v5019, %v5123
        %v5155 = vadd.f32 %v5020, %v5123
        %v5156 = vadd.f32 %v5021, %v5123
        %v5157 = vadd.f32 %v5022, %v5123
        %v5158 = vadd.f32 %v5023, %v5123
        %v5159 = vadd.f32 %v5024, %v5123
        %v5160 = vadd.f32 %v5025, %v5123
        %v5161 = vadd.f32 %v5026, %v5123
        %v5162 = vadd.f32 %v5027, %v5123
        %v5163 = vadd.f32 %v5028, %v5123
        %v5164 = vadd.f32 %v5029, %v5123
        %v5165 = vadd.f32 %v5030, %v5123
        %v5166 = vadd.f32 %v5031, %v5123
        %v5167 = vadd.f32 %v5032, %v5123
        %v5168 = vadd.f32 %v5033, %v5123
        %v5169 = vadd.f32 %v5034, %v5123
        %v5170 = vadd.f32 %v5035, %v5123
        %v5171 = vadd.f32 %v5036, %v5123
        %v5172 = vadd.f32 %v5037, %v5123
        %v5173 = vadd.f32 %v5038, %v5123
        %v5174 = vadd.f32 %v5039, %v5123
        %v5175 = vadd.f32 %v5040, %v5123
        %v5176 = vadd.f32 %v5041, %v5123
        %v5177 = vadd.f32 %v5042, %v5123
        %v5178 = vadd.f32 %v5043, %v5123
        %v5179 = vadd.f32 %v5044, %v5123
        %v5180 = vadd.f32 %v5045, %v5123
        %v5181 = vadd.f32 %v5046, %v5123
        %v5182 = vadd.f32 %v5047, %v5123
        %v5183 = vadd.f32 %v5048, %v5123
        %v5184 = vadd.f32 %v5049, %v5123
        %v5185 = vadd.f32 %v5050, %v5123
        %v5186 = vadd.f32 %v5051, %v5123
        %v5187 = vadd.f32 %v5052, %v5123
        %v5188 = vadd.f32 %v5053, %v5123
        %v5189 = vadd.f32 %v5054, %v5123
        %v5190 = vadd.f32 %v5055, %v5123
        %v5191 = vadd.f32 %v5056, %v5123
        %v5192 = vadd.f32 %v5057, %v5123
        %v5193 = vadd.f32 %v5058, %v5123
        %v5194 = vadd.f32 %v5059, %v5123
        %v5195 = vadd.f32 %v5060, %v5123
        %v5196 = vadd.f32 %v5061, %v5123
        %v5197 = vadd.f32 %v5062, %v5123
        %v5198 = vadd.f32 %v5063, %v5123
        %v5199 = vadd.f32 %v5064, %v5123
        %v5200 = vadd.f32 %v5065, %v5123
        %v5201 = vadd.f32 %v5066, %v5123
        %v5202 = vadd.f32 %v5067, %v5123
        %v5203 = vadd.f32 %v5068, %v5123
        %v5204 = vadd.f32 %v5069, %v5123
        %v5205 = vadd.f32 %v5070, %v5123
        %v5206 = vadd.f32 %v5071, %v5123
        %v5207 = vadd.f32 %v5072, %v5123
        %v5208 = vadd.f32 %v5073, %v5123
        %v5209 = vadd.f32 %v5074, %v5123
        %v5210 = vadd.f32 %v5075, %v5123
        %v5211 = vadd.f32 %v5076, %v5123
        %v5212 = vadd.f32 %v5077, %v5123
        %v5213 = vadd.f32 %v5078, %v5123
        %v5214 = vadd.f32 %v5079, %v5123
        %v5215 = vadd.f32 %v5080, %v5123
        %v5216 = vadd.f32 %v5081, %v5123
        %v5217 = vadd.f32 %v5082, %v5123
        %v5218 = vadd.f32 %v5083, %v5123
        %v5219 = vadd.f32 %v5084, %v5123
        %v5220 = vadd.f32 %v5085, %v5123
        %v5221 = vadd.f32 %v5086, %v5123
        %v5222 = vadd.f32 %v5087, %v5123
        %v5223 = vadd.f32 %v5088, %v5123
        %v5224 = vadd.f32 %v5089, %v5123
        %v5225 = vadd.f32 %v5090, %v5123
        %v5226 = vadd.f32 %v5091, %v5123
        %v5227 = vadd.f32 %v5092, %v5123
        %v5228 = vadd.f32 %v5093, %v5123
        %v5229 = vadd.f32 %v5094, %v5123
        %v5230 = vadd.f32 %v5095, %v5123
        %v5231 = vadd.f32 %v5096, %v5123
        %v5232 = vadd.f32 %v5097, %v5123
        %v5233 = vadd.f32 %v5098, %v5123
        %v5234 = vadd.f32 %v5099, %v5123
        %v5235 = vadd.f32 %v5100, %v5123
        %v5236 = vadd.f32 %v5101, %v5123
        %v5237 = vadd.f32 %v5102, %v5123
        %v5238 = vadd.f32 %v5103, %v5123
        %v5239 = vadd.f32 %v5104, %v5123
        %v5240 = vadd.f32 %v5105, %v5123
        %v5241 = vadd.f32 %v5106, %v5123
        %v5242 = vadd.f32 %v5107, %v5123
        %v5243 = vadd.f32 %v5108, %v5123
        %v5244 = vadd.f32 %v5109, %v5123
        %v5245 = vadd.f32 %v5110, %v5123
        %v5246 = vadd.f32 %v5111, %v5123
        %v5247 = vadd.f32 %v5112, %v5123
        %v5248 = vadd.f32 %v5113, %v5123
        %v5249 = vadd.f32 %v5114, %v5123
        %v5250 = vadd.f32 %v5115, %v5123
        %v5251 = vadd.f32 %v5116, %v5123
        %v5252 = vadd.f32 %v5117, %v5123
        %v5253 = vmax.f32 %v5125, 0.0
        %v5254 = vmax.f32 %v5126, 0.0
        %v5255 = vmax.f32 %v5127, 0.0
        %v5256 = vmax.f32 %v5128, 0.0
        %v5257 = vmax.f32 %v5129, 0.0
        %v5258 = vmax.f32 %v5130, 0.0
        %v5259 = vmax.f32 %v5131, 0.0
        %v5260 = vmax.f32 %v5132, 0.0
        %v5261 = vmax.f32 %v5133, 0.0
        %v5262 = vmax.f32 %v5134, 0.0
        %v5263 = vmax.f32 %v5135, 0.0
        %v5264 = vmax.f32 %v5136, 0.0
        %v5265 = vmax.f32 %v5137, 0.0
        %v5266 = vmax.f32 %v5138, 0.0
        %v5267 = vmax.f32 %v5139, 0.0
        %v5268 = vmax.f32 %v5140, 0.0
        %v5269 = vmax.f32 %v5141, 0.0
        %v5270 = vmax.f32 %v5142, 0.0
        %v5271 = vmax.f32 %v5143, 0.0
        %v5272 = vmax.f32 %v5144, 0.0
        %v5273 = vmax.f32 %v5145, 0.0
        %v5274 = vmax.f32 %v5146, 0.0
        %v5275 = vmax.f32 %v5147, 0.0
        %v5276 = vmax.f32 %v5148, 0.0
        %v5277 = vmax.f32 %v5149, 0.0
        %v5278 = vmax.f32 %v5150, 0.0
        %v5279 = vmax.f32 %v5151, 0.0
        %v5280 = vmax.f32 %v5152, 0.0
        %v5281 = vmax.f32 %v5153, 0.0
        %v5282 = vmax.f32 %v5154, 0.0
        %v5283 = vmax.f32 %v5155, 0.0
        %v5284 = vmax.f32 %v5156, 0.0
        %v5285 = vmax.f32 %v5157, 0.0
        %v5286 = vmax.f32 %v5158, 0.0
        %v5287 = vmax.f32 %v5159, 0.0
        %v5288 = vmax.f32 %v5160, 0.0
        %v5289 = vmax.f32 %v5161, 0.0
        %v5290 = vmax.f32 %v5162, 0.0
        %v5291 = vmax.f32 %v5163, 0.0
        %v5292 = vmax.f32 %v5164, 0.0
        %v5293 = vmax.f32 %v5165, 0.0
        %v5294 = vmax.f32 %v5166, 0.0
        %v5295 = vmax.f32 %v5167, 0.0
        %v5296 = vmax.f32 %v5168, 0.0
        %v5297 = vmax.f32 %v5169, 0.0
        %v5298 = vmax.f32 %v5170, 0.0
        %v5299 = vmax.f32 %v5171, 0.0
        %v5300 = vmax.f32 %v5172, 0.0
        %v5301 = vmax.f32 %v5173, 0.0
        %v5302 = vmax.f32 %v5174, 0.0
        %v5303 = vmax.f32 %v5175, 0.0
        %v5304 = vmax.f32 %v5176, 0.0
        %v5305 = vmax.f32 %v5177, 0.0
        %v5306 = vmax.f32 %v5178, 0.0
        %v5307 = vmax.f32 %v5179, 0.0
        %v5308 = vmax.f32 %v5180, 0.0
        %v5309 = vmax.f32 %v5181, 0.0
        %v5310 = vmax.f32 %v5182, 0.0
        %v5311 = vmax.f32 %v5183, 0.0
        %v5312 = vmax.f32 %v5184, 0.0
        %v5313 = vmax.f32 %v5185, 0.0
        %v5314 = vmax.f32 %v5186, 0.0
        %v5315 = vmax.f32 %v5187, 0.0
        %v5316 = vmax.f32 %v5188, 0.0
        %v5317 = vmax.f32 %v5189, 0.0
        %v5318 = vmax.f32 %v5190, 0.0
        %v5319 = vmax.f32 %v5191, 0.0
        %v5320 = vmax.f32 %v5192, 0.0
        %v5321 = vmax.f32 %v5193, 0.0
        %v5322 = vmax.f32 %v5194, 0.0
        %v5323 = vmax.f32 %v5195, 0.0
        %v5324 = vmax.f32 %v5196, 0.0
        %v5325 = vmax.f32 %v5197, 0.0
        %v5326 = vmax.f32 %v5198, 0.0
        %v5327 = vmax.f32 %v5199, 0.0
        %v5328 = vmax.f32 %v5200, 0.0
        %v5329 = vmax.f32 %v5201, 0.0
        %v5330 = vmax.f32 %v5202, 0.0
        %v5331 = vmax.f32 %v5203, 0.0
        %v5332 = vmax.f32 %v5204, 0.0
        %v5333 = vmax.f32 %v5205, 0.0
        %v5334 = vmax.f32 %v5206, 0.0
        %v5335 = vmax.f32 %v5207, 0.0
        %v5336 = vmax.f32 %v5208, 0.0
        %v5337 = vmax.f32 %v5209, 0.0
        %v5338 = vmax.f32 %v5210, 0.0
        %v5339 = vmax.f32 %v5211, 0.0
        %v5340 = vmax.f32 %v5212, 0.0
        %v5341 = vmax.f32 %v5213, 0.0
        %v5342 = vmax.f32 %v5214, 0.0
        %v5343 = vmax.f32 %v5215, 0.0
        %v5344 = vmax.f32 %v5216, 0.0
        %v5345 = vmax.f32 %v5217, 0.0
        %v5346 = vmax.f32 %v5218, 0.0
        %v5347 = vmax.f32 %v5219, 0.0
        %v5348 = vmax.f32 %v5220, 0.0
        %v5349 = vmax.f32 %v5221, 0.0
        %v5350 = vmax.f32 %v5222, 0.0
        %v5351 = vmax.f32 %v5223, 0.0
        %v5352 = vmax.f32 %v5224, 0.0
        %v5353 = vmax.f32 %v5225, 0.0
        %v5354 = vmax.f32 %v5226, 0.0
        %v5355 = vmax.f32 %v5227, 0.0
        %v5356 = vmax.f32 %v5228, 0.0
        %v5357 = vmax.f32 %v5229, 0.0
        %v5358 = vmax.f32 %v5230, 0.0
        %v5359 = vmax.f32 %v5231, 0.0
        %v5360 = vmax.f32 %v5232, 0.0
        %v5361 = vmax.f32 %v5233, 0.0
        %v5362 = vmax.f32 %v5234, 0.0
        %v5363 = vmax.f32 %v5235, 0.0
        %v5364 = vmax.f32 %v5236, 0.0
        %v5365 = vmax.f32 %v5237, 0.0
        %v5366 = vmax.f32 %v5238, 0.0
        %v5367 = vmax.f32 %v5239, 0.0
        %v5368 = vmax.f32 %v5240, 0.0
        %v5369 = vmax.f32 %v5241, 0.0
        %v5370 = vmax.f32 %v5242, 0.0
        %v5371 = vmax.f32 %v5243, 0.0
        %v5372 = vmax.f32 %v5244, 0.0
        %v5373 = vmax.f32 %v5245, 0.0
        %v5374 = vmax.f32 %v5246, 0.0
        %v5375 = vmax.f32 %v5247, 0.0
        %v5376 = vmax.f32 %v5248, 0.0
        %v5377 = vmax.f32 %v5249, 0.0
        %v5378 = vmax.f32 %v5250, 0.0
        %v5379 = vmax.f32 %v5251, 0.0
        %v5380 = vmax.f32 %v5252, 0.0
        %v5381 = vld [vmem:[%s3] sm:$0xff]
        %v5382 = vld [vmem:[%s3 + $0x8] sm:$0xff]
        %v5383 = vmul.f32 %v5253, %v5381
        %v5384 = vmul.f32 %v5254, %v5382
        %v5385 = vmul.f32 %v5255, %v5381
        %v5386 = vmul.f32 %v5256, %v5382
        %v5387 = vmul.f32 %v5257, %v5381
        %v5388 = vmul.f32 %v5258, %v5382
        %v5389 = vmul.f32 %v5259, %v5381
        %v5390 = vmul.f32 %v5260, %v5382
        %v5391 = vmul.f32 %v5261, %v5381
        %v5392 = vmul.f32 %v5262, %v5382
        %v5393 = vmul.f32 %v5263, %v5381
        %v5394 = vmul.f32 %v5264, %v5382
        %v5395 = vmul.f32 %v5265, %v5381
        %v5396 = vmul.f32 %v5266, %v5382
        %v5397 = vmul.f32 %v5267, %v5381
        %v5398 = vmul.f32 %v5268, %v5382
        %v5399 = vmul.f32 %v5269, %v5381
        %v5400 = vmul.f32 %v5270, %v5382
        %v5401 = vmul.f32 %v5271, %v5381
        %v5402 = vmul.f32 %v5272, %v5382
        %v5403 = vmul.f32 %v5273, %v5381
        %v5404 = vmul.f32 %v5274, %v5382
        %v5405 = vmul.f32 %v5275, %v5381
        %v5406 = vmul.f32 %v5276, %v5382
        %v5407 = vmul.f32 %v5277, %v5381
        %v5408 = vmul.f32 %v5278, %v5382
        %v5409 = vmul.f32 %v5279, %v5381
        %v5410 = vmul.f32 %v5280, %v5382
        %v5411 = vmul.f32 %v5281, %v5381
        %v5412 = vmul.f32 %v5282, %v5382
        %v5413 = vmul.f32 %v5283, %v5381
        %v5414 = vmul.f32 %v5284, %v5382
        %v5415 = vmul.f32 %v5285, %v5381
        %v5416 = vmul.f32 %v5286, %v5382
        %v5417 = vmul.f32 %v5287, %v5381
        %v5418 = vmul.f32 %v5288, %v5382
        %v5419 = vmul.f32 %v5289, %v5381
        %v5420 = vmul.f32 %v5290, %v5382
        %v5421 = vmul.f32 %v5291, %v5381
        %v5422 = vmul.f32 %v5292, %v5382
        %v5423 = vmul.f32 %v5293, %v5381
        %v5424 = vmul.f32 %v5294, %v5382
        %v5425 = vmul.f32 %v5295, %v5381
        %v5426 = vmul.f32 %v5296, %v5382
        %v5427 = vmul.f32 %v5297, %v5381
        %v5428 = vmul.f32 %v5298, %v5382
        %v5429 = vmul.f32 %v5299, %v5381
        %v5430 = vmul.f32 %v5300, %v5382
        %v5431 = vmul.f32 %v5301, %v5381
        %v5432 = vmul.f32 %v5302, %v5382
        %v5433 = vmul.f32 %v5303, %v5381
        %v5434 = vmul.f32 %v5304, %v5382
        %v5435 = vmul.f32 %v5305, %v5381
        %v5436 = vmul.f32 %v5306, %v5382
        %v5437 = vmul.f32 %v5307, %v5381
        %v5438 = vmul.f32 %v5308, %v5382
        %v5439 = vmul.f32 %v5309, %v5381
        %v5440 = vmul.f32 %v5310, %v5382
        %v5441 = vmul.f32 %v5311, %v5381
        %v5442 = vmul.f32 %v5312, %v5382
        %v5443 = vmul.f32 %v5313, %v5381
        %v5444 = vmul.f32 %v5314, %v5382
        %v5445 = vmul.f32 %v5315, %v5381
        %v5446 = vmul.f32 %v5316, %v5382
        %v5447 = vmul.f32 %v5317, %v5381
        %v5448 = vmul.f32 %v5318, %v5382
        %v5449 = vmul.f32 %v5319, %v5381
        %v5450 = vmul.f32 %v5320, %v5382
        %v5451 = vmul.f32 %v5321, %v5381
        %v5452 = vmul.f32 %v5322, %v5382
        %v5453 = vmul.f32 %v5323, %v5381
        %v5454 = vmul.f32 %v5324, %v5382
        %v5455 = vmul.f32 %v5325, %v5381
        %v5456 = vmul.f32 %v5326, %v5382
        %v5457 = vmul.f32 %v5327, %v5381
        %v5458 = vmul.f32 %v5328, %v5382
        %v5459 = vmul.f32 %v5329, %v5381
        %v5460 = vmul.f32 %v5330, %v5382
        %v5461 = vmul.f32 %v5331, %v5381
        %v5462 = vmul.f32 %v5332, %v5382
        %v5463 = vmul.f32 %v5333, %v5381
        %v5464 = vmul.f32 %v5334, %v5382
        %v5465 = vmul.f32 %v5335, %v5381
        %v5466 = vmul.f32 %v5336, %v5382
        %v5467 = vmul.f32 %v5337, %v5381
        %v5468 = vmul.f32 %v5338, %v5382
        %v5469 = vmul.f32 %v5339, %v5381
        %v5470 = vmul.f32 %v5340, %v5382
        %v5471 = vmul.f32 %v5341, %v5381
        %v5472 = vmul.f32 %v5342, %v5382
        %v5473 = vmul.f32 %v5343, %v5381
        %v5474 = vmul.f32 %v5344, %v5382
        %v5475 = vmul.f32 %v5345, %v5381
        %v5476 = vmul.f32 %v5346, %v5382
        %v5477 = vmul.f32 %v5347, %v5381
        %v5478 = vmul.f32 %v5348, %v5382
        %v5479 = vmul.f32 %v5349, %v5381
        %v5480 = vmul.f32 %v5350, %v5382
        %v5481 = vmul.f32 %v5351, %v5381
        %v5482 = vmul.f32 %v5352, %v5382
        %v5483 = vmul.f32 %v5353, %v5381
        %v5484 = vmul.f32 %v5354, %v5382
        %v5485 = vmul.f32 %v5355, %v5381
        %v5486 = vmul.f32 %v5356, %v5382
        %v5487 = vmul.f32 %v5357, %v5381
        %v5488 = vmul.f32 %v5358, %v5382
        %v5489 = vmul.f32 %v5359, %v5381
        %v5490 = vmul.f32 %v5360, %v5382
        %v5491 = vmul.f32 %v5361, %v5381
        %v5492 = vmul.f32 %v5362, %v5382
        %v5493 = vmul.f32 %v5363, %v5381
        %v5494 = vmul.f32 %v5364, %v5382
        %v5495 = vmul.f32 %v5365, %v5381
        %v5496 = vmul.f32 %v5366, %v5382
        %v5497 = vmul.f32 %v5367, %v5381
        %v5498 = vmul.f32 %v5368, %v5382
        %v5499 = vmul.f32 %v5369, %v5381
        %v5500 = vmul.f32 %v5370, %v5382
        %v5501 = vmul.f32 %v5371, %v5381
        %v5502 = vmul.f32 %v5372, %v5382
        %v5503 = vmul.f32 %v5373, %v5381
        %v5504 = vmul.f32 %v5374, %v5382
        %v5505 = vmul.f32 %v5375, %v5381
        %v5506 = vmul.f32 %v5376, %v5382
        %v5507 = vmul.f32 %v5377, %v5381
        %v5508 = vmul.f32 %v5378, %v5382
        %v5509 = vmul.f32 %v5379, %v5381
        %v5510 = vmul.f32 %v5380, %v5382
        %v5511 = vmax.f32 %v5383, %v5384
        %v5512 = vrot.slane %v5511, 4
        %v5513 = vmax.f32 %v5511, %v5512
        %v5514 = vrot.slane %v5513, 2
        %v5515 = vmax.f32 %v5513, %v5514
        %v5516 = vrot.slane %v5515, 1
        %v5517 = vmax.f32 %v5515, %v5516
        %v5518 = vmax.f32 %v5385, %v5386
        %v5519 = vrot.slane %v5518, 4
        %v5520 = vmax.f32 %v5518, %v5519
        %v5521 = vrot.slane %v5520, 2
        %v5522 = vmax.f32 %v5520, %v5521
        %v5523 = vrot.slane %v5522, 1
        %v5524 = vmax.f32 %v5522, %v5523
        %v5525 = vmax.f32 %v5387, %v5388
        %v5526 = vrot.slane %v5525, 4
        %v5527 = vmax.f32 %v5525, %v5526
        %v5528 = vrot.slane %v5527, 2
        %v5529 = vmax.f32 %v5527, %v5528
        %v5530 = vrot.slane %v5529, 1
        %v5531 = vmax.f32 %v5529, %v5530
        %v5532 = vmax.f32 %v5389, %v5390
        %v5533 = vrot.slane %v5532, 4
        %v5534 = vmax.f32 %v5532, %v5533
        %v5535 = vrot.slane %v5534, 2
        %v5536 = vmax.f32 %v5534, %v5535
        %v5537 = vrot.slane %v5536, 1
        %v5538 = vmax.f32 %v5536, %v5537
        %v5539 = vmax.f32 %v5391, %v5392
        %v5540 = vrot.slane %v5539, 4
        %v5541 = vmax.f32 %v5539, %v5540
        %v5542 = vrot.slane %v5541, 2
        %v5543 = vmax.f32 %v5541, %v5542
        %v5544 = vrot.slane %v5543, 1
        %v5545 = vmax.f32 %v5543, %v5544
        %v5546 = vmax.f32 %v5393, %v5394
        %v5547 = vrot.slane %v5546, 4
        %v5548 = vmax.f32 %v5546, %v5547
        %v5549 = vrot.slane %v5548, 2
        %v5550 = vmax.f32 %v5548, %v5549
        %v5551 = vrot.slane %v5550, 1
        %v5552 = vmax.f32 %v5550, %v5551
        %v5553 = vmax.f32 %v5395, %v5396
        %v5554 = vrot.slane %v5553, 4
        %v5555 = vmax.f32 %v5553, %v5554
        %v5556 = vrot.slane %v5555, 2
        %v5557 = vmax.f32 %v5555, %v5556
        %v5558 = vrot.slane %v5557, 1
        %v5559 = vmax.f32 %v5557, %v5558
        %v5560 = vmax.f32 %v5397, %v5398
        %v5561 = vrot.slane %v5560, 4
        %v5562 = vmax.f32 %v5560, %v5561
        %v5563 = vrot.slane %v5562, 2
        %v5564 = vmax.f32 %v5562, %v5563
        %v5565 = vrot.slane %v5564, 1
        %v5566 = vmax.f32 %v5564, %v5565
        %v5567 = vmax.f32 %v5399, %v5400
        %v5568 = vrot.slane %v5567, 4
        %v5569 = vmax.f32 %v5567, %v5568
        %v5570 = vrot.slane %v5569, 2
        %v5571 = vmax.f32 %v5569, %v5570
        %v5572 = vrot.slane %v5571, 1
        %v5573 = vmax.f32 %v5571, %v5572
        %v5574 = vmax.f32 %v5401, %v5402
        %v5575 = vrot.slane %v5574, 4
        %v5576 = vmax.f32 %v5574, %v5575
        %v5577 = vrot.slane %v5576, 2
        %v5578 = vmax.f32 %v5576, %v5577
        %v5579 = vrot.slane %v5578, 1
        %v5580 = vmax.f32 %v5578, %v5579
        %v5581 = vmax.f32 %v5403, %v5404
        %v5582 = vrot.slane %v5581, 4
        %v5583 = vmax.f32 %v5581, %v5582
        %v5584 = vrot.slane %v5583, 2
        %v5585 = vmax.f32 %v5583, %v5584
        %v5586 = vrot.slane %v5585, 1
        %v5587 = vmax.f32 %v5585, %v5586
        %v5588 = vmax.f32 %v5405, %v5406
        %v5589 = vrot.slane %v5588, 4
        %v5590 = vmax.f32 %v5588, %v5589
        %v5591 = vrot.slane %v5590, 2
        %v5592 = vmax.f32 %v5590, %v5591
        %v5593 = vrot.slane %v5592, 1
        %v5594 = vmax.f32 %v5592, %v5593
        %v5595 = vmax.f32 %v5407, %v5408
        %v5596 = vrot.slane %v5595, 4
        %v5597 = vmax.f32 %v5595, %v5596
        %v5598 = vrot.slane %v5597, 2
        %v5599 = vmax.f32 %v5597, %v5598
        %v5600 = vrot.slane %v5599, 1
        %v5601 = vmax.f32 %v5599, %v5600
        %v5602 = vmax.f32 %v5409, %v5410
        %v5603 = vrot.slane %v5602, 4
        %v5604 = vmax.f32 %v5602, %v5603
        %v5605 = vrot.slane %v5604, 2
        %v5606 = vmax.f32 %v5604, %v5605
        %v5607 = vrot.slane %v5606, 1
        %v5608 = vmax.f32 %v5606, %v5607
        %v5609 = vmax.f32 %v5411, %v5412
        %v5610 = vrot.slane %v5609, 4
        %v5611 = vmax.f32 %v5609, %v5610
        %v5612 = vrot.slane %v5611, 2
        %v5613 = vmax.f32 %v5611, %v5612
        %v5614 = vrot.slane %v5613, 1
        %v5615 = vmax.f32 %v5613, %v5614
        %v5616 = vmax.f32 %v5413, %v5414
        %v5617 = vrot.slane %v5616, 4
        %v5618 = vmax.f32 %v5616, %v5617
        %v5619 = vrot.slane %v5618, 2
        %v5620 = vmax.f32 %v5618, %v5619
        %v5621 = vrot.slane %v5620, 1
        %v5622 = vmax.f32 %v5620, %v5621
        %v5623 = vmax.f32 %v5415, %v5416
        %v5624 = vrot.slane %v5623, 4
        %v5625 = vmax.f32 %v5623, %v5624
        %v5626 = vrot.slane %v5625, 2
        %v5627 = vmax.f32 %v5625, %v5626
        %v5628 = vrot.slane %v5627, 1
        %v5629 = vmax.f32 %v5627, %v5628
        %v5630 = vmax.f32 %v5417, %v5418
        %v5631 = vrot.slane %v5630, 4
        %v5632 = vmax.f32 %v5630, %v5631
        %v5633 = vrot.slane %v5632, 2
        %v5634 = vmax.f32 %v5632, %v5633
        %v5635 = vrot.slane %v5634, 1
        %v5636 = vmax.f32 %v5634, %v5635
        %v5637 = vmax.f32 %v5419, %v5420
        %v5638 = vrot.slane %v5637, 4
        %v5639 = vmax.f32 %v5637, %v5638
        %v5640 = vrot.slane %v5639, 2
        %v5641 = vmax.f32 %v5639, %v5640
        %v5642 = vrot.slane %v5641, 1
        %v5643 = vmax.f32 %v5641, %v5642
        %v5644 = vmax.f32 %v5421, %v5422
        %v5645 = vrot.slane %v5644, 4
        %v5646 = vmax.f32 %v5644, %v5645
        %v5647 = vrot.slane %v5646, 2
        %v5648 = vmax.f32 %v5646, %v5647
        %v5649 = vrot.slane %v5648, 1
        %v5650 = vmax.f32 %v5648, %v5649
        %v5651 = vmax.f32 %v5423, %v5424
        %v5652 = vrot.slane %v5651, 4
        %v5653 = vmax.f32 %v5651, %v5652
        %v5654 = vrot.slane %v5653, 2
        %v5655 = vmax.f32 %v5653, %v5654
        %v5656 = vrot.slane %v5655, 1
        %v5657 = vmax.f32 %v5655, %v5656
        %v5658 = vmax.f32 %v5425, %v5426
        %v5659 = vrot.slane %v5658, 4
        %v5660 = vmax.f32 %v5658, %v5659
        %v5661 = vrot.slane %v5660, 2
        %v5662 = vmax.f32 %v5660, %v5661
        %v5663 = vrot.slane %v5662, 1
        %v5664 = vmax.f32 %v5662, %v5663
        %v5665 = vmax.f32 %v5427, %v5428
        %v5666 = vrot.slane %v5665, 4
        %v5667 = vmax.f32 %v5665, %v5666
        %v5668 = vrot.slane %v5667, 2
        %v5669 = vmax.f32 %v5667, %v5668
        %v5670 = vrot.slane %v5669, 1
        %v5671 = vmax.f32 %v5669, %v5670
        %v5672 = vmax.f32 %v5429, %v5430
        %v5673 = vrot.slane %v5672, 4
        %v5674 = vmax.f32 %v5672, %v5673
        %v5675 = vrot.slane %v5674, 2
        %v5676 = vmax.f32 %v5674, %v5675
        %v5677 = vrot.slane %v5676, 1
        %v5678 = vmax.f32 %v5676, %v5677
        %v5679 = vmax.f32 %v5431, %v5432
        %v5680 = vrot.slane %v5679, 4
        %v5681 = vmax.f32 %v5679, %v5680
        %v5682 = vrot.slane %v5681, 2
        %v5683 = vmax.f32 %v5681, %v5682
        %v5684 = vrot.slane %v5683, 1
        %v5685 = vmax.f32 %v5683, %v5684
        %v5686 = vmax.f32 %v5433, %v5434
        %v5687 = vrot.slane %v5686, 4
        %v5688 = vmax.f32 %v5686, %v5687
        %v5689 = vrot.slane %v5688, 2
        %v5690 = vmax.f32 %v5688, %v5689
        %v5691 = vrot.slane %v5690, 1
        %v5692 = vmax.f32 %v5690, %v5691
        %v5693 = vmax.f32 %v5435, %v5436
        %v5694 = vrot.slane %v5693, 4
        %v5695 = vmax.f32 %v5693, %v5694
        %v5696 = vrot.slane %v5695, 2
        %v5697 = vmax.f32 %v5695, %v5696
        %v5698 = vrot.slane %v5697, 1
        %v5699 = vmax.f32 %v5697, %v5698
        %v5700 = vmax.f32 %v5437, %v5438
        %v5701 = vrot.slane %v5700, 4
        %v5702 = vmax.f32 %v5700, %v5701
        %v5703 = vrot.slane %v5702, 2
        %v5704 = vmax.f32 %v5702, %v5703
        %v5705 = vrot.slane %v5704, 1
        %v5706 = vmax.f32 %v5704, %v5705
        %v5707 = vmax.f32 %v5439, %v5440
        %v5708 = vrot.slane %v5707, 4
        %v5709 = vmax.f32 %v5707, %v5708
        %v5710 = vrot.slane %v5709, 2
        %v5711 = vmax.f32 %v5709, %v5710
        %v5712 = vrot.slane %v5711, 1
        %v5713 = vmax.f32 %v5711, %v5712
        %v5714 = vmax.f32 %v5441, %v5442
        %v5715 = vrot.slane %v5714, 4
        %v5716 = vmax.f32 %v5714, %v5715
        %v5717 = vrot.slane %v5716, 2
        %v5718 = vmax.f32 %v5716, %v5717
        %v5719 = vrot.slane %v5718, 1
        %v5720 = vmax.f32 %v5718, %v5719
        %v5721 = vmax.f32 %v5443, %v5444
        %v5722 = vrot.slane %v5721, 4
        %v5723 = vmax.f32 %v5721, %v5722
        %v5724 = vrot.slane %v5723, 2
        %v5725 = vmax.f32 %v5723, %v5724
        %v5726 = vrot.slane %v5725, 1
        %v5727 = vmax.f32 %v5725, %v5726
        %v5728 = vmax.f32 %v5445, %v5446
        %v5729 = vrot.slane %v5728, 4
        %v5730 = vmax.f32 %v5728, %v5729
        %v5731 = vrot.slane %v5730, 2
        %v5732 = vmax.f32 %v5730, %v5731
        %v5733 = vrot.slane %v5732, 1
        %v5734 = vmax.f32 %v5732, %v5733
        %v5735 = vmax.f32 %v5447, %v5448
        %v5736 = vrot.slane %v5735, 4
        %v5737 = vmax.f32 %v5735, %v5736
        %v5738 = vrot.slane %v5737, 2
        %v5739 = vmax.f32 %v5737, %v5738
        %v5740 = vrot.slane %v5739, 1
        %v5741 = vmax.f32 %v5739, %v5740
        %v5742 = vmax.f32 %v5449, %v5450
        %v5743 = vrot.slane %v5742, 4
        %v5744 = vmax.f32 %v5742, %v5743
        %v5745 = vrot.slane %v5744, 2
        %v5746 = vmax.f32 %v5744, %v5745
        %v5747 = vrot.slane %v5746, 1
        %v5748 = vmax.f32 %v5746, %v5747
        %v5749 = vmax.f32 %v5451, %v5452
        %v5750 = vrot.slane %v5749, 4
        %v5751 = vmax.f32 %v5749, %v5750
        %v5752 = vrot.slane %v5751, 2
        %v5753 = vmax.f32 %v5751, %v5752
        %v5754 = vrot.slane %v5753, 1
        %v5755 = vmax.f32 %v5753, %v5754
        %v5756 = vmax.f32 %v5453, %v5454
        %v5757 = vrot.slane %v5756, 4
        %v5758 = vmax.f32 %v5756, %v5757
        %v5759 = vrot.slane %v5758, 2
        %v5760 = vmax.f32 %v5758, %v5759
        %v5761 = vrot.slane %v5760, 1
        %v5762 = vmax.f32 %v5760, %v5761
        %v5763 = vmax.f32 %v5455, %v5456
        %v5764 = vrot.slane %v5763, 4
        %v5765 = vmax.f32 %v5763, %v5764
        %v5766 = vrot.slane %v5765, 2
        %v5767 = vmax.f32 %v5765, %v5766
        %v5768 = vrot.slane %v5767, 1
        %v5769 = vmax.f32 %v5767, %v5768
        %v5770 = vmax.f32 %v5457, %v5458
        %v5771 = vrot.slane %v5770, 4
        %v5772 = vmax.f32 %v5770, %v5771
        %v5773 = vrot.slane %v5772, 2
        %v5774 = vmax.f32 %v5772, %v5773
        %v5775 = vrot.slane %v5774, 1
        %v5776 = vmax.f32 %v5774, %v5775
        %v5777 = vmax.f32 %v5459, %v5460
        %v5778 = vrot.slane %v5777, 4
        %v5779 = vmax.f32 %v5777, %v5778
        %v5780 = vrot.slane %v5779, 2
        %v5781 = vmax.f32 %v5779, %v5780
        %v5782 = vrot.slane %v5781, 1
        %v5783 = vmax.f32 %v5781, %v5782
        %v5784 = vmax.f32 %v5461, %v5462
        %v5785 = vrot.slane %v5784, 4
        %v5786 = vmax.f32 %v5784, %v5785
        %v5787 = vrot.slane %v5786, 2
        %v5788 = vmax.f32 %v5786, %v5787
        %v5789 = vrot.slane %v5788, 1
        %v5790 = vmax.f32 %v5788, %v5789
        %v5791 = vmax.f32 %v5463, %v5464
        %v5792 = vrot.slane %v5791, 4
        %v5793 = vmax.f32 %v5791, %v5792
        %v5794 = vrot.slane %v5793, 2
        %v5795 = vmax.f32 %v5793, %v5794
        %v5796 = vrot.slane %v5795, 1
        %v5797 = vmax.f32 %v5795, %v5796
        %v5798 = vmax.f32 %v5465, %v5466
        %v5799 = vrot.slane %v5798, 4
        %v5800 = vmax.f32 %v5798, %v5799
        %v5801 = vrot.slane %v5800, 2
        %v5802 = vmax.f32 %v5800, %v5801
        %v5803 = vrot.slane %v5802, 1
        %v5804 = vmax.f32 %v5802, %v5803
        %v5805 = vmax.f32 %v5467, %v5468
        %v5806 = vrot.slane %v5805, 4
        %v5807 = vmax.f32 %v5805, %v5806
        %v5808 = vrot.slane %v5807, 2
        %v5809 = vmax.f32 %v5807, %v5808
        %v5810 = vrot.slane %v5809, 1
        %v5811 = vmax.f32 %v5809, %v5810
        %v5812 = vmax.f32 %v5469, %v5470
        %v5813 = vrot.slane %v5812, 4
        %v5814 = vmax.f32 %v5812, %v5813
        %v5815 = vrot.slane %v5814, 2
        %v5816 = vmax.f32 %v5814, %v5815
        %v5817 = vrot.slane %v5816, 1
        %v5818 = vmax.f32 %v5816, %v5817
        %v5819 = vmax.f32 %v5471, %v5472
        %v5820 = vrot.slane %v5819, 4
        %v5821 = vmax.f32 %v5819, %v5820
        %v5822 = vrot.slane %v5821, 2
        %v5823 = vmax.f32 %v5821, %v5822
        %v5824 = vrot.slane %v5823, 1
        %v5825 = vmax.f32 %v5823, %v5824
        %v5826 = vmax.f32 %v5473, %v5474
        %v5827 = vrot.slane %v5826, 4
        %v5828 = vmax.f32 %v5826, %v5827
        %v5829 = vrot.slane %v5828, 2
        %v5830 = vmax.f32 %v5828, %v5829
        %v5831 = vrot.slane %v5830, 1
        %v5832 = vmax.f32 %v5830, %v5831
        %v5833 = vmax.f32 %v5475, %v5476
        %v5834 = vrot.slane %v5833, 4
        %v5835 = vmax.f32 %v5833, %v5834
        %v5836 = vrot.slane %v5835, 2
        %v5837 = vmax.f32 %v5835, %v5836
        %v5838 = vrot.slane %v5837, 1
        %v5839 = vmax.f32 %v5837, %v5838
        %v5840 = vmax.f32 %v5477, %v5478
        %v5841 = vrot.slane %v5840, 4
        %v5842 = vmax.f32 %v5840, %v5841
        %v5843 = vrot.slane %v5842, 2
        %v5844 = vmax.f32 %v5842, %v5843
        %v5845 = vrot.slane %v5844, 1
        %v5846 = vmax.f32 %v5844, %v5845
        %v5847 = vmax.f32 %v5479, %v5480
        %v5848 = vrot.slane %v5847, 4
        %v5849 = vmax.f32 %v5847, %v5848
        %v5850 = vrot.slane %v5849, 2
        %v5851 = vmax.f32 %v5849, %v5850
        %v5852 = vrot.slane %v5851, 1
        %v5853 = vmax.f32 %v5851, %v5852
        %v5854 = vmax.f32 %v5481, %v5482
        %v5855 = vrot.slane %v5854, 4
        %v5856 = vmax.f32 %v5854, %v5855
        %v5857 = vrot.slane %v5856, 2
        %v5858 = vmax.f32 %v5856, %v5857
        %v5859 = vrot.slane %v5858, 1
        %v5860 = vmax.f32 %v5858, %v5859
        %v5861 = vmax.f32 %v5483, %v5484
        %v5862 = vrot.slane %v5861, 4
        %v5863 = vmax.f32 %v5861, %v5862
        %v5864 = vrot.slane %v5863, 2
        %v5865 = vmax.f32 %v5863, %v5864
        %v5866 = vrot.slane %v5865, 1
        %v5867 = vmax.f32 %v5865, %v5866
        %v5868 = vmax.f32 %v5485, %v5486
        %v5869 = vrot.slane %v5868, 4
        %v5870 = vmax.f32 %v5868, %v5869
        %v5871 = vrot.slane %v5870, 2
        %v5872 = vmax.f32 %v5870, %v5871
        %v5873 = vrot.slane %v5872, 1
        %v5874 = vmax.f32 %v5872, %v5873
        %v5875 = vmax.f32 %v5487, %v5488
        %v5876 = vrot.slane %v5875, 4
        %v5877 = vmax.f32 %v5875, %v5876
        %v5878 = vrot.slane %v5877, 2
        %v5879 = vmax.f32 %v5877, %v5878
        %v5880 = vrot.slane %v5879, 1
        %v5881 = vmax.f32 %v5879, %v5880
        %v5882 = vmax.f32 %v5489, %v5490
        %v5883 = vrot.slane %v5882, 4
        %v5884 = vmax.f32 %v5882, %v5883
        %v5885 = vrot.slane %v5884, 2
        %v5886 = vmax.f32 %v5884, %v5885
        %v5887 = vrot.slane %v5886, 1
        %v5888 = vmax.f32 %v5886, %v5887
        %v5889 = vmax.f32 %v5491, %v5492
        %v5890 = vrot.slane %v5889, 4
        %v5891 = vmax.f32 %v5889, %v5890
        %v5892 = vrot.slane %v5891, 2
        %v5893 = vmax.f32 %v5891, %v5892
        %v5894 = vrot.slane %v5893, 1
        %v5895 = vmax.f32 %v5893, %v5894
        %v5896 = vmax.f32 %v5493, %v5494
        %v5897 = vrot.slane %v5896, 4
        %v5898 = vmax.f32 %v5896, %v5897
        %v5899 = vrot.slane %v5898, 2
        %v5900 = vmax.f32 %v5898, %v5899
        %v5901 = vrot.slane %v5900, 1
        %v5902 = vmax.f32 %v5900, %v5901
        %v5903 = vmax.f32 %v5495, %v5496
        %v5904 = vrot.slane %v5903, 4
        %v5905 = vmax.f32 %v5903, %v5904
        %v5906 = vrot.slane %v5905, 2
        %v5907 = vmax.f32 %v5905, %v5906
        %v5908 = vrot.slane %v5907, 1
        %v5909 = vmax.f32 %v5907, %v5908
        %v5910 = vmax.f32 %v5497, %v5498
        %v5911 = vrot.slane %v5910, 4
        %v5912 = vmax.f32 %v5910, %v5911
        %v5913 = vrot.slane %v5912, 2
        %v5914 = vmax.f32 %v5912, %v5913
        %v5915 = vrot.slane %v5914, 1
        %v5916 = vmax.f32 %v5914, %v5915
        %v5917 = vmax.f32 %v5499, %v5500
        %v5918 = vrot.slane %v5917, 4
        %v5919 = vmax.f32 %v5917, %v5918
        %v5920 = vrot.slane %v5919, 2
        %v5921 = vmax.f32 %v5919, %v5920
        %v5922 = vrot.slane %v5921, 1
        %v5923 = vmax.f32 %v5921, %v5922
        %v5924 = vmax.f32 %v5501, %v5502
        %v5925 = vrot.slane %v5924, 4
        %v5926 = vmax.f32 %v5924, %v5925
        %v5927 = vrot.slane %v5926, 2
        %v5928 = vmax.f32 %v5926, %v5927
        %v5929 = vrot.slane %v5928, 1
        %v5930 = vmax.f32 %v5928, %v5929
        %v5931 = vmax.f32 %v5503, %v5504
        %v5932 = vrot.slane %v5931, 4
        %v5933 = vmax.f32 %v5931, %v5932
        %v5934 = vrot.slane %v5933, 2
        %v5935 = vmax.f32 %v5933, %v5934
        %v5936 = vrot.slane %v5935, 1
        %v5937 = vmax.f32 %v5935, %v5936
        %v5938 = vmax.f32 %v5505, %v5506
        %v5939 = vrot.slane %v5938, 4
        %v5940 = vmax.f32 %v5938, %v5939
        %v5941 = vrot.slane %v5940, 2
        %v5942 = vmax.f32 %v5940, %v5941
        %v5943 = vrot.slane %v5942, 1
        %v5944 = vmax.f32 %v5942, %v5943
        %v5945 = vmax.f32 %v5507, %v5508
        %v5946 = vrot.slane %v5945, 4
        %v5947 = vmax.f32 %v5945, %v5946
        %v5948 = vrot.slane %v5947, 2
        %v5949 = vmax.f32 %v5947, %v5948
        %v5950 = vrot.slane %v5949, 1
        %v5951 = vmax.f32 %v5949, %v5950
        %v5952 = vmax.f32 %v5509, %v5510
        %v5953 = vrot.slane %v5952, 4
        %v5954 = vmax.f32 %v5952, %v5953
        %v5955 = vrot.slane %v5954, 2
        %v5956 = vmax.f32 %v5954, %v5955
        %v5957 = vrot.slane %v5956, 1
        %v5958 = vmax.f32 %v5956, %v5957
        %v5959 = vpack.c.bf16 %v5517, %v5517
        %v5960 = vpack.c.bf16 %v5524, %v5524
        %v5961 = vpack.c.bf16 %v5531, %v5531
        %v5962 = vpack.c.bf16 %v5538, %v5538
        %v5963 = vpack.c.bf16 %v5545, %v5545
        %v5964 = vpack.c.bf16 %v5552, %v5552
        %v5965 = vpack.c.bf16 %v5559, %v5559
        %v5966 = vpack.c.bf16 %v5566, %v5566
        %v5967 = vpack.c.bf16 %v5573, %v5573
        %v5968 = vpack.c.bf16 %v5580, %v5580
        %v5969 = vpack.c.bf16 %v5587, %v5587
        %v5970 = vpack.c.bf16 %v5594, %v5594
        %v5971 = vpack.c.bf16 %v5601, %v5601
        %v5972 = vpack.c.bf16 %v5608, %v5608
        %v5973 = vpack.c.bf16 %v5615, %v5615
        %v5974 = vpack.c.bf16 %v5622, %v5622
        %v5975 = vpack.c.bf16 %v5629, %v5629
        %v5976 = vpack.c.bf16 %v5636, %v5636
        %v5977 = vpack.c.bf16 %v5643, %v5643
        %v5978 = vpack.c.bf16 %v5650, %v5650
        %v5979 = vpack.c.bf16 %v5657, %v5657
        %v5980 = vpack.c.bf16 %v5664, %v5664
        %v5981 = vpack.c.bf16 %v5671, %v5671
        %v5982 = vpack.c.bf16 %v5678, %v5678
        %v5983 = vpack.c.bf16 %v5685, %v5685
        %v5984 = vpack.c.bf16 %v5692, %v5692
        %v5985 = vpack.c.bf16 %v5699, %v5699
        %v5986 = vpack.c.bf16 %v5706, %v5706
        %v5987 = vpack.c.bf16 %v5713, %v5713
        %v5988 = vpack.c.bf16 %v5720, %v5720
        %v5989 = vpack.c.bf16 %v5727, %v5727
        %v5990 = vpack.c.bf16 %v5734, %v5734
        %v5991 = vpack.c.bf16 %v5741, %v5741
        %v5992 = vpack.c.bf16 %v5748, %v5748
        %v5993 = vpack.c.bf16 %v5755, %v5755
        %v5994 = vpack.c.bf16 %v5762, %v5762
        %v5995 = vpack.c.bf16 %v5769, %v5769
        %v5996 = vpack.c.bf16 %v5776, %v5776
        %v5997 = vpack.c.bf16 %v5783, %v5783
        %v5998 = vpack.c.bf16 %v5790, %v5790
        %v5999 = vpack.c.bf16 %v5797, %v5797
        %v6000 = vpack.c.bf16 %v5804, %v5804
        %v6001 = vpack.c.bf16 %v5811, %v5811
        %v6002 = vpack.c.bf16 %v5818, %v5818
        %v6003 = vpack.c.bf16 %v5825, %v5825
        %v6004 = vpack.c.bf16 %v5832, %v5832
        %v6005 = vpack.c.bf16 %v5839, %v5839
        %v6006 = vpack.c.bf16 %v5846, %v5846
        %v6007 = vpack.c.bf16 %v5853, %v5853
        %v6008 = vpack.c.bf16 %v5860, %v5860
        %v6009 = vpack.c.bf16 %v5867, %v5867
        %v6010 = vpack.c.bf16 %v5874, %v5874
        %v6011 = vpack.c.bf16 %v5881, %v5881
        %v6012 = vpack.c.bf16 %v5888, %v5888
        %v6013 = vpack.c.bf16 %v5895, %v5895
        %v6014 = vpack.c.bf16 %v5902, %v5902
        %v6015 = vpack.c.bf16 %v5909, %v5909
        %v6016 = vpack.c.bf16 %v5916, %v5916
        %v6017 = vpack.c.bf16 %v5923, %v5923
        %v6018 = vpack.c.bf16 %v5930, %v5930
        %v6019 = vpack.c.bf16 %v5937, %v5937
        %v6020 = vpack.c.bf16 %v5944, %v5944
        %v6021 = vpack.c.bf16 %v5951, %v5951
        %v6022 = vpack.c.bf16 %v5958, %v5958
        %v6023 = vld [vmem:[%s4] sm:$0xf]
        %v6024 = vld [vmem:[%s4 + $0x4] sm:$0xf]
        %v6025 = vld [vmem:[%s4 + $0x8] sm:$0xf]
        %v6026 = vld [vmem:[%s4 + $0xc] sm:$0xf]
        %v6027 = vld [vmem:[%s4 + $0x10] sm:$0xf]
        %v6028 = vld [vmem:[%s4 + $0x14] sm:$0xf]
        %v6029 = vld [vmem:[%s4 + $0x18] sm:$0xf]
        %v6030 = vld [vmem:[%s4 + $0x1c] sm:$0xf]
        %v6031 = vld [vmem:[%s4 + $0x20] sm:$0xf]
        %v6032 = vld [vmem:[%s4 + $0x24] sm:$0xf]
        %v6033 = vld [vmem:[%s4 + $0x28] sm:$0xf]
        %v6034 = vld [vmem:[%s4 + $0x2c] sm:$0xf]
        %v6035 = vld [vmem:[%s4 + $0x30] sm:$0xf]
        %v6036 = vld [vmem:[%s4 + $0x34] sm:$0xf]
        %v6037 = vld [vmem:[%s4 + $0x38] sm:$0xf]
        %v6038 = vld [vmem:[%s4 + $0x3c] sm:$0xf]
        %v6039 = vld [vmem:[%s5] sm:$0x1]
        %v6041 = vlaneseq
        %v6042 = vshrl.u32 %v6041, 7
        %v6043 = vsub.s32 0, %v6042
        %v6044 = vrot.slane %v6039, %v6043
        %v6110 = vunpack.c.l.b16 %v5959
        %v6111 = vunpack.c.l.b16 %v5960
        %v6112 = vunpack.c.l.b16 %v5961
        %v6113 = vunpack.c.l.b16 %v5962
        %v6114 = vunpack.c.l.b16 %v5963
        %v6115 = vunpack.c.l.b16 %v5964
        %v6116 = vunpack.c.l.b16 %v5965
        %v6117 = vunpack.c.l.b16 %v5966
        %v6118 = vunpack.c.l.b16 %v5967
        %v6119 = vunpack.c.l.b16 %v5968
        %v6120 = vunpack.c.l.b16 %v5969
        %v6121 = vunpack.c.l.b16 %v5970
        %v6122 = vunpack.c.l.b16 %v5971
        %v6123 = vunpack.c.l.b16 %v5972
        %v6124 = vunpack.c.l.b16 %v5973
        %v6125 = vunpack.c.l.b16 %v5974
        %v6126 = vunpack.c.l.b16 %v5975
        %v6127 = vunpack.c.l.b16 %v5976
        %v6128 = vunpack.c.l.b16 %v5977
        %v6129 = vunpack.c.l.b16 %v5978
        %v6130 = vunpack.c.l.b16 %v5979
        %v6131 = vunpack.c.l.b16 %v5980
        %v6132 = vunpack.c.l.b16 %v5981
        %v6133 = vunpack.c.l.b16 %v5982
        %v6134 = vunpack.c.l.b16 %v5983
        %v6135 = vunpack.c.l.b16 %v5984
        %v6136 = vunpack.c.l.b16 %v5985
        %v6137 = vunpack.c.l.b16 %v5986
        %v6138 = vunpack.c.l.b16 %v5987
        %v6139 = vunpack.c.l.b16 %v5988
        %v6140 = vunpack.c.l.b16 %v5989
        %v6141 = vunpack.c.l.b16 %v5990
        %v6142 = vunpack.c.l.b16 %v5991
        %v6143 = vunpack.c.l.b16 %v5992
        %v6144 = vunpack.c.l.b16 %v5993
        %v6145 = vunpack.c.l.b16 %v5994
        %v6146 = vunpack.c.l.b16 %v5995
        %v6147 = vunpack.c.l.b16 %v5996
        %v6148 = vunpack.c.l.b16 %v5997
        %v6149 = vunpack.c.l.b16 %v5998
        %v6150 = vunpack.c.l.b16 %v5999
        %v6151 = vunpack.c.l.b16 %v6000
        %v6152 = vunpack.c.l.b16 %v6001
        %v6153 = vunpack.c.l.b16 %v6002
        %v6154 = vunpack.c.l.b16 %v6003
        %v6155 = vunpack.c.l.b16 %v6004
        %v6156 = vunpack.c.l.b16 %v6005
        %v6157 = vunpack.c.l.b16 %v6006
        %v6158 = vunpack.c.l.b16 %v6007
        %v6159 = vunpack.c.l.b16 %v6008
        %v6160 = vunpack.c.l.b16 %v6009
        %v6161 = vunpack.c.l.b16 %v6010
        %v6162 = vunpack.c.l.b16 %v6011
        %v6163 = vunpack.c.l.b16 %v6012
        %v6164 = vunpack.c.l.b16 %v6013
        %v6165 = vunpack.c.l.b16 %v6014
        %v6166 = vunpack.c.l.b16 %v6015
        %v6167 = vunpack.c.l.b16 %v6016
        %v6168 = vunpack.c.l.b16 %v6017
        %v6169 = vunpack.c.l.b16 %v6018
        %v6170 = vunpack.c.l.b16 %v6019
        %v6171 = vunpack.c.l.b16 %v6020
        %v6172 = vunpack.c.l.b16 %v6021
        %v6173 = vunpack.c.l.b16 %v6022
        %vm6174 = vcmask 1041409
        %v6175 = vsel %vm6174, %v6111, %v6110
        %vm6176 = vcmask 1042434
        %v6177 = vsel %vm6176, %v6112, %v6175
        %vm6178 = vcmask 1043459
        %v6179 = vsel %vm6178, %v6113, %v6177
        %vm6180 = vcmask 1044484
        %v6181 = vsel %vm6180, %v6114, %v6179
        %vm6182 = vcmask 1045509
        %v6183 = vsel %vm6182, %v6115, %v6181
        %vm6184 = vcmask 1046534
        %v6185 = vsel %vm6184, %v6116, %v6183
        %vm6186 = vcmask 1047559
        %v6187 = vsel %vm6186, %v6117, %v6185
        %v6188 = vsel %vm6174, %v6119, %v6118
        %v6189 = vsel %vm6176, %v6120, %v6188
        %v6190 = vsel %vm6178, %v6121, %v6189
        %v6191 = vsel %vm6180, %v6122, %v6190
        %v6192 = vsel %vm6182, %v6123, %v6191
        %v6193 = vsel %vm6184, %v6124, %v6192
        %v6194 = vsel %vm6186, %v6125, %v6193
        %v6195 = vsel %vm6174, %v6127, %v6126
        %v6196 = vsel %vm6176, %v6128, %v6195
        %v6197 = vsel %vm6178, %v6129, %v6196
        %v6198 = vsel %vm6180, %v6130, %v6197
        %v6199 = vsel %vm6182, %v6131, %v6198
        %v6200 = vsel %vm6184, %v6132, %v6199
        %v6201 = vsel %vm6186, %v6133, %v6200
        %v6202 = vsel %vm6174, %v6135, %v6134
        %v6203 = vsel %vm6176, %v6136, %v6202
        %v6204 = vsel %vm6178, %v6137, %v6203
        %v6205 = vsel %vm6180, %v6138, %v6204
        %v6206 = vsel %vm6182, %v6139, %v6205
        %v6207 = vsel %vm6184, %v6140, %v6206
        %v6208 = vsel %vm6186, %v6141, %v6207
        %v6209 = vsel %vm6174, %v6143, %v6142
        %v6210 = vsel %vm6176, %v6144, %v6209
        %v6211 = vsel %vm6178, %v6145, %v6210
        %v6212 = vsel %vm6180, %v6146, %v6211
        %v6213 = vsel %vm6182, %v6147, %v6212
        %v6214 = vsel %vm6184, %v6148, %v6213
        %v6215 = vsel %vm6186, %v6149, %v6214
        %v6216 = vsel %vm6174, %v6151, %v6150
        %v6217 = vsel %vm6176, %v6152, %v6216
        %v6218 = vsel %vm6178, %v6153, %v6217
        %v6219 = vsel %vm6180, %v6154, %v6218
        %v6220 = vsel %vm6182, %v6155, %v6219
        %v6221 = vsel %vm6184, %v6156, %v6220
        %v6222 = vsel %vm6186, %v6157, %v6221
        %v6223 = vsel %vm6174, %v6159, %v6158
        %v6224 = vsel %vm6176, %v6160, %v6223
        %v6225 = vsel %vm6178, %v6161, %v6224
        %v6226 = vsel %vm6180, %v6162, %v6225
        %v6227 = vsel %vm6182, %v6163, %v6226
        %v6228 = vsel %vm6184, %v6164, %v6227
        %v6229 = vsel %vm6186, %v6165, %v6228
        %v6230 = vsel %vm6174, %v6167, %v6166
        %v6231 = vsel %vm6176, %v6168, %v6230
        %v6232 = vsel %vm6178, %v6169, %v6231
        %v6233 = vsel %vm6180, %v6170, %v6232
        %v6234 = vsel %vm6182, %v6171, %v6233
        %v6235 = vsel %vm6184, %v6172, %v6234
        %v6236 = vsel %vm6186, %v6173, %v6235
        %v6237 = vpack.c.b16 %v6194, %v6187
        %v6238 = vpack.c.b16 %v6208, %v6201
        %v6239 = vpack.c.b16 %v6222, %v6215
        %v6240 = vpack.c.b16 %v6236, %v6229
        %v6261 = vunpack.c.l.b16 %v6023
        %v6262 = vunpack.c.l.b16 %v6024
        %v6263 = vunpack.c.l.b16 %v6025
        %v6264 = vunpack.c.l.b16 %v6026
        %v6265 = vunpack.c.l.b16 %v6027
        %v6266 = vunpack.c.l.b16 %v6028
        %v6267 = vunpack.c.l.b16 %v6029
        %v6268 = vunpack.c.l.b16 %v6030
        %v6269 = vunpack.c.l.b16 %v6031
        %v6270 = vunpack.c.l.b16 %v6032
        %v6271 = vunpack.c.l.b16 %v6033
        %v6272 = vunpack.c.l.b16 %v6034
        %v6273 = vunpack.c.l.b16 %v6035
        %v6274 = vunpack.c.l.b16 %v6036
        %v6275 = vunpack.c.l.b16 %v6037
        %v6276 = vunpack.c.l.b16 %v6038
        %v6277 = vpack.c.b16 %v6262, %v6261
        %v6278 = vpack.c.b16 %v6264, %v6263
        %v6279 = vpack.c.b16 %v6266, %v6265
        %v6280 = vpack.c.b16 %v6268, %v6267
        %v6281 = vpack.c.b16 %v6270, %v6269
        %v6282 = vpack.c.b16 %v6272, %v6271
        %v6283 = vpack.c.b16 %v6274, %v6273
        %v6284 = vpack.c.b16 %v6276, %v6275
        %6293 = vmatprep.subr.bf16.mxu0 0
        %6294 = vmatpush1.bf16.msra.mxu0 %v6284
        %6295 = vmatprep.subr.bf16.mxu0 0
        %6296 = vmatpush1.bf16.msra.mxu0 %v6283
        %6297 = vmatprep.subr.bf16.mxu0 0
        %6298 = vmatpush1.bf16.msra.mxu0 %v6282
        %6299 = vmatprep.subr.bf16.mxu0 0
        %6300 = vmatpush1.bf16.msra.mxu0 %v6281
        %6301 = vmatprep.subr.bf16.mxu0 0
        %6302 = vmatpush1.bf16.msra.mxu0 %v6280
        %6303 = vmatprep.subr.bf16.mxu0 0
        %6304 = vmatpush1.bf16.msra.mxu0 %v6279
        %6305 = vmatprep.subr.bf16.mxu0 0
        %6306 = vmatpush1.bf16.msra.mxu0 %v6278
        %6307 = vmatprep.subr.bf16.mxu0 0
        %6308 = vmatpush1.bf16.msra.mxu0 %v6277
        %6309 = vmatprep.subr.bf16.mxu0 0
        %6310 = vmatpush2.bf16.msra.mxu0 0
        %6311 = vmatprep.subr.bf16.mxu0 0
        %6312 = vmatpush2.bf16.msra.mxu0 0
        %6313 = vmatprep.subr.bf16.mxu0 0
        %6314 = vmatpush2.bf16.msra.mxu0 0
        %6315 = vmatprep.subr.bf16.mxu0 0
        %6316 = vmatpush2.bf16.msra.mxu0 0
        %6317 = vmatprep.subr.bf16.mxu0 0
        %6318 = vmatpush2.bf16.msra.mxu0 0
        %6319 = vmatprep.subr.bf16.mxu0 0
        %6320 = vmatpush2.bf16.msra.mxu0 0
        %6321 = vmatprep.subr.bf16.mxu0 0
        %6322 = vmatpush2.bf16.msra.mxu0 0
        %6323 = vmatprep.subr.bf16.mxu0 0
        %6324 = vmatpush2.bf16.msra.mxu0 0
        %6325 = vmatprep.mubr.bf16.mxu0 0
        %6326 = vmatmul.mubr.bf16.gmra.mxu0 %v6237
        %v6327 = vpop.f32.mrf.mxu0
        %v6328 = vadd.f32 %v6044, %v6327
        %v6329 = vpop.f32.mrf.mxu0
        %v6330 = vpop.f32.mrf.mxu0
        %v6331 = vadd.f32 %v6044, %v6330
        %v6332 = vpop.f32.mrf.mxu0
        %6333 = vmatprep.mubr.bf16.mxu0 0
        %6334 = vmatmul.mubr.bf16.gmra.mxu0 %v6238
        %v6335 = vpop.f32.mrf.mxu0
        %v6336 = vadd.f32 %v6044, %v6335
        %v6337 = vpop.f32.mrf.mxu0
        %v6338 = vpop.f32.mrf.mxu0
        %v6339 = vadd.f32 %v6044, %v6338
        %v6340 = vpop.f32.mrf.mxu0
        %6341 = vmatprep.mubr.bf16.mxu0 0
        %6342 = vmatmul.mubr.bf16.gmra.mxu0 %v6239
        %v6343 = vpop.f32.mrf.mxu0
        %v6344 = vadd.f32 %v6044, %v6343
        %v6345 = vpop.f32.mrf.mxu0
        %v6346 = vpop.f32.mrf.mxu0
        %v6347 = vadd.f32 %v6044, %v6346
        %v6348 = vpop.f32.mrf.mxu0
        %6349 = vmatprep.mubr.bf16.mxu0 0
        %6350 = vmatmul.mubr.bf16.gmra.mxu0 %v6240
        %v6351 = vpop.f32.mrf.mxu0
        %v6352 = vadd.f32 %v6044, %v6351
        %v6353 = vpop.f32.mrf.mxu0
        %v6354 = vpop.f32.mrf.mxu0
        %v6355 = vadd.f32 %v6044, %v6354
        %v6356 = vpop.f32.mrf.mxu0
        %6357 = vdwg.mxu0
        %6358 = vst [vmem:[%s245] sm:$0xff] %v6328
        %6359 = vst [vmem:[%s245 + $0x8] sm:$0xff] %v6331
        %6360 = vst [vmem:[%s245 + $0x10] sm:$0xff] %v6336
        %6361 = vst [vmem:[%s245 + $0x18] sm:$0xff] %v6339
        %6362 = vst [vmem:[%s245 + $0x20] sm:$0xff] %v6344
        %6363 = vst [vmem:[%s245 + $0x28] sm:$0xff] %v6347
        %6364 = vst [vmem:[%s245 + $0x30] sm:$0xff] %v6352
        %6365 = vst [vmem:[%s245 + $0x38] sm:$0xff] %v6355
        %s6366 = sand.u32 %s159, 1
        %s6367 = scalar_lea.sflag [#allocation3], %s6366
        %s6368 = sand.u32 %s159, 1
        %s6369 = smul.addr %s6368, 64
        %s6370 = scalar_lea.vmem [#allocation2], %s6369
        // Predicated region
        $region45: #{tpu_custom_call.1} parent=43 // pred_check
          %p6371 = pneg %p169
        $region46: #{tpu_custom_call.1} parent=43 // pred_check_branch
          %6373 = sbr.rel (%p6371) target = $region48
        $region47: #{tpu_custom_call.1} parent=43 // pred_region
          %s6374 = smul.u32 8, %s20
          %s6376 = ssub.s32 1024, 1024
          %6377 = vsyncadd %s6367, %s6376
          %s6378 = smul.addr %s6374, 128
          %s6379 = scalar_lea.hbm %s6, %s6378
          %s6380 = sshll.u32 %s6370, 4
          %s6381 = int_to_ptr.vmem [resolvable:$true] %s6380
          %6386 = dma.vmem_to_hbm [thread:$0]  %s6381, 1024, %s6379, %s6367, 128, 128, 8
        $region48: #{tpu_custom_call.1} parent=43 // pred_fallthru
          _
      $region44: #{tpu_custom_call.1} parent=5 // pred_fallthru
        _
      %p6387 = scmp.le.s32.totalorder 2, %s15
      // Predicated region
      $region49: #{tpu_custom_call.1} parent=5 // pred_check
        %p6388 = pneg %p6387
      $region50: #{tpu_custom_call.1} parent=5 // pred_check_branch
        %6390 = sbr.rel (%p6388) target = $region52
      $region51: #{tpu_custom_call.1} parent=5 // pred_region
        %s6391 = ssub.s32 %s15, 2
        // Predicated region
        $region53: #{tpu_custom_call.1} parent=51 // pred_check
          %p6392 = pneg %p175
        $region54: #{tpu_custom_call.1} parent=51 // pred_check_branch
          %6394 = sbr.rel (%p6392) target = $region56
        $region55: #{tpu_custom_call.1} parent=51 // pred_region
          %s6395 = sand.u32 %s160, 1
          %s6396 = scalar_lea.sflag [#allocation3], %s6395
          %s6397 = sand.u32 %s160, 1
          %s6398 = smul.addr %s6397, 64
          %s6399 = scalar_lea.vmem [#allocation2], %s6398
          %6400 = dma.done %s6396, 1024
        $region56: #{tpu_custom_call.1} parent=51 // pred_fallthru
          _
      $region52: #{tpu_custom_call.1} parent=5 // pred_fallthru
        _
    $region6: #{tpu_custom_call.1} parent=1 // loop_footer
      %s19 = sadd.s32 1, %s15
    $region7: #{tpu_custom_call.1} parent=1 // loop_footer_branch
      %14 = sbr.rel target = $region3
    $region8: #{tpu_custom_call.1} parent=1 // loop_exit
      _
    %6401 = vsyncpa [#allocation3], 1
    %s6402 = scalar_lea.sflag [#allocation3], 1
    %6403 = vsyncpa %s6402, 1

</llo_original>
